<compile_context>
chip_gen: v5e
topology: v5e:2x2
jax: 0.10.0
libtpu: 0.0.40
codegen_flags: <defaults>
</compile_context>

<pallas_src>
import jax
import jax.numpy as jnp
from jax.experimental import pallas as pl
from jax.experimental.pallas import tpu as pltpu

NEG_SLOPE = 0.01
BN_EPS = 1e-5
NEG_INF = -1e30

LAYER_DIMS = [1000, 600, 250, 50, 10]            # logical (PyTorch) widths


def _round_up(n, m=128):
    return ((n + m - 1) // m) * m


PADDED_DIMS = [_round_up(d) for d in LAYER_DIMS]  # [1024, 640, 256, 128, 128]


def _leaky_relu(x):
    return jnp.where(x >= 0, x, NEG_SLOPE * x)


def _batchnorm_train(x):
    # One-pass batch statistics (biased variance), gamma=1, beta=0,
    # folded into a single scale/shift multiply-add.
    mean = jnp.mean(x, axis=0, keepdims=True)
    mean_sq = jnp.mean(x * x, axis=0, keepdims=True)
    var = jnp.maximum(mean_sq - mean * mean, 0.0)
    scale = jax.lax.rsqrt(var + BN_EPS)           # [1, N]
    shift = mean * scale                          # [1, N]
    return x * scale - shift
    # Note: zero-padded lanes stay exactly 0 (mean=var=0 -> 0*scale-0 = 0).


def firstnet_kernel(x_ref,
                    w0_ref, w1_ref, w2_ref, w3_ref, w4_ref,
                    b4_ref,
                    out_ref):
    def matmul(h, w_ref):
        # bf16 MXU inputs, f32 accumulation; elementwise work stays f32
        # (v5e VPU has no bf16 ALUs).
        return jnp.dot(h.astype(w_ref.dtype), w_ref[...],
                       preferred_element_type=jnp.float32)

    h = x_ref[...].astype(jnp.float32)

    # fc0..fc3: Linear (bias cancels under BatchNorm) -> BN -> leaky_relu
    h = _leaky_relu(_batchnorm_train(matmul(h, w0_ref)))
    h = _leaky_relu(_batchnorm_train(matmul(h, w1_ref)))
    h = _leaky_relu(_batchnorm_train(matmul(h, w2_ref)))
    h = _leaky_relu(_batchnorm_train(matmul(h, w3_ref)))

    # fc4: Linear + bias -> leaky_relu. Padded b4 lanes are -1e30, so the
    # padded logits stay hugely negative after leaky_relu.
    h = _leaky_relu(matmul(h, w4_ref) + b4_ref[...])

    # log_softmax over dim=1; padded lanes vanish under exp().
    m = jnp.max(h, axis=1, keepdims=True)
    s = h - m
    lse = jnp.log(jnp.sum(jnp.exp(s), axis=1, keepdims=True))
    out_ref[...] = (s - lse).astype(out_ref.dtype)


def init_params(key, image_size):
    """nn.Linear-style init (uniform(-1/sqrt(in), 1/sqrt(in))) on the *logical*
    shapes, zero-padded to lane multiples, weights stored pre-transposed
    [in_pad, out_pad] in bf16. Only the final bias is materialized (others
    cancel under BatchNorm)."""
    weights = []
    b4 = None
    in_true = image_size
    in_pad = _round_up(image_size)
    for li, (out_true, out_pad) in enumerate(zip(LAYER_DIMS, PADDED_DIMS)):
        key, kw, kb = jax.random.split(key, 3)
        bound = 1.0 / jnp.sqrt(jnp.float32(in_true))
        wt = jax.random.uniform(kw, (in_true, out_true), jnp.float32,
                                minval=-bound, maxval=bound)
        wt_pad = jnp.zeros((in_pad, out_pad), jnp.float32)
        wt_pad = wt_pad.at[:in_true, :out_true].set(wt)
        weights.append(wt_pad.astype(jnp.bfloat16))
        if li == len(LAYER_DIMS) - 1:
            b = jax.random.uniform(kb, (out_true,), jnp.float32,
                                   minval=-bound, maxval=bound)
            b4 = jnp.full((1, out_pad), NEG_INF, jnp.float32)
            b4 = b4.at[0, :out_true].set(b)
        in_true, in_pad = out_true, out_pad
    return weights, b4


def firstnet_forward(x, weights, b4, image_size):
    # x.view(-1, image_size), lane-pad the feature dim with zeros if needed.
    x2 = x.reshape(-1, image_size).astype(jnp.float32)
    B = x2.shape[0]
    in_pad = _round_up(image_size)
    if in_pad != image_size:
        x2 = jnp.pad(x2, ((0, 0), (0, in_pad - image_size)))

    flat_args = [x2] + list(weights) + [b4]

    vmem_spec = pl.BlockSpec(memory_space=pltpu.MemorySpace.VMEM)

    out_pad = pl.pallas_call(
        firstnet_kernel,
        out_shape=jax.ShapeDtypeStruct((B, PADDED_DIMS[-1]), jnp.float32),
        in_specs=[vmem_spec] * len(flat_args),
        out_specs=vmem_spec,
        compiler_params=pltpu.CompilerParams(vmem_limit_bytes=16 << 20),
    )(*flat_args)

    # Slice the lane-padded output back to the logical 10 classes.
    return out_pad[:, :LAYER_DIMS[-1]]


if __name__ == "__main__":
    key = jax.random.PRNGKey(0)
    k_in, k_par = jax.random.split(key)

    # Small example: [B, C, H, W] = [8, 1, 16, 16] -> image_size = 256
    B, C, H, W = 8, 1, 16, 16
    image_size = C * H * W
    x = jax.random.normal(k_in, (B, C, H, W), jnp.float32)

    weights, b4 = init_params(k_par, image_size)

    out = firstnet_forward(x, weights, b4, image_size)
    out = jax.block_until_ready(out)

    assert out.shape == (B, 10), out.shape
    # log_softmax rows should exponentiate-sum to 1
    row_sums = jnp.sum(jnp.exp(out), axis=1)
    assert jnp.allclose(row_sums, 1.0, atol=1e-3), row_sums
    assert bool(jnp.all(jnp.isfinite(out))), "non-finite logits"

    print("KERNEL_OK")
</pallas_src>

<mosaic_0001>
module attributes {stable_mosaic.version = 11 : i64} {
  func.func @firstnet_kernel(%arg0: memref<8x256xf32, #tpu.memory_space<vmem>>, %arg1: memref<256x1024xbf16, #tpu.memory_space<vmem>>, %arg2: memref<1024x640xbf16, #tpu.memory_space<vmem>>, %arg3: memref<640x256xbf16, #tpu.memory_space<vmem>>, %arg4: memref<256x128xbf16, #tpu.memory_space<vmem>>, %arg5: memref<128x128xbf16, #tpu.memory_space<vmem>>, %arg6: memref<1x128xf32, #tpu.memory_space<vmem>>, %arg7: memref<8x128xf32, #tpu.memory_space<vmem>>) attributes {dimension_semantics = [], scalar_prefetch = 0 : i64, scratch_operands = 0 : i64, tpu.core_type = #tpu.core_type<tc>} {
    %c0 = arith.constant 0 : index
    %c0_0 = arith.constant 0 : index
    %0 = vector.load %arg0[%c0, %c0_0] : memref<8x256xf32, #tpu.memory_space<vmem>>, vector<8x256xf32>
    %1 = arith.truncf %0 : vector<8x256xf32> to vector<8x256xbf16>
    %c0_1 = arith.constant 0 : index
    %c0_2 = arith.constant 0 : index
    %2 = vector.load %arg1[%c0_1, %c0_2] : memref<256x1024xbf16, #tpu.memory_space<vmem>>, vector<256x1024xbf16>
    %cst = arith.constant dense<0.000000e+00> : vector<8x1024xf32>
    %3 = tpu.matmul %1, %2, %cst {dimension_numbers = #tpu.dot_dimension_numbers<[1], [0], [0], [1], [0, 0, 1, 1], [], []>} : vector<8x256xbf16>, vector<256x1024xbf16>, vector<8x1024xf32> -> vector<8x1024xf32>
    %cst_3 = arith.constant dense<0.000000e+00> : vector<1024xf32>
    %4 = vector.multi_reduction <add>, %3, %cst_3 [0] : vector<8x1024xf32> to vector<1024xf32>
    %5 = vector.shape_cast %4 : vector<1024xf32> to vector<1x1024xf32>
    %cst_4 = arith.constant 8.000000e+00 : f32
    %6 = vector.broadcast %cst_4 : f32 to vector<1x1024xf32>
    %7 = arith.divf %5, %6 : vector<1x1024xf32>
    %8 = arith.mulf %3, %3 : vector<8x1024xf32>
    %cst_5 = arith.constant dense<0.000000e+00> : vector<1024xf32>
    %9 = vector.multi_reduction <add>, %8, %cst_5 [0] : vector<8x1024xf32> to vector<1024xf32>
    %10 = vector.shape_cast %9 : vector<1024xf32> to vector<1x1024xf32>
    %cst_6 = arith.constant 8.000000e+00 : f32
    %11 = vector.broadcast %cst_6 : f32 to vector<1x1024xf32>
    %12 = arith.divf %10, %11 : vector<1x1024xf32>
    %13 = arith.mulf %7, %7 : vector<1x1024xf32>
    %14 = arith.subf %12, %13 : vector<1x1024xf32>
    %cst_7 = arith.constant 0.000000e+00 : f32
    %15 = vector.broadcast %cst_7 : f32 to vector<1x1024xf32>
    %16 = arith.maximumf %14, %15 : vector<1x1024xf32>
    %cst_8 = arith.constant 9.99999974E-6 : f32
    %17 = vector.broadcast %cst_8 : f32 to vector<1x1024xf32>
    %18 = arith.addf %16, %17 : vector<1x1024xf32>
    %19 = math.rsqrt %18 : vector<1x1024xf32>
    %20 = arith.mulf %7, %19 : vector<1x1024xf32>
    %21 = vector.broadcast %19 : vector<1x1024xf32> to vector<8x1024xf32>
    %22 = arith.mulf %3, %21 : vector<8x1024xf32>
    %23 = vector.broadcast %20 : vector<1x1024xf32> to vector<8x1024xf32>
    %24 = arith.subf %22, %23 : vector<8x1024xf32>
    %cst_9 = arith.constant 0.000000e+00 : f32
    %25 = vector.broadcast %cst_9 : f32 to vector<8x1024xf32>
    %26 = arith.cmpf oge, %24, %25 : vector<8x1024xf32>
    %cst_10 = arith.constant 0.00999999977 : f32
    %27 = vector.broadcast %cst_10 : f32 to vector<8x1024xf32>
    %28 = arith.mulf %27, %24 : vector<8x1024xf32>
    %29 = arith.select %26, %24, %28 : vector<8x1024xi1>, vector<8x1024xf32>
    %30 = arith.truncf %29 : vector<8x1024xf32> to vector<8x1024xbf16>
    %c0_11 = arith.constant 0 : index
    %c0_12 = arith.constant 0 : index
    %31 = vector.load %arg2[%c0_11, %c0_12] : memref<1024x640xbf16, #tpu.memory_space<vmem>>, vector<1024x640xbf16>
    %cst_13 = arith.constant dense<0.000000e+00> : vector<8x640xf32>
    %32 = tpu.matmul %30, %31, %cst_13 {dimension_numbers = #tpu.dot_dimension_numbers<[1], [0], [0], [1], [0, 0, 1, 1], [], []>} : vector<8x1024xbf16>, vector<1024x640xbf16>, vector<8x640xf32> -> vector<8x640xf32>
    %cst_14 = arith.constant dense<0.000000e+00> : vector<640xf32>
    %33 = vector.multi_reduction <add>, %32, %cst_14 [0] : vector<8x640xf32> to vector<640xf32>
    %34 = vector.shape_cast %33 : vector<640xf32> to vector<1x640xf32>
    %cst_15 = arith.constant 8.000000e+00 : f32
    %35 = vector.broadcast %cst_15 : f32 to vector<1x640xf32>
    %36 = arith.divf %34, %35 : vector<1x640xf32>
    %37 = arith.mulf %32, %32 : vector<8x640xf32>
    %cst_16 = arith.constant dense<0.000000e+00> : vector<640xf32>
    %38 = vector.multi_reduction <add>, %37, %cst_16 [0] : vector<8x640xf32> to vector<640xf32>
    %39 = vector.shape_cast %38 : vector<640xf32> to vector<1x640xf32>
    %cst_17 = arith.constant 8.000000e+00 : f32
    %40 = vector.broadcast %cst_17 : f32 to vector<1x640xf32>
    %41 = arith.divf %39, %40 : vector<1x640xf32>
    %42 = arith.mulf %36, %36 : vector<1x640xf32>
    %43 = arith.subf %41, %42 : vector<1x640xf32>
    %cst_18 = arith.constant 0.000000e+00 : f32
    %44 = vector.broadcast %cst_18 : f32 to vector<1x640xf32>
    %45 = arith.maximumf %43, %44 : vector<1x640xf32>
    %cst_19 = arith.constant 9.99999974E-6 : f32
    %46 = vector.broadcast %cst_19 : f32 to vector<1x640xf32>
    %47 = arith.addf %45, %46 : vector<1x640xf32>
    %48 = math.rsqrt %47 : vector<1x640xf32>
    %49 = arith.mulf %36, %48 : vector<1x640xf32>
    %50 = vector.broadcast %48 : vector<1x640xf32> to vector<8x640xf32>
    %51 = arith.mulf %32, %50 : vector<8x640xf32>
    %52 = vector.broadcast %49 : vector<1x640xf32> to vector<8x640xf32>
    %53 = arith.subf %51, %52 : vector<8x640xf32>
    %cst_20 = arith.constant 0.000000e+00 : f32
    %54 = vector.broadcast %cst_20 : f32 to vector<8x640xf32>
    %55 = arith.cmpf oge, %53, %54 : vector<8x640xf32>
    %cst_21 = arith.constant 0.00999999977 : f32
    %56 = vector.broadcast %cst_21 : f32 to vector<8x640xf32>
    %57 = arith.mulf %56, %53 : vector<8x640xf32>
    %58 = arith.select %55, %53, %57 : vector<8x640xi1>, vector<8x640xf32>
    %59 = arith.truncf %58 : vector<8x640xf32> to vector<8x640xbf16>
    %c0_22 = arith.constant 0 : index
    %c0_23 = arith.constant 0 : index
    %60 = vector.load %arg3[%c0_22, %c0_23] : memref<640x256xbf16, #tpu.memory_space<vmem>>, vector<640x256xbf16>
    %cst_24 = arith.constant dense<0.000000e+00> : vector<8x256xf32>
    %61 = tpu.matmul %59, %60, %cst_24 {dimension_numbers = #tpu.dot_dimension_numbers<[1], [0], [0], [1], [0, 0, 1, 1], [], []>} : vector<8x640xbf16>, vector<640x256xbf16>, vector<8x256xf32> -> vector<8x256xf32>
    %cst_25 = arith.constant dense<0.000000e+00> : vector<256xf32>
    %62 = vector.multi_reduction <add>, %61, %cst_25 [0] : vector<8x256xf32> to vector<256xf32>
    %63 = vector.shape_cast %62 : vector<256xf32> to vector<1x256xf32>
    %cst_26 = arith.constant 8.000000e+00 : f32
    %64 = vector.broadcast %cst_26 : f32 to vector<1x256xf32>
    %65 = arith.divf %63, %64 : vector<1x256xf32>
    %66 = arith.mulf %61, %61 : vector<8x256xf32>
    %cst_27 = arith.constant dense<0.000000e+00> : vector<256xf32>
    %67 = vector.multi_reduction <add>, %66, %cst_27 [0] : vector<8x256xf32> to vector<256xf32>
    %68 = vector.shape_cast %67 : vector<256xf32> to vector<1x256xf32>
    %cst_28 = arith.constant 8.000000e+00 : f32
    %69 = vector.broadcast %cst_28 : f32 to vector<1x256xf32>
    %70 = arith.divf %68, %69 : vector<1x256xf32>
    %71 = arith.mulf %65, %65 : vector<1x256xf32>
    %72 = arith.subf %70, %71 : vector<1x256xf32>
    %cst_29 = arith.constant 0.000000e+00 : f32
    %73 = vector.broadcast %cst_29 : f32 to vector<1x256xf32>
    %74 = arith.maximumf %72, %73 : vector<1x256xf32>
    %cst_30 = arith.constant 9.99999974E-6 : f32
    %75 = vector.broadcast %cst_30 : f32 to vector<1x256xf32>
    %76 = arith.addf %74, %75 : vector<1x256xf32>
    %77 = math.rsqrt %76 : vector<1x256xf32>
    %78 = arith.mulf %65, %77 : vector<1x256xf32>
    %79 = vector.broadcast %77 : vector<1x256xf32> to vector<8x256xf32>
    %80 = arith.mulf %61, %79 : vector<8x256xf32>
    %81 = vector.broadcast %78 : vector<1x256xf32> to vector<8x256xf32>
    %82 = arith.subf %80, %81 : vector<8x256xf32>
    %cst_31 = arith.constant 0.000000e+00 : f32
    %83 = vector.broadcast %cst_31 : f32 to vector<8x256xf32>
    %84 = arith.cmpf oge, %82, %83 : vector<8x256xf32>
    %cst_32 = arith.constant 0.00999999977 : f32
    %85 = vector.broadcast %cst_32 : f32 to vector<8x256xf32>
    %86 = arith.mulf %85, %82 : vector<8x256xf32>
    %87 = arith.select %84, %82, %86 : vector<8x256xi1>, vector<8x256xf32>
    %88 = arith.truncf %87 : vector<8x256xf32> to vector<8x256xbf16>
    %c0_33 = arith.constant 0 : index
    %c0_34 = arith.constant 0 : index
    %89 = vector.load %arg4[%c0_33, %c0_34] : memref<256x128xbf16, #tpu.memory_space<vmem>>, vector<256x128xbf16>
    %cst_35 = arith.constant dense<0.000000e+00> : vector<8x128xf32>
    %90 = tpu.matmul %88, %89, %cst_35 {dimension_numbers = #tpu.dot_dimension_numbers<[1], [0], [0], [1], [0, 0, 1, 1], [], []>} : vector<8x256xbf16>, vector<256x128xbf16>, vector<8x128xf32> -> vector<8x128xf32>
    %cst_36 = arith.constant dense<0.000000e+00> : vector<128xf32>
    %91 = vector.multi_reduction <add>, %90, %cst_36 [0] : vector<8x128xf32> to vector<128xf32>
    %92 = vector.shape_cast %91 : vector<128xf32> to vector<1x128xf32>
    %cst_37 = arith.constant 8.000000e+00 : f32
    %93 = vector.broadcast %cst_37 : f32 to vector<1x128xf32>
    %94 = arith.divf %92, %93 : vector<1x128xf32>
    %95 = arith.mulf %90, %90 : vector<8x128xf32>
    %cst_38 = arith.constant dense<0.000000e+00> : vector<128xf32>
    %96 = vector.multi_reduction <add>, %95, %cst_38 [0] : vector<8x128xf32> to vector<128xf32>
    %97 = vector.shape_cast %96 : vector<128xf32> to vector<1x128xf32>
    %cst_39 = arith.constant 8.000000e+00 : f32
    %98 = vector.broadcast %cst_39 : f32 to vector<1x128xf32>
    %99 = arith.divf %97, %98 : vector<1x128xf32>
    %100 = arith.mulf %94, %94 : vector<1x128xf32>
    %101 = arith.subf %99, %100 : vector<1x128xf32>
    %cst_40 = arith.constant 0.000000e+00 : f32
    %102 = vector.broadcast %cst_40 : f32 to vector<1x128xf32>
    %103 = arith.maximumf %101, %102 : vector<1x128xf32>
    %cst_41 = arith.constant 9.99999974E-6 : f32
    %104 = vector.broadcast %cst_41 : f32 to vector<1x128xf32>
    %105 = arith.addf %103, %104 : vector<1x128xf32>
    %106 = math.rsqrt %105 : vector<1x128xf32>
    %107 = arith.mulf %94, %106 : vector<1x128xf32>
    %108 = vector.broadcast %106 : vector<1x128xf32> to vector<8x128xf32>
    %109 = arith.mulf %90, %108 : vector<8x128xf32>
    %110 = vector.broadcast %107 : vector<1x128xf32> to vector<8x128xf32>
    %111 = arith.subf %109, %110 : vector<8x128xf32>
    %cst_42 = arith.constant 0.000000e+00 : f32
    %112 = vector.broadcast %cst_42 : f32 to vector<8x128xf32>
    %113 = arith.cmpf oge, %111, %112 : vector<8x128xf32>
    %cst_43 = arith.constant 0.00999999977 : f32
    %114 = vector.broadcast %cst_43 : f32 to vector<8x128xf32>
    %115 = arith.mulf %114, %111 : vector<8x128xf32>
    %116 = arith.select %113, %111, %115 : vector<8x128xi1>, vector<8x128xf32>
    %117 = arith.truncf %116 : vector<8x128xf32> to vector<8x128xbf16>
    %c0_44 = arith.constant 0 : index
    %c0_45 = arith.constant 0 : index
    %118 = vector.load %arg5[%c0_44, %c0_45] : memref<128x128xbf16, #tpu.memory_space<vmem>>, vector<128x128xbf16>
    %cst_46 = arith.constant dense<0.000000e+00> : vector<8x128xf32>
    %119 = tpu.matmul %117, %118, %cst_46 {dimension_numbers = #tpu.dot_dimension_numbers<[1], [0], [0], [1], [0, 0, 1, 1], [], []>} : vector<8x128xbf16>, vector<128x128xbf16>, vector<8x128xf32> -> vector<8x128xf32>
    %c0_47 = arith.constant 0 : index
    %c0_48 = arith.constant 0 : index
    %120 = vector.load %arg6[%c0_47, %c0_48] : memref<1x128xf32, #tpu.memory_space<vmem>>, vector<1x128xf32>
    %121 = vector.broadcast %120 : vector<1x128xf32> to vector<8x128xf32>
    %122 = arith.addf %119, %121 : vector<8x128xf32>
    %cst_49 = arith.constant 0.000000e+00 : f32
    %123 = vector.broadcast %cst_49 : f32 to vector<8x128xf32>
    %124 = arith.cmpf oge, %122, %123 : vector<8x128xf32>
    %cst_50 = arith.constant 0.00999999977 : f32
    %125 = vector.broadcast %cst_50 : f32 to vector<8x128xf32>
    %126 = arith.mulf %125, %122 : vector<8x128xf32>
    %127 = arith.select %124, %122, %126 : vector<8x128xi1>, vector<8x128xf32>
    %cst_51 = arith.constant dense<0xFF800000> : vector<8xf32>
    %128 = vector.multi_reduction <maximumf>, %127, %cst_51 [1] : vector<8x128xf32> to vector<8xf32>
    %129 = vector.shape_cast %128 : vector<8xf32> to vector<8x1xf32>
    %130 = vector.broadcast %129 : vector<8x1xf32> to vector<8x128xf32>
    %131 = arith.subf %127, %130 : vector<8x128xf32>
    %132 = math.exp %131 : vector<8x128xf32>
    %cst_52 = arith.constant dense<0.000000e+00> : vector<8xf32>
    %133 = vector.multi_reduction <add>, %132, %cst_52 [1] : vector<8x128xf32> to vector<8xf32>
    %134 = vector.shape_cast %133 : vector<8xf32> to vector<8x1xf32>
    %135 = math.log %134 : vector<8x1xf32>
    %136 = vector.broadcast %135 : vector<8x1xf32> to vector<8x128xf32>
    %137 = arith.subf %131, %136 : vector<8x128xf32>
    %c0_53 = arith.constant 0 : index
    %c0_54 = arith.constant 0 : index
    %138 = vector.load %arg7[%c0_53, %c0_54] : memref<8x128xf32, #tpu.memory_space<vmem>>, vector<8x128xf32>
    tpu.vector_store %arg7[%c0_53, %c0_54], %137 {strides = array<i32>} : memref<8x128xf32, #tpu.memory_space<vmem>>, vector<8x128xf32>,
    return
  }
}

</mosaic_0001>

<llo_original>
// kernel: tpu_custom_call.1
$region0: #{tpu_custom_call.1}
  #allocation0 [shape = 'u32[]', space=smem, size = 0x4, offset = 0x4, fixed_abs, tag = 'smem constant byte address 0x4 - core index']
  #allocation1 [shape = 'u32[72,128]{1,0:T(1,128)}', space=vmem, size = 0x9000, scoped, tag = 'internal scratch']
  %s0 = inlined_call_operand.hbm [shape: f32[8,256], index: 0, kind: input, shape index: {}]
  %s1 = inlined_call_operand.hbm [shape: bf16[256,1024], index: 1, kind: input, shape index: {}]
  %s2 = inlined_call_operand.hbm [shape: bf16[1024,640], index: 2, kind: input, shape index: {}]
  %s3 = inlined_call_operand.hbm [shape: bf16[640,256], index: 3, kind: input, shape index: {}]
  %s4 = inlined_call_operand.hbm [shape: bf16[256,128], index: 4, kind: input, shape index: {}]
  %s5 = inlined_call_operand.hbm [shape: bf16[128,128], index: 5, kind: input, shape index: {}]
  %s6 = inlined_call_operand.hbm [shape: f32[1,128], index: 6, kind: input, shape index: {}]
  %s7 = inlined_call_operand.hbm [shape: f32[8,128], index: 7, kind: output, shape index: {}]
  %s8 = sld [smem:[#allocation0]]
  $region66: #{tpu_custom_call.1} parent=0
    _
  %s10 = ssub.s32 1, %s8
  %s11 = scalar_select 0, %s10, %s8
  $region1: #{tpu_custom_call.1} parent=0
    #allocation2 [shape = 'u8[8192]{0}', space=vmem, size = 0x2000, scoped, tag = 'input window, operand 0, single buffered']
    #allocation3 [shape = 's32[1]{0}', space=sflag, size = 0x4, scoped, tag = 'scoped memory for tpu_custom_call.1']
    #allocation4 [shape = 's32[1]{0}', space=sflag, size = 0x4, scoped, tag = 'scoped memory for tpu_custom_call.1']
    #allocation5 [shape = 'u8[524288]{0}', space=vmem, size = 0x80000, scoped, tag = 'input window, operand 1, single buffered']
    #allocation6 [shape = 's32[1]{0}', space=sflag, size = 0x4, scoped, tag = 'scoped memory for tpu_custom_call.1']
    #allocation7 [shape = 'u8[1310720]{0}', space=vmem, size = 0x140000, scoped, tag = 'input window, operand 2, single buffered']
    #allocation8 [shape = 'u8[327680]{0}', space=vmem, size = 0x50000, scoped, tag = 'input window, operand 3, single buffered']
    #allocation9 [shape = 's32[1]{0}', space=sflag, size = 0x4, scoped, tag = 'scoped memory for tpu_custom_call.1']
    #allocation10 [shape = 'u8[65536]{0}', space=vmem, size = 0x10000, scoped, tag = 'input window, operand 4, single buffered']
    #allocation11 [shape = 'u8[32768]{0}', space=vmem, size = 0x8000, scoped, tag = 'input window, operand 5, single buffered']
    #allocation12 [shape = 's32[1]{0}', space=sflag, size = 0x4, scoped, tag = 'scoped memory for tpu_custom_call.1']
    #allocation13 [shape = 'u8[512]{0}', space=vmem, size = 0x400, scoped, tag = 'input window, operand 6, single buffered']
    #allocation14 [shape = 'u8[4096]{0}', space=vmem, size = 0x1000, scoped, tag = 'output window, operand 0, single buffered']
    %12 = vsyncpa [#allocation3], 0
    %13 = vsyncpa [#allocation6], 0
    %14 = vsyncpa [#allocation9], 0
    %15 = vsyncpa [#allocation12], 0
    %16 = vsyncpa [#allocation4], 0
    // Predicated region
    $region2: #{tpu_custom_call.1} parent=1 // pred_check
      _
    $region3: #{tpu_custom_call.1} parent=1 // pred_check_branch
      %18 = sbr.rel (0) target = $region5
    $region4: #{tpu_custom_call.1} parent=1 // pred_region
      %20 = vsyncadd [#allocation3], 0
      %s22 = sshll.u32 %s0, 4
      %s23 = int_to_ptr.hbm [resolvable:$true] %s22
      %s24 = sshll.u32 [#allocation2], 4
      %s25 = int_to_ptr.vmem [resolvable:$true] %s24
      %27 = dma.hbm_to_vmem [thread:$0]  %s23, 256, %s25, [#allocation3]
    $region5: #{tpu_custom_call.1} parent=1 // pred_fallthru
      _
    // Predicated region
    $region6: #{tpu_custom_call.1} parent=1 // pred_check
      _
    $region7: #{tpu_custom_call.1} parent=1 // pred_check_branch
      %29 = sbr.rel (0) target = $region9
    $region8: #{tpu_custom_call.1} parent=1 // pred_region
      %31 = vsyncadd [#allocation6], 0
      %s32 = sshll.u32 %s1, 4
      %s33 = int_to_ptr.hbm [resolvable:$true] %s32
      %s34 = sshll.u32 [#allocation5], 4
      %s35 = int_to_ptr.vmem [resolvable:$true] %s34
      %40 = dma.hbm_to_vmem [thread:$0]  %s33, 16384, %s35, [#allocation6], 512, 512, 32
    $region9: #{tpu_custom_call.1} parent=1 // pred_fallthru
      _
    // Predicated region
    $region10: #{tpu_custom_call.1} parent=1 // pred_check
      _
    $region11: #{tpu_custom_call.1} parent=1 // pred_check_branch
      %42 = sbr.rel (0) target = $region13
    $region12: #{tpu_custom_call.1} parent=1 // pred_region
      %44 = vsyncadd [#allocation6], 0
      %s45 = sshll.u32 %s2, 4
      %s46 = int_to_ptr.hbm [resolvable:$true] %s45
      %s47 = sshll.u32 [#allocation7], 4
      %s48 = int_to_ptr.vmem [resolvable:$true] %s47
      %53 = dma.hbm_to_vmem [thread:$0]  %s46, 40960, %s48, [#allocation6], 320, 320, 20
    $region13: #{tpu_custom_call.1} parent=1 // pred_fallthru
      _
    // Predicated region
    $region14: #{tpu_custom_call.1} parent=1 // pred_check
      _
    $region15: #{tpu_custom_call.1} parent=1 // pred_check_branch
      %55 = sbr.rel (0) target = $region17
    $region16: #{tpu_custom_call.1} parent=1 // pred_region
      %57 = vsyncadd [#allocation9], 0
      %s58 = sshll.u32 %s3, 4
      %s59 = int_to_ptr.hbm [resolvable:$true] %s58
      %s60 = sshll.u32 [#allocation8], 4
      %s61 = int_to_ptr.vmem [resolvable:$true] %s60
      %66 = dma.hbm_to_vmem [thread:$0]  %s59, 10240, %s61, [#allocation9], 128, 128, 8
    $region17: #{tpu_custom_call.1} parent=1 // pred_fallthru
      _
    // Predicated region
    $region18: #{tpu_custom_call.1} parent=1 // pred_check
      _
    $region19: #{tpu_custom_call.1} parent=1 // pred_check_branch
      %68 = sbr.rel (0) target = $region21
    $region20: #{tpu_custom_call.1} parent=1 // pred_region
      %70 = vsyncadd [#allocation9], 0
      %s71 = sshll.u32 %s4, 4
      %s72 = int_to_ptr.hbm [resolvable:$true] %s71
      %s73 = sshll.u32 [#allocation10], 4
      %s74 = int_to_ptr.vmem [resolvable:$true] %s73
      %79 = dma.hbm_to_vmem [thread:$0]  %s72, 2048, %s74, [#allocation9], 64, 64, 4
    $region21: #{tpu_custom_call.1} parent=1 // pred_fallthru
      _
    // Predicated region
    $region22: #{tpu_custom_call.1} parent=1 // pred_check
      _
    $region23: #{tpu_custom_call.1} parent=1 // pred_check_branch
      %81 = sbr.rel (0) target = $region25
    $region24: #{tpu_custom_call.1} parent=1 // pred_region
      %83 = vsyncadd [#allocation12], 0
      %s84 = sshll.u32 %s5, 4
      %s85 = int_to_ptr.hbm [resolvable:$true] %s84
      %s86 = sshll.u32 [#allocation11], 4
      %s87 = int_to_ptr.vmem [resolvable:$true] %s86
      %92 = dma.hbm_to_vmem [thread:$0]  %s85, 1024, %s87, [#allocation12], 64, 64, 4
    $region25: #{tpu_custom_call.1} parent=1 // pred_fallthru
      _
    // Predicated region
    $region26: #{tpu_custom_call.1} parent=1 // pred_check
      _
    $region27: #{tpu_custom_call.1} parent=1 // pred_check_branch
      %94 = sbr.rel (0) target = $region29
    $region28: #{tpu_custom_call.1} parent=1 // pred_region
      %96 = vsyncadd [#allocation12], 0
      %s98 = sshll.u32 %s6, 4
      %s99 = int_to_ptr.hbm [resolvable:$true] %s98
      %s100 = sshll.u32 [#allocation13], 4
      %s101 = int_to_ptr.vmem [resolvable:$true] %s100
      %103 = dma.hbm_to_vmem [thread:$0]  %s99, 16, %s101, [#allocation12]
    $region29: #{tpu_custom_call.1} parent=1 // pred_fallthru
      _
    // Predicated region
    $region30: #{tpu_custom_call.1} parent=1 // pred_check
      _
    $region31: #{tpu_custom_call.1} parent=1 // pred_check_branch
      %105 = sbr.rel (0) target = $region33
    $region32: #{tpu_custom_call.1} parent=1 // pred_region
      %107 = dma.done [#allocation3], 256
    $region33: #{tpu_custom_call.1} parent=1 // pred_fallthru
      _
    // Predicated region
    $region34: #{tpu_custom_call.1} parent=1 // pred_check
      _
    $region35: #{tpu_custom_call.1} parent=1 // pred_check_branch
      %109 = sbr.rel (0) target = $region37
    $region36: #{tpu_custom_call.1} parent=1 // pred_region
      %111 = dma.done [#allocation6], 16384
    $region37: #{tpu_custom_call.1} parent=1 // pred_fallthru
      _
    // Predicated region
    $region38: #{tpu_custom_call.1} parent=1 // pred_check
      _
    $region39: #{tpu_custom_call.1} parent=1 // pred_check_branch
      %113 = sbr.rel (0) target = $region41
    $region40: #{tpu_custom_call.1} parent=1 // pred_region
      %115 = dma.done [#allocation6], 40960
    $region41: #{tpu_custom_call.1} parent=1 // pred_fallthru
      _
    // Predicated region
    $region42: #{tpu_custom_call.1} parent=1 // pred_check
      _
    $region43: #{tpu_custom_call.1} parent=1 // pred_check_branch
      %117 = sbr.rel (0) target = $region45
    $region44: #{tpu_custom_call.1} parent=1 // pred_region
      %119 = dma.done [#allocation9], 10240
    $region45: #{tpu_custom_call.1} parent=1 // pred_fallthru
      _
    // Predicated region
    $region46: #{tpu_custom_call.1} parent=1 // pred_check
      _
    $region47: #{tpu_custom_call.1} parent=1 // pred_check_branch
      %121 = sbr.rel (0) target = $region49
    $region48: #{tpu_custom_call.1} parent=1 // pred_region
      %123 = dma.done [#allocation9], 2048
    $region49: #{tpu_custom_call.1} parent=1 // pred_fallthru
      _
    // Predicated region
    $region50: #{tpu_custom_call.1} parent=1 // pred_check
      _
    $region51: #{tpu_custom_call.1} parent=1 // pred_check_branch
      %125 = sbr.rel (0) target = $region53
    $region52: #{tpu_custom_call.1} parent=1 // pred_region
      %127 = dma.done [#allocation12], 1024
    $region53: #{tpu_custom_call.1} parent=1 // pred_fallthru
      _
    // Predicated region
    $region54: #{tpu_custom_call.1} parent=1 // pred_check
      _
    $region55: #{tpu_custom_call.1} parent=1 // pred_check_branch
      %129 = sbr.rel (0) target = $region57
    $region56: #{tpu_custom_call.1} parent=1 // pred_region
      %131 = dma.done [#allocation12], 16
    $region57: #{tpu_custom_call.1} parent=1 // pred_fallthru
      _
    %v132 = vld [vmem:[#allocation2] sm:$0xff]
    %v133 = vld [vmem:[#allocation2 + $0x8] sm:$0xff]
    %v134 = vpack.c.bf16 %v132, %v132
    %v135 = vpack.c.bf16 %v133, %v133
    %v136 = vld [vmem:[#allocation5] sm:$0xff]
    %v137 = vld [vmem:[#allocation5 + $0x8] sm:$0xff]
    %v138 = vld [vmem:[#allocation5 + $0x10] sm:$0xff]
    %v139 = vld [vmem:[#allocation5 + $0x18] sm:$0xff]
    %v140 = vld [vmem:[#allocation5 + $0x20] sm:$0xff]
    %v141 = vld [vmem:[#allocation5 + $0x28] sm:$0xff]
    %v142 = vld [vmem:[#allocation5 + $0x30] sm:$0xff]
    %v143 = vld [vmem:[#allocation5 + $0x38] sm:$0xff]
    %v144 = vld [vmem:[#allocation5 + $0x40] sm:$0xff]
    %v145 = vld [vmem:[#allocation5 + $0x48] sm:$0xff]
    %v146 = vld [vmem:[#allocation5 + $0x50] sm:$0xff]
    %v147 = vld [vmem:[#allocation5 + $0x58] sm:$0xff]
    %v148 = vld [vmem:[#allocation5 + $0x60] sm:$0xff]
    %v149 = vld [vmem:[#allocation5 + $0x68] sm:$0xff]
    %v150 = vld [vmem:[#allocation5 + $0x70] sm:$0xff]
    %v151 = vld [vmem:[#allocation5 + $0x78] sm:$0xff]
    %v152 = vld [vmem:[#allocation5 + $0x80] sm:$0xff]
    %v153 = vld [vmem:[#allocation5 + $0x88] sm:$0xff]
    %v154 = vld [vmem:[#allocation5 + $0x90] sm:$0xff]
    %v155 = vld [vmem:[#allocation5 + $0x98] sm:$0xff]
    %v156 = vld [vmem:[#allocation5 + $0xa0] sm:$0xff]
    %v157 = vld [vmem:[#allocation5 + $0xa8] sm:$0xff]
    %v158 = vld [vmem:[#allocation5 + $0xb0] sm:$0xff]
    %v159 = vld [vmem:[#allocation5 + $0xb8] sm:$0xff]
    %v160 = vld [vmem:[#allocation5 + $0xc0] sm:$0xff]
    %v161 = vld [vmem:[#allocation5 + $0xc8] sm:$0xff]
    %v162 = vld [vmem:[#allocation5 + $0xd0] sm:$0xff]
    %v163 = vld [vmem:[#allocation5 + $0xd8] sm:$0xff]
    %v164 = vld [vmem:[#allocation5 + $0xe0] sm:$0xff]
    %v165 = vld [vmem:[#allocation5 + $0xe8] sm:$0xff]
    %v166 = vld [vmem:[#allocation5 + $0xf0] sm:$0xff]
    %v167 = vld [vmem:[#allocation5 + $0xf8] sm:$0xff]
    %v168 = vld [vmem:[#allocation5 + $0x100] sm:$0xff]
    %v169 = vld [vmem:[#allocation5 + $0x108] sm:$0xff]
    %v170 = vld [vmem:[#allocation5 + $0x110] sm:$0xff]
    %v171 = vld [vmem:[#allocation5 + $0x118] sm:$0xff]
    %v172 = vld [vmem:[#allocation5 + $0x120] sm:$0xff]
    %v173 = vld [vmem:[#allocation5 + $0x128] sm:$0xff]
    %v174 = vld [vmem:[#allocation5 + $0x130] sm:$0xff]
    %v175 = vld [vmem:[#allocation5 + $0x138] sm:$0xff]
    %v176 = vld [vmem:[#allocation5 + $0x140] sm:$0xff]
    %v177 = vld [vmem:[#allocation5 + $0x148] sm:$0xff]
    %v178 = vld [vmem:[#allocation5 + $0x150] sm:$0xff]
    %v179 = vld [vmem:[#allocation5 + $0x158] sm:$0xff]
    %v180 = vld [vmem:[#allocation5 + $0x160] sm:$0xff]
    %v181 = vld [vmem:[#allocation5 + $0x168] sm:$0xff]
    %v182 = vld [vmem:[#allocation5 + $0x170] sm:$0xff]
    %v183 = vld [vmem:[#allocation5 + $0x178] sm:$0xff]
    %v184 = vld [vmem:[#allocation5 + $0x180] sm:$0xff]
    %v185 = vld [vmem:[#allocation5 + $0x188] sm:$0xff]
    %v186 = vld [vmem:[#allocation5 + $0x190] sm:$0xff]
    %v187 = vld [vmem:[#allocation5 + $0x198] sm:$0xff]
    %v188 = vld [vmem:[#allocation5 + $0x1a0] sm:$0xff]
    %v189 = vld [vmem:[#allocation5 + $0x1a8] sm:$0xff]
    %v190 = vld [vmem:[#allocation5 + $0x1b0] sm:$0xff]
    %v191 = vld [vmem:[#allocation5 + $0x1b8] sm:$0xff]
    %v192 = vld [vmem:[#allocation5 + $0x1c0] sm:$0xff]
    %v193 = vld [vmem:[#allocation5 + $0x1c8] sm:$0xff]
    %v194 = vld [vmem:[#allocation5 + $0x1d0] sm:$0xff]
    %v195 = vld [vmem:[#allocation5 + $0x1d8] sm:$0xff]
    %v196 = vld [vmem:[#allocation5 + $0x1e0] sm:$0xff]
    %v197 = vld [vmem:[#allocation5 + $0x1e8] sm:$0xff]
    %v198 = vld [vmem:[#allocation5 + $0x1f0] sm:$0xff]
    %v199 = vld [vmem:[#allocation5 + $0x1f8] sm:$0xff]
    %v200 = vld [vmem:[#allocation5 + $0x200] sm:$0xff]
    %v201 = vld [vmem:[#allocation5 + $0x208] sm:$0xff]
    %v202 = vld [vmem:[#allocation5 + $0x210] sm:$0xff]
    %v203 = vld [vmem:[#allocation5 + $0x218] sm:$0xff]
    %v204 = vld [vmem:[#allocation5 + $0x220] sm:$0xff]
    %v205 = vld [vmem:[#allocation5 + $0x228] sm:$0xff]
    %v206 = vld [vmem:[#allocation5 + $0x230] sm:$0xff]
    %v207 = vld [vmem:[#allocation5 + $0x238] sm:$0xff]
    %v208 = vld [vmem:[#allocation5 + $0x240] sm:$0xff]
    %v209 = vld [vmem:[#allocation5 + $0x248] sm:$0xff]
    %v210 = vld [vmem:[#allocation5 + $0x250] sm:$0xff]
    %v211 = vld [vmem:[#allocation5 + $0x258] sm:$0xff]
    %v212 = vld [vmem:[#allocation5 + $0x260] sm:$0xff]
    %v213 = vld [vmem:[#allocation5 + $0x268] sm:$0xff]
    %v214 = vld [vmem:[#allocation5 + $0x270] sm:$0xff]
    %v215 = vld [vmem:[#allocation5 + $0x278] sm:$0xff]
    %v216 = vld [vmem:[#allocation5 + $0x280] sm:$0xff]
    %v217 = vld [vmem:[#allocation5 + $0x288] sm:$0xff]
    %v218 = vld [vmem:[#allocation5 + $0x290] sm:$0xff]
    %v219 = vld [vmem:[#allocation5 + $0x298] sm:$0xff]
    %v220 = vld [vmem:[#allocation5 + $0x2a0] sm:$0xff]
    %v221 = vld [vmem:[#allocation5 + $0x2a8] sm:$0xff]
    %v222 = vld [vmem:[#allocation5 + $0x2b0] sm:$0xff]
    %v223 = vld [vmem:[#allocation5 + $0x2b8] sm:$0xff]
    %v224 = vld [vmem:[#allocation5 + $0x2c0] sm:$0xff]
    %v225 = vld [vmem:[#allocation5 + $0x2c8] sm:$0xff]
    %v226 = vld [vmem:[#allocation5 + $0x2d0] sm:$0xff]
    %v227 = vld [vmem:[#allocation5 + $0x2d8] sm:$0xff]
    %v228 = vld [vmem:[#allocation5 + $0x2e0] sm:$0xff]
    %v229 = vld [vmem:[#allocation5 + $0x2e8] sm:$0xff]
    %v230 = vld [vmem:[#allocation5 + $0x2f0] sm:$0xff]
    %v231 = vld [vmem:[#allocation5 + $0x2f8] sm:$0xff]
    %v232 = vld [vmem:[#allocation5 + $0x300] sm:$0xff]
    %v233 = vld [vmem:[#allocation5 + $0x308] sm:$0xff]
    %v234 = vld [vmem:[#allocation5 + $0x310] sm:$0xff]
    %v235 = vld [vmem:[#allocation5 + $0x318] sm:$0xff]
    %v236 = vld [vmem:[#allocation5 + $0x320] sm:$0xff]
    %v237 = vld [vmem:[#allocation5 + $0x328] sm:$0xff]
    %v238 = vld [vmem:[#allocation5 + $0x330] sm:$0xff]
    %v239 = vld [vmem:[#allocation5 + $0x338] sm:$0xff]
    %v240 = vld [vmem:[#allocation5 + $0x340] sm:$0xff]
    %v241 = vld [vmem:[#allocation5 + $0x348] sm:$0xff]
    %v242 = vld [vmem:[#allocation5 + $0x350] sm:$0xff]
    %v243 = vld [vmem:[#allocation5 + $0x358] sm:$0xff]
    %v244 = vld [vmem:[#allocation5 + $0x360] sm:$0xff]
    %v245 = vld [vmem:[#allocation5 + $0x368] sm:$0xff]
    %v246 = vld [vmem:[#allocation5 + $0x370] sm:$0xff]
    %v247 = vld [vmem:[#allocation5 + $0x378] sm:$0xff]
    %v248 = vld [vmem:[#allocation5 + $0x380] sm:$0xff]
    %v249 = vld [vmem:[#allocation5 + $0x388] sm:$0xff]
    %v250 = vld [vmem:[#allocation5 + $0x390] sm:$0xff]
    %v251 = vld [vmem:[#allocation5 + $0x398] sm:$0xff]
    %v252 = vld [vmem:[#allocation5 + $0x3a0] sm:$0xff]
    %v253 = vld [vmem:[#allocation5 + $0x3a8] sm:$0xff]
    %v254 = vld [vmem:[#allocation5 + $0x3b0] sm:$0xff]
    %v255 = vld [vmem:[#allocation5 + $0x3b8] sm:$0xff]
    %v256 = vld [vmem:[#allocation5 + $0x3c0] sm:$0xff]
    %v257 = vld [vmem:[#allocation5 + $0x3c8] sm:$0xff]
    %v258 = vld [vmem:[#allocation5 + $0x3d0] sm:$0xff]
    %v259 = vld [vmem:[#allocation5 + $0x3d8] sm:$0xff]
    %v260 = vld [vmem:[#allocation5 + $0x3e0] sm:$0xff]
    %v261 = vld [vmem:[#allocation5 + $0x3e8] sm:$0xff]
    %v262 = vld [vmem:[#allocation5 + $0x3f0] sm:$0xff]
    %v263 = vld [vmem:[#allocation5 + $0x3f8] sm:$0xff]
    %v392 = vunpack.c.l.b16 %v136
    %v393 = vunpack.c.h.b16 %v136
    %v394 = vunpack.c.l.b16 %v137
    %v395 = vunpack.c.h.b16 %v137
    %v396 = vunpack.c.l.b16 %v138
    %v397 = vunpack.c.h.b16 %v138
    %v398 = vunpack.c.l.b16 %v139
    %v399 = vunpack.c.h.b16 %v139
    %v400 = vunpack.c.l.b16 %v140
    %v401 = vunpack.c.h.b16 %v140
    %v402 = vunpack.c.l.b16 %v141
    %v403 = vunpack.c.h.b16 %v141
    %v404 = vunpack.c.l.b16 %v142
    %v405 = vunpack.c.h.b16 %v142
    %v406 = vunpack.c.l.b16 %v143
    %v407 = vunpack.c.h.b16 %v143
    %v408 = vunpack.c.l.b16 %v144
    %v409 = vunpack.c.h.b16 %v144
    %v410 = vunpack.c.l.b16 %v145
    %v411 = vunpack.c.h.b16 %v145
    %v412 = vunpack.c.l.b16 %v146
    %v413 = vunpack.c.h.b16 %v146
    %v414 = vunpack.c.l.b16 %v147
    %v415 = vunpack.c.h.b16 %v147
    %v416 = vunpack.c.l.b16 %v148
    %v417 = vunpack.c.h.b16 %v148
    %v418 = vunpack.c.l.b16 %v149
    %v419 = vunpack.c.h.b16 %v149
    %v420 = vunpack.c.l.b16 %v150
    %v421 = vunpack.c.h.b16 %v150
    %v422 = vunpack.c.l.b16 %v151
    %v423 = vunpack.c.h.b16 %v151
    %v424 = vunpack.c.l.b16 %v152
    %v425 = vunpack.c.h.b16 %v152
    %v426 = vunpack.c.l.b16 %v153
    %v427 = vunpack.c.h.b16 %v153
    %v428 = vunpack.c.l.b16 %v154
    %v429 = vunpack.c.h.b16 %v154
    %v430 = vunpack.c.l.b16 %v155
    %v431 = vunpack.c.h.b16 %v155
    %v432 = vunpack.c.l.b16 %v156
    %v433 = vunpack.c.h.b16 %v156
    %v434 = vunpack.c.l.b16 %v157
    %v435 = vunpack.c.h.b16 %v157
    %v436 = vunpack.c.l.b16 %v158
    %v437 = vunpack.c.h.b16 %v158
    %v438 = vunpack.c.l.b16 %v159
    %v439 = vunpack.c.h.b16 %v159
    %v440 = vunpack.c.l.b16 %v160
    %v441 = vunpack.c.h.b16 %v160
    %v442 = vunpack.c.l.b16 %v161
    %v443 = vunpack.c.h.b16 %v161
    %v444 = vunpack.c.l.b16 %v162
    %v445 = vunpack.c.h.b16 %v162
    %v446 = vunpack.c.l.b16 %v163
    %v447 = vunpack.c.h.b16 %v163
    %v448 = vunpack.c.l.b16 %v164
    %v449 = vunpack.c.h.b16 %v164
    %v450 = vunpack.c.l.b16 %v165
    %v451 = vunpack.c.h.b16 %v165
    %v452 = vunpack.c.l.b16 %v166
    %v453 = vunpack.c.h.b16 %v166
    %v454 = vunpack.c.l.b16 %v167
    %v455 = vunpack.c.h.b16 %v167
    %v456 = vunpack.c.l.b16 %v168
    %v457 = vunpack.c.h.b16 %v168
    %v458 = vunpack.c.l.b16 %v169
    %v459 = vunpack.c.h.b16 %v169
    %v460 = vunpack.c.l.b16 %v170
    %v461 = vunpack.c.h.b16 %v170
    %v462 = vunpack.c.l.b16 %v171
    %v463 = vunpack.c.h.b16 %v171
    %v464 = vunpack.c.l.b16 %v172
    %v465 = vunpack.c.h.b16 %v172
    %v466 = vunpack.c.l.b16 %v173
    %v467 = vunpack.c.h.b16 %v173
    %v468 = vunpack.c.l.b16 %v174
    %v469 = vunpack.c.h.b16 %v174
    %v470 = vunpack.c.l.b16 %v175
    %v471 = vunpack.c.h.b16 %v175
    %v472 = vunpack.c.l.b16 %v176
    %v473 = vunpack.c.h.b16 %v176
    %v474 = vunpack.c.l.b16 %v177
    %v475 = vunpack.c.h.b16 %v177
    %v476 = vunpack.c.l.b16 %v178
    %v477 = vunpack.c.h.b16 %v178
    %v478 = vunpack.c.l.b16 %v179
    %v479 = vunpack.c.h.b16 %v179
    %v480 = vunpack.c.l.b16 %v180
    %v481 = vunpack.c.h.b16 %v180
    %v482 = vunpack.c.l.b16 %v181
    %v483 = vunpack.c.h.b16 %v181
    %v484 = vunpack.c.l.b16 %v182
    %v485 = vunpack.c.h.b16 %v182
    %v486 = vunpack.c.l.b16 %v183
    %v487 = vunpack.c.h.b16 %v183
    %v488 = vunpack.c.l.b16 %v184
    %v489 = vunpack.c.h.b16 %v184
    %v490 = vunpack.c.l.b16 %v185
    %v491 = vunpack.c.h.b16 %v185
    %v492 = vunpack.c.l.b16 %v186
    %v493 = vunpack.c.h.b16 %v186
    %v494 = vunpack.c.l.b16 %v187
    %v495 = vunpack.c.h.b16 %v187
    %v496 = vunpack.c.l.b16 %v188
    %v497 = vunpack.c.h.b16 %v188
    %v498 = vunpack.c.l.b16 %v189
    %v499 = vunpack.c.h.b16 %v189
    %v500 = vunpack.c.l.b16 %v190
    %v501 = vunpack.c.h.b16 %v190
    %v502 = vunpack.c.l.b16 %v191
    %v503 = vunpack.c.h.b16 %v191
    %v504 = vunpack.c.l.b16 %v192
    %v505 = vunpack.c.h.b16 %v192
    %v506 = vunpack.c.l.b16 %v193
    %v507 = vunpack.c.h.b16 %v193
    %v508 = vunpack.c.l.b16 %v194
    %v509 = vunpack.c.h.b16 %v194
    %v510 = vunpack.c.l.b16 %v195
    %v511 = vunpack.c.h.b16 %v195
    %v512 = vunpack.c.l.b16 %v196
    %v513 = vunpack.c.h.b16 %v196
    %v514 = vunpack.c.l.b16 %v197
    %v515 = vunpack.c.h.b16 %v197
    %v516 = vunpack.c.l.b16 %v198
    %v517 = vunpack.c.h.b16 %v198
    %v518 = vunpack.c.l.b16 %v199
    %v519 = vunpack.c.h.b16 %v199
    %v520 = vunpack.c.l.b16 %v200
    %v521 = vunpack.c.h.b16 %v200
    %v522 = vunpack.c.l.b16 %v201
    %v523 = vunpack.c.h.b16 %v201
    %v524 = vunpack.c.l.b16 %v202
    %v525 = vunpack.c.h.b16 %v202
    %v526 = vunpack.c.l.b16 %v203
    %v527 = vunpack.c.h.b16 %v203
    %v528 = vunpack.c.l.b16 %v204
    %v529 = vunpack.c.h.b16 %v204
    %v530 = vunpack.c.l.b16 %v205
    %v531 = vunpack.c.h.b16 %v205
    %v532 = vunpack.c.l.b16 %v206
    %v533 = vunpack.c.h.b16 %v206
    %v534 = vunpack.c.l.b16 %v207
    %v535 = vunpack.c.h.b16 %v207
    %v536 = vunpack.c.l.b16 %v208
    %v537 = vunpack.c.h.b16 %v208
    %v538 = vunpack.c.l.b16 %v209
    %v539 = vunpack.c.h.b16 %v209
    %v540 = vunpack.c.l.b16 %v210
    %v541 = vunpack.c.h.b16 %v210
    %v542 = vunpack.c.l.b16 %v211
    %v543 = vunpack.c.h.b16 %v211
    %v544 = vunpack.c.l.b16 %v212
    %v545 = vunpack.c.h.b16 %v212
    %v546 = vunpack.c.l.b16 %v213
    %v547 = vunpack.c.h.b16 %v213
    %v548 = vunpack.c.l.b16 %v214
    %v549 = vunpack.c.h.b16 %v214
    %v550 = vunpack.c.l.b16 %v215
    %v551 = vunpack.c.h.b16 %v215
    %v552 = vunpack.c.l.b16 %v216
    %v553 = vunpack.c.h.b16 %v216
    %v554 = vunpack.c.l.b16 %v217
    %v555 = vunpack.c.h.b16 %v217
    %v556 = vunpack.c.l.b16 %v218
    %v557 = vunpack.c.h.b16 %v218
    %v558 = vunpack.c.l.b16 %v219
    %v559 = vunpack.c.h.b16 %v219
    %v560 = vunpack.c.l.b16 %v220
    %v561 = vunpack.c.h.b16 %v220
    %v562 = vunpack.c.l.b16 %v221
    %v563 = vunpack.c.h.b16 %v221
    %v564 = vunpack.c.l.b16 %v222
    %v565 = vunpack.c.h.b16 %v222
    %v566 = vunpack.c.l.b16 %v223
    %v567 = vunpack.c.h.b16 %v223
    %v568 = vunpack.c.l.b16 %v224
    %v569 = vunpack.c.h.b16 %v224
    %v570 = vunpack.c.l.b16 %v225
    %v571 = vunpack.c.h.b16 %v225
    %v572 = vunpack.c.l.b16 %v226
    %v573 = vunpack.c.h.b16 %v226
    %v574 = vunpack.c.l.b16 %v227
    %v575 = vunpack.c.h.b16 %v227
    %v576 = vunpack.c.l.b16 %v228
    %v577 = vunpack.c.h.b16 %v228
    %v578 = vunpack.c.l.b16 %v229
    %v579 = vunpack.c.h.b16 %v229
    %v580 = vunpack.c.l.b16 %v230
    %v581 = vunpack.c.h.b16 %v230
    %v582 = vunpack.c.l.b16 %v231
    %v583 = vunpack.c.h.b16 %v231
    %v584 = vunpack.c.l.b16 %v232
    %v585 = vunpack.c.h.b16 %v232
    %v586 = vunpack.c.l.b16 %v233
    %v587 = vunpack.c.h.b16 %v233
    %v588 = vunpack.c.l.b16 %v234
    %v589 = vunpack.c.h.b16 %v234
    %v590 = vunpack.c.l.b16 %v235
    %v591 = vunpack.c.h.b16 %v235
    %v592 = vunpack.c.l.b16 %v236
    %v593 = vunpack.c.h.b16 %v236
    %v594 = vunpack.c.l.b16 %v237
    %v595 = vunpack.c.h.b16 %v237
    %v596 = vunpack.c.l.b16 %v238
    %v597 = vunpack.c.h.b16 %v238
    %v598 = vunpack.c.l.b16 %v239
    %v599 = vunpack.c.h.b16 %v239
    %v600 = vunpack.c.l.b16 %v240
    %v601 = vunpack.c.h.b16 %v240
    %v602 = vunpack.c.l.b16 %v241
    %v603 = vunpack.c.h.b16 %v241
    %v604 = vunpack.c.l.b16 %v242
    %v605 = vunpack.c.h.b16 %v242
    %v606 = vunpack.c.l.b16 %v243
    %v607 = vunpack.c.h.b16 %v243
    %v608 = vunpack.c.l.b16 %v244
    %v609 = vunpack.c.h.b16 %v244
    %v610 = vunpack.c.l.b16 %v245
    %v611 = vunpack.c.h.b16 %v245
    %v612 = vunpack.c.l.b16 %v246
    %v613 = vunpack.c.h.b16 %v246
    %v614 = vunpack.c.l.b16 %v247
    %v615 = vunpack.c.h.b16 %v247
    %v616 = vunpack.c.l.b16 %v248
    %v617 = vunpack.c.h.b16 %v248
    %v618 = vunpack.c.l.b16 %v249
    %v619 = vunpack.c.h.b16 %v249
    %v620 = vunpack.c.l.b16 %v250
    %v621 = vunpack.c.h.b16 %v250
    %v622 = vunpack.c.l.b16 %v251
    %v623 = vunpack.c.h.b16 %v251
    %v624 = vunpack.c.l.b16 %v252
    %v625 = vunpack.c.h.b16 %v252
    %v626 = vunpack.c.l.b16 %v253
    %v627 = vunpack.c.h.b16 %v253
    %v628 = vunpack.c.l.b16 %v254
    %v629 = vunpack.c.h.b16 %v254
    %v630 = vunpack.c.l.b16 %v255
    %v631 = vunpack.c.h.b16 %v255
    %v632 = vunpack.c.l.b16 %v256
    %v633 = vunpack.c.h.b16 %v256
    %v634 = vunpack.c.l.b16 %v257
    %v635 = vunpack.c.h.b16 %v257
    %v636 = vunpack.c.l.b16 %v258
    %v637 = vunpack.c.h.b16 %v258
    %v638 = vunpack.c.l.b16 %v259
    %v639 = vunpack.c.h.b16 %v259
    %v640 = vunpack.c.l.b16 %v260
    %v641 = vunpack.c.h.b16 %v260
    %v642 = vunpack.c.l.b16 %v261
    %v643 = vunpack.c.h.b16 %v261
    %v644 = vunpack.c.l.b16 %v262
    %v645 = vunpack.c.h.b16 %v262
    %v646 = vunpack.c.l.b16 %v263
    %v647 = vunpack.c.h.b16 %v263
    %v648 = vpack.c.b16 %v400, %v392
    %v649 = vpack.c.b16 %v401, %v393
    %v650 = vpack.c.b16 %v402, %v394
    %v651 = vpack.c.b16 %v403, %v395
    %v652 = vpack.c.b16 %v404, %v396
    %v653 = vpack.c.b16 %v405, %v397
    %v654 = vpack.c.b16 %v406, %v398
    %v655 = vpack.c.b16 %v407, %v399
    %v656 = vpack.c.b16 %v416, %v408
    %v657 = vpack.c.b16 %v417, %v409
    %v658 = vpack.c.b16 %v418, %v410
    %v659 = vpack.c.b16 %v419, %v411
    %v660 = vpack.c.b16 %v420, %v412
    %v661 = vpack.c.b16 %v421, %v413
    %v662 = vpack.c.b16 %v422, %v414
    %v663 = vpack.c.b16 %v423, %v415
    %v664 = vpack.c.b16 %v432, %v424
    %v665 = vpack.c.b16 %v433, %v425
    %v666 = vpack.c.b16 %v434, %v426
    %v667 = vpack.c.b16 %v435, %v427
    %v668 = vpack.c.b16 %v436, %v428
    %v669 = vpack.c.b16 %v437, %v429
    %v670 = vpack.c.b16 %v438, %v430
    %v671 = vpack.c.b16 %v439, %v431
    %v672 = vpack.c.b16 %v448, %v440
    %v673 = vpack.c.b16 %v449, %v441
    %v674 = vpack.c.b16 %v450, %v442
    %v675 = vpack.c.b16 %v451, %v443
    %v676 = vpack.c.b16 %v452, %v444
    %v677 = vpack.c.b16 %v453, %v445
    %v678 = vpack.c.b16 %v454, %v446
    %v679 = vpack.c.b16 %v455, %v447
    %v680 = vpack.c.b16 %v464, %v456
    %v681 = vpack.c.b16 %v465, %v457
    %v682 = vpack.c.b16 %v466, %v458
    %v683 = vpack.c.b16 %v467, %v459
    %v684 = vpack.c.b16 %v468, %v460
    %v685 = vpack.c.b16 %v469, %v461
    %v686 = vpack.c.b16 %v470, %v462
    %v687 = vpack.c.b16 %v471, %v463
    %v688 = vpack.c.b16 %v480, %v472
    %v689 = vpack.c.b16 %v481, %v473
    %v690 = vpack.c.b16 %v482, %v474
    %v691 = vpack.c.b16 %v483, %v475
    %v692 = vpack.c.b16 %v484, %v476
    %v693 = vpack.c.b16 %v485, %v477
    %v694 = vpack.c.b16 %v486, %v478
    %v695 = vpack.c.b16 %v487, %v479
    %v696 = vpack.c.b16 %v496, %v488
    %v697 = vpack.c.b16 %v497, %v489
    %v698 = vpack.c.b16 %v498, %v490
    %v699 = vpack.c.b16 %v499, %v491
    %v700 = vpack.c.b16 %v500, %v492
    %v701 = vpack.c.b16 %v501, %v493
    %v702 = vpack.c.b16 %v502, %v494
    %v703 = vpack.c.b16 %v503, %v495
    %v704 = vpack.c.b16 %v512, %v504
    %v705 = vpack.c.b16 %v513, %v505
    %v706 = vpack.c.b16 %v514, %v506
    %v707 = vpack.c.b16 %v515, %v507
    %v708 = vpack.c.b16 %v516, %v508
    %v709 = vpack.c.b16 %v517, %v509
    %v710 = vpack.c.b16 %v518, %v510
    %v711 = vpack.c.b16 %v519, %v511
    %v712 = vpack.c.b16 %v528, %v520
    %v713 = vpack.c.b16 %v529, %v521
    %v714 = vpack.c.b16 %v530, %v522
    %v715 = vpack.c.b16 %v531, %v523
    %v716 = vpack.c.b16 %v532, %v524
    %v717 = vpack.c.b16 %v533, %v525
    %v718 = vpack.c.b16 %v534, %v526
    %v719 = vpack.c.b16 %v535, %v527
    %v720 = vpack.c.b16 %v544, %v536
    %v721 = vpack.c.b16 %v545, %v537
    %v722 = vpack.c.b16 %v546, %v538
    %v723 = vpack.c.b16 %v547, %v539
    %v724 = vpack.c.b16 %v548, %v540
    %v725 = vpack.c.b16 %v549, %v541
    %v726 = vpack.c.b16 %v550, %v542
    %v727 = vpack.c.b16 %v551, %v543
    %v728 = vpack.c.b16 %v560, %v552
    %v729 = vpack.c.b16 %v561, %v553
    %v730 = vpack.c.b16 %v562, %v554
    %v731 = vpack.c.b16 %v563, %v555
    %v732 = vpack.c.b16 %v564, %v556
    %v733 = vpack.c.b16 %v565, %v557
    %v734 = vpack.c.b16 %v566, %v558
    %v735 = vpack.c.b16 %v567, %v559
    %v736 = vpack.c.b16 %v576, %v568
    %v737 = vpack.c.b16 %v577, %v569
    %v738 = vpack.c.b16 %v578, %v570
    %v739 = vpack.c.b16 %v579, %v571
    %v740 = vpack.c.b16 %v580, %v572
    %v741 = vpack.c.b16 %v581, %v573
    %v742 = vpack.c.b16 %v582, %v574
    %v743 = vpack.c.b16 %v583, %v575
    %v744 = vpack.c.b16 %v592, %v584
    %v745 = vpack.c.b16 %v593, %v585
    %v746 = vpack.c.b16 %v594, %v586
    %v747 = vpack.c.b16 %v595, %v587
    %v748 = vpack.c.b16 %v596, %v588
    %v749 = vpack.c.b16 %v597, %v589
    %v750 = vpack.c.b16 %v598, %v590
    %v751 = vpack.c.b16 %v599, %v591
    %v752 = vpack.c.b16 %v608, %v600
    %v753 = vpack.c.b16 %v609, %v601
    %v754 = vpack.c.b16 %v610, %v602
    %v755 = vpack.c.b16 %v611, %v603
    %v756 = vpack.c.b16 %v612, %v604
    %v757 = vpack.c.b16 %v613, %v605
    %v758 = vpack.c.b16 %v614, %v606
    %v759 = vpack.c.b16 %v615, %v607
    %v760 = vpack.c.b16 %v624, %v616
    %v761 = vpack.c.b16 %v625, %v617
    %v762 = vpack.c.b16 %v626, %v618
    %v763 = vpack.c.b16 %v627, %v619
    %v764 = vpack.c.b16 %v628, %v620
    %v765 = vpack.c.b16 %v629, %v621
    %v766 = vpack.c.b16 %v630, %v622
    %v767 = vpack.c.b16 %v631, %v623
    %v768 = vpack.c.b16 %v640, %v632
    %v769 = vpack.c.b16 %v641, %v633
    %v770 = vpack.c.b16 %v642, %v634
    %v771 = vpack.c.b16 %v643, %v635
    %v772 = vpack.c.b16 %v644, %v636
    %v773 = vpack.c.b16 %v645, %v637
    %v774 = vpack.c.b16 %v646, %v638
    %v775 = vpack.c.b16 %v647, %v639
    %904 = vmatpush.bf16.msra.mxu0 %v704
    %905 = vmatpush.bf16.msra.mxu0 %v696
    %906 = vmatpush.bf16.msra.mxu0 %v688
    %907 = vmatpush.bf16.msra.mxu0 %v680
    %908 = vmatpush.bf16.msra.mxu0 %v672
    %909 = vmatpush.bf16.msra.mxu0 %v664
    %910 = vmatpush.bf16.msra.mxu0 %v656
    %911 = vmatpush.bf16.msra.mxu0 %v648
    %912 = vmatmul.bf16.gmra.mxu0 %v134
    %v913 = vpop.f32.mrf.mxu0
    %v914 = vadd.f32 0.0, %v913
    %v915 = vpop.f32.mrf.mxu0
    %916 = vdwg.mxu0
    %917 = vmatpush.bf16.msra.mxu0 %v768
    %918 = vmatpush.bf16.msra.mxu0 %v760
    %919 = vmatpush.bf16.msra.mxu0 %v752
    %920 = vmatpush.bf16.msra.mxu0 %v744
    %921 = vmatpush.bf16.msra.mxu0 %v736
    %922 = vmatpush.bf16.msra.mxu0 %v728
    %923 = vmatpush.bf16.msra.mxu0 %v720
    %924 = vmatpush.bf16.msra.mxu0 %v712
    %925 = vmatmul.bf16.gmra.mxu0 %v135
    %v926 = vpop.f32.mrf.mxu0
    %v927 = vadd.f32 %v914, %v926
    %v928 = vpop.f32.mrf.mxu0
    %929 = vdwg.mxu0
    %930 = vmatpush.bf16.msra.mxu0 %v705
    %931 = vmatpush.bf16.msra.mxu0 %v697
    %932 = vmatpush.bf16.msra.mxu0 %v689
    %933 = vmatpush.bf16.msra.mxu0 %v681
    %934 = vmatpush.bf16.msra.mxu0 %v673
    %935 = vmatpush.bf16.msra.mxu0 %v665
    %936 = vmatpush.bf16.msra.mxu0 %v657
    %937 = vmatpush.bf16.msra.mxu0 %v649
    %938 = vmatmul.bf16.gmra.mxu0 %v134
    %v939 = vpop.f32.mrf.mxu0
    %v940 = vadd.f32 0.0, %v939
    %v941 = vpop.f32.mrf.mxu0
    %942 = vdwg.mxu0
    %943 = vmatpush.bf16.msra.mxu0 %v769
    %944 = vmatpush.bf16.msra.mxu0 %v761
    %945 = vmatpush.bf16.msra.mxu0 %v753
    %946 = vmatpush.bf16.msra.mxu0 %v745
    %947 = vmatpush.bf16.msra.mxu0 %v737
    %948 = vmatpush.bf16.msra.mxu0 %v729
    %949 = vmatpush.bf16.msra.mxu0 %v721
    %950 = vmatpush.bf16.msra.mxu0 %v713
    %951 = vmatmul.bf16.gmra.mxu0 %v135
    %v952 = vpop.f32.mrf.mxu0
    %v953 = vadd.f32 %v940, %v952
    %v954 = vpop.f32.mrf.mxu0
    %955 = vdwg.mxu0
    %956 = vmatpush.bf16.msra.mxu0 %v706
    %957 = vmatpush.bf16.msra.mxu0 %v698
    %958 = vmatpush.bf16.msra.mxu0 %v690
    %959 = vmatpush.bf16.msra.mxu0 %v682
    %960 = vmatpush.bf16.msra.mxu0 %v674
    %961 = vmatpush.bf16.msra.mxu0 %v666
    %962 = vmatpush.bf16.msra.mxu0 %v658
    %963 = vmatpush.bf16.msra.mxu0 %v650
    %964 = vmatmul.bf16.gmra.mxu0 %v134
    %v965 = vpop.f32.mrf.mxu0
    %v966 = vadd.f32 0.0, %v965
    %v967 = vpop.f32.mrf.mxu0
    %968 = vdwg.mxu0
    %969 = vmatpush.bf16.msra.mxu0 %v770
    %970 = vmatpush.bf16.msra.mxu0 %v762
    %971 = vmatpush.bf16.msra.mxu0 %v754
    %972 = vmatpush.bf16.msra.mxu0 %v746
    %973 = vmatpush.bf16.msra.mxu0 %v738
    %974 = vmatpush.bf16.msra.mxu0 %v730
    %975 = vmatpush.bf16.msra.mxu0 %v722
    %976 = vmatpush.bf16.msra.mxu0 %v714
    %977 = vmatmul.bf16.gmra.mxu0 %v135
    %v978 = vpop.f32.mrf.mxu0
    %v979 = vadd.f32 %v966, %v978
    %v980 = vpop.f32.mrf.mxu0
    %981 = vdwg.mxu0
    %982 = vmatpush.bf16.msra.mxu0 %v707
    %983 = vmatpush.bf16.msra.mxu0 %v699
    %984 = vmatpush.bf16.msra.mxu0 %v691
    %985 = vmatpush.bf16.msra.mxu0 %v683
    %986 = vmatpush.bf16.msra.mxu0 %v675
    %987 = vmatpush.bf16.msra.mxu0 %v667
    %988 = vmatpush.bf16.msra.mxu0 %v659
    %989 = vmatpush.bf16.msra.mxu0 %v651
    %990 = vmatmul.bf16.gmra.mxu0 %v134
    %v991 = vpop.f32.mrf.mxu0
    %v992 = vadd.f32 0.0, %v991
    %v993 = vpop.f32.mrf.mxu0
    %994 = vdwg.mxu0
    %995 = vmatpush.bf16.msra.mxu0 %v771
    %996 = vmatpush.bf16.msra.mxu0 %v763
    %997 = vmatpush.bf16.msra.mxu0 %v755
    %998 = vmatpush.bf16.msra.mxu0 %v747
    %999 = vmatpush.bf16.msra.mxu0 %v739
    %1000 = vmatpush.bf16.msra.mxu0 %v731
    %1001 = vmatpush.bf16.msra.mxu0 %v723
    %1002 = vmatpush.bf16.msra.mxu0 %v715
    %1003 = vmatmul.bf16.gmra.mxu0 %v135
    %v1004 = vpop.f32.mrf.mxu0
    %v1005 = vadd.f32 %v992, %v1004
    %v1006 = vpop.f32.mrf.mxu0
    %1007 = vdwg.mxu0
    %1008 = vmatpush.bf16.msra.mxu0 %v708
    %1009 = vmatpush.bf16.msra.mxu0 %v700
    %1010 = vmatpush.bf16.msra.mxu0 %v692
    %1011 = vmatpush.bf16.msra.mxu0 %v684
    %1012 = vmatpush.bf16.msra.mxu0 %v676
    %1013 = vmatpush.bf16.msra.mxu0 %v668
    %1014 = vmatpush.bf16.msra.mxu0 %v660
    %1015 = vmatpush.bf16.msra.mxu0 %v652
    %1016 = vmatmul.bf16.gmra.mxu0 %v134
    %v1017 = vpop.f32.mrf.mxu0
    %v1018 = vadd.f32 0.0, %v1017
    %v1019 = vpop.f32.mrf.mxu0
    %1020 = vdwg.mxu0
    %1021 = vmatpush.bf16.msra.mxu0 %v772
    %1022 = vmatpush.bf16.msra.mxu0 %v764
    %1023 = vmatpush.bf16.msra.mxu0 %v756
    %1024 = vmatpush.bf16.msra.mxu0 %v748
    %1025 = vmatpush.bf16.msra.mxu0 %v740
    %1026 = vmatpush.bf16.msra.mxu0 %v732
    %1027 = vmatpush.bf16.msra.mxu0 %v724
    %1028 = vmatpush.bf16.msra.mxu0 %v716
    %1029 = vmatmul.bf16.gmra.mxu0 %v135
    %v1030 = vpop.f32.mrf.mxu0
    %v1031 = vadd.f32 %v1018, %v1030
    %v1032 = vpop.f32.mrf.mxu0
    %1033 = vdwg.mxu0
    %1034 = vmatpush.bf16.msra.mxu0 %v709
    %1035 = vmatpush.bf16.msra.mxu0 %v701
    %1036 = vmatpush.bf16.msra.mxu0 %v693
    %1037 = vmatpush.bf16.msra.mxu0 %v685
    %1038 = vmatpush.bf16.msra.mxu0 %v677
    %1039 = vmatpush.bf16.msra.mxu0 %v669
    %1040 = vmatpush.bf16.msra.mxu0 %v661
    %1041 = vmatpush.bf16.msra.mxu0 %v653
    %1042 = vmatmul.bf16.gmra.mxu0 %v134
    %v1043 = vpop.f32.mrf.mxu0
    %v1044 = vadd.f32 0.0, %v1043
    %v1045 = vpop.f32.mrf.mxu0
    %1046 = vdwg.mxu0
    %1047 = vmatpush.bf16.msra.mxu0 %v773
    %1048 = vmatpush.bf16.msra.mxu0 %v765
    %1049 = vmatpush.bf16.msra.mxu0 %v757
    %1050 = vmatpush.bf16.msra.mxu0 %v749
    %1051 = vmatpush.bf16.msra.mxu0 %v741
    %1052 = vmatpush.bf16.msra.mxu0 %v733
    %1053 = vmatpush.bf16.msra.mxu0 %v725
    %1054 = vmatpush.bf16.msra.mxu0 %v717
    %1055 = vmatmul.bf16.gmra.mxu0 %v135
    %v1056 = vpop.f32.mrf.mxu0
    %v1057 = vadd.f32 %v1044, %v1056
    %v1058 = vpop.f32.mrf.mxu0
    %1059 = vdwg.mxu0
    %1060 = vmatpush.bf16.msra.mxu0 %v710
    %1061 = vmatpush.bf16.msra.mxu0 %v702
    %1062 = vmatpush.bf16.msra.mxu0 %v694
    %1063 = vmatpush.bf16.msra.mxu0 %v686
    %1064 = vmatpush.bf16.msra.mxu0 %v678
    %1065 = vmatpush.bf16.msra.mxu0 %v670
    %1066 = vmatpush.bf16.msra.mxu0 %v662
    %1067 = vmatpush.bf16.msra.mxu0 %v654
    %1068 = vmatmul.bf16.gmra.mxu0 %v134
    %v1069 = vpop.f32.mrf.mxu0
    %v1070 = vadd.f32 0.0, %v1069
    %v1071 = vpop.f32.mrf.mxu0
    %1072 = vdwg.mxu0
    %1073 = vmatpush.bf16.msra.mxu0 %v774
    %1074 = vmatpush.bf16.msra.mxu0 %v766
    %1075 = vmatpush.bf16.msra.mxu0 %v758
    %1076 = vmatpush.bf16.msra.mxu0 %v750
    %1077 = vmatpush.bf16.msra.mxu0 %v742
    %1078 = vmatpush.bf16.msra.mxu0 %v734
    %1079 = vmatpush.bf16.msra.mxu0 %v726
    %1080 = vmatpush.bf16.msra.mxu0 %v718
    %1081 = vmatmul.bf16.gmra.mxu0 %v135
    %v1082 = vpop.f32.mrf.mxu0
    %v1083 = vadd.f32 %v1070, %v1082
    %v1084 = vpop.f32.mrf.mxu0
    %1085 = vdwg.mxu0
    %1086 = vmatpush.bf16.msra.mxu0 %v711
    %1087 = vmatpush.bf16.msra.mxu0 %v703
    %1088 = vmatpush.bf16.msra.mxu0 %v695
    %1089 = vmatpush.bf16.msra.mxu0 %v687
    %1090 = vmatpush.bf16.msra.mxu0 %v679
    %1091 = vmatpush.bf16.msra.mxu0 %v671
    %1092 = vmatpush.bf16.msra.mxu0 %v663
    %1093 = vmatpush.bf16.msra.mxu0 %v655
    %1094 = vmatmul.bf16.gmra.mxu0 %v134
    %v1095 = vpop.f32.mrf.mxu0
    %v1096 = vadd.f32 0.0, %v1095
    %v1097 = vpop.f32.mrf.mxu0
    %1098 = vdwg.mxu0
    %1099 = vmatpush.bf16.msra.mxu0 %v775
    %1100 = vmatpush.bf16.msra.mxu0 %v767
    %1101 = vmatpush.bf16.msra.mxu0 %v759
    %1102 = vmatpush.bf16.msra.mxu0 %v751
    %1103 = vmatpush.bf16.msra.mxu0 %v743
    %1104 = vmatpush.bf16.msra.mxu0 %v735
    %1105 = vmatpush.bf16.msra.mxu0 %v727
    %1106 = vmatpush.bf16.msra.mxu0 %v719
    %1107 = vmatmul.bf16.gmra.mxu0 %v135
    %v1108 = vpop.f32.mrf.mxu0
    %v1109 = vadd.f32 %v1096, %v1108
    %v1110 = vpop.f32.mrf.mxu0
    %1111 = vdwg.mxu0
    %v1112 = vrot.slane %v927, 4
    %v1113 = vadd.f32 %v927, %v1112
    %v1114 = vrot.slane %v1113, 2
    %v1115 = vadd.f32 %v1113, %v1114
    %v1116 = vrot.slane %v1115, 1
    %v1117 = vadd.f32 %v1115, %v1116
    %v1118 = vrot.slane %v953, 4
    %v1119 = vadd.f32 %v953, %v1118
    %v1120 = vrot.slane %v1119, 2
    %v1121 = vadd.f32 %v1119, %v1120
    %v1122 = vrot.slane %v1121, 1
    %v1123 = vadd.f32 %v1121, %v1122
    %v1124 = vrot.slane %v979, 4
    %v1125 = vadd.f32 %v979, %v1124
    %v1126 = vrot.slane %v1125, 2
    %v1127 = vadd.f32 %v1125, %v1126
    %v1128 = vrot.slane %v1127, 1
    %v1129 = vadd.f32 %v1127, %v1128
    %v1130 = vrot.slane %v1005, 4
    %v1131 = vadd.f32 %v1005, %v1130
    %v1132 = vrot.slane %v1131, 2
    %v1133 = vadd.f32 %v1131, %v1132
    %v1134 = vrot.slane %v1133, 1
    %v1135 = vadd.f32 %v1133, %v1134
    %v1136 = vrot.slane %v1031, 4
    %v1137 = vadd.f32 %v1031, %v1136
    %v1138 = vrot.slane %v1137, 2
    %v1139 = vadd.f32 %v1137, %v1138
    %v1140 = vrot.slane %v1139, 1
    %v1141 = vadd.f32 %v1139, %v1140
    %v1142 = vrot.slane %v1057, 4
    %v1143 = vadd.f32 %v1057, %v1142
    %v1144 = vrot.slane %v1143, 2
    %v1145 = vadd.f32 %v1143, %v1144
    %v1146 = vrot.slane %v1145, 1
    %v1147 = vadd.f32 %v1145, %v1146
    %v1148 = vrot.slane %v1083, 4
    %v1149 = vadd.f32 %v1083, %v1148
    %v1150 = vrot.slane %v1149, 2
    %v1151 = vadd.f32 %v1149, %v1150
    %v1152 = vrot.slane %v1151, 1
    %v1153 = vadd.f32 %v1151, %v1152
    %v1154 = vrot.slane %v1109, 4
    %v1155 = vadd.f32 %v1109, %v1154
    %v1156 = vrot.slane %v1155, 2
    %v1157 = vadd.f32 %v1155, %v1156
    %v1158 = vrot.slane %v1157, 1
    %v1159 = vadd.f32 %v1157, %v1158
    %v1160 = vrcp.pop 8.0
    %v1161 = vmul.f32 8.0, %v1160
    %v1162 = vsub.f32 1.0, %v1161
    %v1163 = vmul.f32 %v1160, %v1162
    %v1164 = vadd.f32 %v1160, %v1163
    %vm1165 = vweird.f32 %v1160
    %v1166 = vsel %vm1165, %v1160, %v1164
    %v1167 = vmul.f32 %v1117, %v1166
    %v1168 = vmul.f32 %v1123, %v1166
    %v1169 = vmul.f32 %v1129, %v1166
    %v1170 = vmul.f32 %v1135, %v1166
    %v1171 = vmul.f32 %v1141, %v1166
    %v1172 = vmul.f32 %v1147, %v1166
    %v1173 = vmul.f32 %v1153, %v1166
    %v1174 = vmul.f32 %v1159, %v1166
    %v1175 = vmul.f32 %v927, %v927
    %v1176 = vmul.f32 %v953, %v953
    %v1177 = vmul.f32 %v979, %v979
    %v1178 = vmul.f32 %v1005, %v1005
    %v1179 = vmul.f32 %v1031, %v1031
    %v1180 = vmul.f32 %v1057, %v1057
    %v1181 = vmul.f32 %v1083, %v1083
    %v1182 = vmul.f32 %v1109, %v1109
    %v1183 = vrot.slane %v1175, 4
    %v1184 = vadd.f32 %v1175, %v1183
    %v1185 = vrot.slane %v1184, 2
    %v1186 = vadd.f32 %v1184, %v1185
    %v1187 = vrot.slane %v1186, 1
    %v1188 = vadd.f32 %v1186, %v1187
    %v1189 = vrot.slane %v1176, 4
    %v1190 = vadd.f32 %v1176, %v1189
    %v1191 = vrot.slane %v1190, 2
    %v1192 = vadd.f32 %v1190, %v1191
    %v1193 = vrot.slane %v1192, 1
    %v1194 = vadd.f32 %v1192, %v1193
    %v1195 = vrot.slane %v1177, 4
    %v1196 = vadd.f32 %v1177, %v1195
    %v1197 = vrot.slane %v1196, 2
    %v1198 = vadd.f32 %v1196, %v1197
    %v1199 = vrot.slane %v1198, 1
    %v1200 = vadd.f32 %v1198, %v1199
    %v1201 = vrot.slane %v1178, 4
    %v1202 = vadd.f32 %v1178, %v1201
    %v1203 = vrot.slane %v1202, 2
    %v1204 = vadd.f32 %v1202, %v1203
    %v1205 = vrot.slane %v1204, 1
    %v1206 = vadd.f32 %v1204, %v1205
    %v1207 = vrot.slane %v1179, 4
    %v1208 = vadd.f32 %v1179, %v1207
    %v1209 = vrot.slane %v1208, 2
    %v1210 = vadd.f32 %v1208, %v1209
    %v1211 = vrot.slane %v1210, 1
    %v1212 = vadd.f32 %v1210, %v1211
    %v1213 = vrot.slane %v1180, 4
    %v1214 = vadd.f32 %v1180, %v1213
    %v1215 = vrot.slane %v1214, 2
    %v1216 = vadd.f32 %v1214, %v1215
    %v1217 = vrot.slane %v1216, 1
    %v1218 = vadd.f32 %v1216, %v1217
    %v1219 = vrot.slane %v1181, 4
    %v1220 = vadd.f32 %v1181, %v1219
    %v1221 = vrot.slane %v1220, 2
    %v1222 = vadd.f32 %v1220, %v1221
    %v1223 = vrot.slane %v1222, 1
    %v1224 = vadd.f32 %v1222, %v1223
    %v1225 = vrot.slane %v1182, 4
    %v1226 = vadd.f32 %v1182, %v1225
    %v1227 = vrot.slane %v1226, 2
    %v1228 = vadd.f32 %v1226, %v1227
    %v1229 = vrot.slane %v1228, 1
    %v1230 = vadd.f32 %v1228, %v1229
    %v1231 = vmul.f32 %v1188, %v1166
    %v1232 = vmul.f32 %v1194, %v1166
    %v1233 = vmul.f32 %v1200, %v1166
    %v1234 = vmul.f32 %v1206, %v1166
    %v1235 = vmul.f32 %v1212, %v1166
    %v1236 = vmul.f32 %v1218, %v1166
    %v1237 = vmul.f32 %v1224, %v1166
    %v1238 = vmul.f32 %v1230, %v1166
    %v1239 = vmul.f32 %v1167, %v1167
    %v1240 = vmul.f32 %v1168, %v1168
    %v1241 = vmul.f32 %v1169, %v1169
    %v1242 = vmul.f32 %v1170, %v1170
    %v1243 = vmul.f32 %v1171, %v1171
    %v1244 = vmul.f32 %v1172, %v1172
    %v1245 = vmul.f32 %v1173, %v1173
    %v1246 = vmul.f32 %v1174, %v1174
    %v1247 = vsub.f32 %v1231, %v1239
    %v1248 = vsub.f32 %v1232, %v1240
    %v1249 = vsub.f32 %v1233, %v1241
    %v1250 = vsub.f32 %v1234, %v1242
    %v1251 = vsub.f32 %v1235, %v1243
    %v1252 = vsub.f32 %v1236, %v1244
    %v1253 = vsub.f32 %v1237, %v1245
    %v1254 = vsub.f32 %v1238, %v1246
    %v1255 = vmax.f32 %v1247, 0.0
    %v1256 = vmax.f32 %v1248, 0.0
    %v1257 = vmax.f32 %v1249, 0.0
    %v1258 = vmax.f32 %v1250, 0.0
    %v1259 = vmax.f32 %v1251, 0.0
    %v1260 = vmax.f32 %v1252, 0.0
    %v1261 = vmax.f32 %v1253, 0.0
    %v1262 = vmax.f32 %v1254, 0.0
    %v1263 = vadd.f32 %v1255, 1e-05
    %v1264 = vadd.f32 %v1256, 1e-05
    %v1265 = vadd.f32 %v1257, 1e-05
    %v1266 = vadd.f32 %v1258, 1e-05
    %v1267 = vadd.f32 %v1259, 1e-05
    %v1268 = vadd.f32 %v1260, 1e-05
    %v1269 = vadd.f32 %v1261, 1e-05
    %v1270 = vadd.f32 %v1262, 1e-05
    %v1271 = vrsqrt.pop %v1263
    %v1272 = vmul.f32 %v1271, %v1263
    %v1273 = vmul.f32 %v1272, %v1271
    %v1274 = vmul.f32 0.5, %v1273
    %v1275 = vsub.f32 1.5, %v1274
    %v1276 = vmul.f32 %v1271, %v1275
    %vm1277 = vweird.f32 %v1263
    %vm1278 = vweird.f32 %v1271
    %vm1279 = vmor %vm1277, %vm1278
    %v1280 = vsel %vm1279, %v1271, %v1276
    %v1281 = vrsqrt.pop %v1264
    %v1282 = vmul.f32 %v1281, %v1264
    %v1283 = vmul.f32 %v1282, %v1281
    %v1284 = vmul.f32 0.5, %v1283
    %v1285 = vsub.f32 1.5, %v1284
    %v1286 = vmul.f32 %v1281, %v1285
    %vm1287 = vweird.f32 %v1264
    %vm1288 = vweird.f32 %v1281
    %vm1289 = vmor %vm1287, %vm1288
    %v1290 = vsel %vm1289, %v1281, %v1286
    %v1291 = vrsqrt.pop %v1265
    %v1292 = vmul.f32 %v1291, %v1265
    %v1293 = vmul.f32 %v1292, %v1291
    %v1294 = vmul.f32 0.5, %v1293
    %v1295 = vsub.f32 1.5, %v1294
    %v1296 = vmul.f32 %v1291, %v1295
    %vm1297 = vweird.f32 %v1265
    %vm1298 = vweird.f32 %v1291
    %vm1299 = vmor %vm1297, %vm1298
    %v1300 = vsel %vm1299, %v1291, %v1296
    %v1301 = vrsqrt.pop %v1266
    %v1302 = vmul.f32 %v1301, %v1266
    %v1303 = vmul.f32 %v1302, %v1301
    %v1304 = vmul.f32 0.5, %v1303
    %v1305 = vsub.f32 1.5, %v1304
    %v1306 = vmul.f32 %v1301, %v1305
    %vm1307 = vweird.f32 %v1266
    %vm1308 = vweird.f32 %v1301
    %vm1309 = vmor %vm1307, %vm1308
    %v1310 = vsel %vm1309, %v1301, %v1306
    %v1311 = vrsqrt.pop %v1267
    %v1312 = vmul.f32 %v1311, %v1267
    %v1313 = vmul.f32 %v1312, %v1311
    %v1314 = vmul.f32 0.5, %v1313
    %v1315 = vsub.f32 1.5, %v1314
    %v1316 = vmul.f32 %v1311, %v1315
    %vm1317 = vweird.f32 %v1267
    %vm1318 = vweird.f32 %v1311
    %vm1319 = vmor %vm1317, %vm1318
    %v1320 = vsel %vm1319, %v1311, %v1316
    %v1321 = vrsqrt.pop %v1268
    %v1322 = vmul.f32 %v1321, %v1268
    %v1323 = vmul.f32 %v1322, %v1321
    %v1324 = vmul.f32 0.5, %v1323
    %v1325 = vsub.f32 1.5, %v1324
    %v1326 = vmul.f32 %v1321, %v1325
    %vm1327 = vweird.f32 %v1268
    %vm1328 = vweird.f32 %v1321
    %vm1329 = vmor %vm1327, %vm1328
    %v1330 = vsel %vm1329, %v1321, %v1326
    %v1331 = vrsqrt.pop %v1269
    %v1332 = vmul.f32 %v1331, %v1269
    %v1333 = vmul.f32 %v1332, %v1331
    %v1334 = vmul.f32 0.5, %v1333
    %v1335 = vsub.f32 1.5, %v1334
    %v1336 = vmul.f32 %v1331, %v1335
    %vm1337 = vweird.f32 %v1269
    %vm1338 = vweird.f32 %v1331
    %vm1339 = vmor %vm1337, %vm1338
    %v1340 = vsel %vm1339, %v1331, %v1336
    %v1341 = vrsqrt.pop %v1270
    %v1342 = vmul.f32 %v1341, %v1270
    %v1343 = vmul.f32 %v1342, %v1341
    %v1344 = vmul.f32 0.5, %v1343
    %v1345 = vsub.f32 1.5, %v1344
    %v1346 = vmul.f32 %v1341, %v1345
    %vm1347 = vweird.f32 %v1270
    %vm1348 = vweird.f32 %v1341
    %vm1349 = vmor %vm1347, %vm1348
    %v1350 = vsel %vm1349, %v1341, %v1346
    %v1351 = vmul.f32 %v1167, %v1280
    %v1352 = vmul.f32 %v1168, %v1290
    %v1353 = vmul.f32 %v1169, %v1300
    %v1354 = vmul.f32 %v1170, %v1310
    %v1355 = vmul.f32 %v1171, %v1320
    %v1356 = vmul.f32 %v1172, %v1330
    %v1357 = vmul.f32 %v1173, %v1340
    %v1358 = vmul.f32 %v1174, %v1350
    %v1359 = vmul.f32 %v927, %v1280
    %v1360 = vmul.f32 %v953, %v1290
    %v1361 = vmul.f32 %v979, %v1300
    %v1362 = vmul.f32 %v1005, %v1310
    %v1363 = vmul.f32 %v1031, %v1320
    %v1364 = vmul.f32 %v1057, %v1330
    %v1365 = vmul.f32 %v1083, %v1340
    %v1366 = vmul.f32 %v1109, %v1350
    %v1367 = vsub.f32 %v1359, %v1351
    %v1368 = vsub.f32 %v1360, %v1352
    %v1369 = vsub.f32 %v1361, %v1353
    %v1370 = vsub.f32 %v1362, %v1354
    %v1371 = vsub.f32 %v1363, %v1355
    %v1372 = vsub.f32 %v1364, %v1356
    %v1373 = vsub.f32 %v1365, %v1357
    %v1374 = vsub.f32 %v1366, %v1358
    %vm1375 = vcmp.ge.f32.partialorder %v1367, 0.0
    %vm1376 = vcmp.ge.f32.partialorder %v1368, 0.0
    %vm1377 = vcmp.ge.f32.partialorder %v1369, 0.0
    %vm1378 = vcmp.ge.f32.partialorder %v1370, 0.0
    %vm1379 = vcmp.ge.f32.partialorder %v1371, 0.0
    %vm1380 = vcmp.ge.f32.partialorder %v1372, 0.0
    %vm1381 = vcmp.ge.f32.partialorder %v1373, 0.0
    %vm1382 = vcmp.ge.f32.partialorder %v1374, 0.0
    %v1383 = vmul.f32 %v1367, 0.01
    %v1384 = vmul.f32 %v1368, 0.01
    %v1385 = vmul.f32 %v1369, 0.01
    %v1386 = vmul.f32 %v1370, 0.01
    %v1387 = vmul.f32 %v1371, 0.01
    %v1388 = vmul.f32 %v1372, 0.01
    %v1389 = vmul.f32 %v1373, 0.01
    %v1390 = vmul.f32 %v1374, 0.01
    %v1391 = vsel %vm1375, %v1367, %v1383
    %v1392 = vsel %vm1376, %v1368, %v1384
    %v1393 = vsel %vm1377, %v1369, %v1385
    %v1394 = vsel %vm1378, %v1370, %v1386
    %v1395 = vsel %vm1379, %v1371, %v1387
    %v1396 = vsel %vm1380, %v1372, %v1388
    %v1397 = vsel %vm1381, %v1373, %v1389
    %v1398 = vsel %vm1382, %v1374, %v1390
    %v1399 = vpack.c.bf16 %v1391, %v1391
    %v1400 = vpack.c.bf16 %v1392, %v1392
    %v1401 = vpack.c.bf16 %v1393, %v1393
    %v1402 = vpack.c.bf16 %v1394, %v1394
    %v1403 = vpack.c.bf16 %v1395, %v1395
    %v1404 = vpack.c.bf16 %v1396, %v1396
    %v1405 = vpack.c.bf16 %v1397, %v1397
    %v1406 = vpack.c.bf16 %v1398, %v1398
    %v1407 = vld [vmem:[#allocation7] sm:$0xff]
    %v1408 = vld [vmem:[#allocation7 + $0x8] sm:$0xff]
    %v1409 = vld [vmem:[#allocation7 + $0x10] sm:$0xf]
    %v1410 = vld [vmem:[#allocation7 + $0x14] sm:$0xff]
    %v1411 = vld [vmem:[#allocation7 + $0x1c] sm:$0xff]
    %v1412 = vld [vmem:[#allocation7 + $0x24] sm:$0xf]
    %v1413 = vld [vmem:[#allocation7 + $0x28] sm:$0xff]
    %v1414 = vld [vmem:[#allocation7 + $0x30] sm:$0xff]
    %v1415 = vld [vmem:[#allocation7 + $0x38] sm:$0xf]
    %v1416 = vld [vmem:[#allocation7 + $0x3c] sm:$0xff]
    %v1417 = vld [vmem:[#allocation7 + $0x44] sm:$0xff]
    %v1418 = vld [vmem:[#allocation7 + $0x4c] sm:$0xf]
    %v1419 = vld [vmem:[#allocation7 + $0x50] sm:$0xff]
    %v1420 = vld [vmem:[#allocation7 + $0x58] sm:$0xff]
    %v1421 = vld [vmem:[#allocation7 + $0x60] sm:$0xf]
    %v1422 = vld [vmem:[#allocation7 + $0x64] sm:$0xff]
    %v1423 = vld [vmem:[#allocation7 + $0x6c] sm:$0xff]
    %v1424 = vld [vmem:[#allocation7 + $0x74] sm:$0xf]
    %v1425 = vld [vmem:[#allocation7 + $0x78] sm:$0xff]
    %v1426 = vld [vmem:[#allocation7 + $0x80] sm:$0xff]
    %v1427 = vld [vmem:[#allocation7 + $0x88] sm:$0xf]
    %v1428 = vld [vmem:[#allocation7 + $0x8c] sm:$0xff]
    %v1429 = vld [vmem:[#allocation7 + $0x94] sm:$0xff]
    %v1430 = vld [vmem:[#allocation7 + $0x9c] sm:$0xf]
    %v1431 = vld [vmem:[#allocation7 + $0xa0] sm:$0xff]
    %v1432 = vld [vmem:[#allocation7 + $0xa8] sm:$0xff]
    %v1433 = vld [vmem:[#allocation7 + $0xb0] sm:$0xf]
    %v1434 = vld [vmem:[#allocation7 + $0xb4] sm:$0xff]
    %v1435 = vld [vmem:[#allocation7 + $0xbc] sm:$0xff]
    %v1436 = vld [vmem:[#allocation7 + $0xc4] sm:$0xf]
    %v1437 = vld [vmem:[#allocation7 + $0xc8] sm:$0xff]
    %v1438 = vld [vmem:[#allocation7 + $0xd0] sm:$0xff]
    %v1439 = vld [vmem:[#allocation7 + $0xd8] sm:$0xf]
    %v1440 = vld [vmem:[#allocation7 + $0xdc] sm:$0xff]
    %v1441 = vld [vmem:[#allocation7 + $0xe4] sm:$0xff]
    %v1442 = vld [vmem:[#allocation7 + $0xec] sm:$0xf]
    %v1443 = vld [vmem:[#allocation7 + $0xf0] sm:$0xff]
    %v1444 = vld [vmem:[#allocation7 + $0xf8] sm:$0xff]
    %v1445 = vld [vmem:[#allocation7 + $0x100] sm:$0xf]
    %v1446 = vld [vmem:[#allocation7 + $0x104] sm:$0xff]
    %v1447 = vld [vmem:[#allocation7 + $0x10c] sm:$0xff]
    %v1448 = vld [vmem:[#allocation7 + $0x114] sm:$0xf]
    %v1449 = vld [vmem:[#allocation7 + $0x118] sm:$0xff]
    %v1450 = vld [vmem:[#allocation7 + $0x120] sm:$0xff]
    %v1451 = vld [vmem:[#allocation7 + $0x128] sm:$0xf]
    %v1452 = vld [vmem:[#allocation7 + $0x12c] sm:$0xff]
    %v1453 = vld [vmem:[#allocation7 + $0x134] sm:$0xff]
    %v1454 = vld [vmem:[#allocation7 + $0x13c] sm:$0xf]
    %v1455 = vld [vmem:[#allocation7 + $0x140] sm:$0xff]
    %v1456 = vld [vmem:[#allocation7 + $0x148] sm:$0xff]
    %v1457 = vld [vmem:[#allocation7 + $0x150] sm:$0xf]
    %v1458 = vld [vmem:[#allocation7 + $0x154] sm:$0xff]
    %v1459 = vld [vmem:[#allocation7 + $0x15c] sm:$0xff]
    %v1460 = vld [vmem:[#allocation7 + $0x164] sm:$0xf]
    %v1461 = vld [vmem:[#allocation7 + $0x168] sm:$0xff]
    %v1462 = vld [vmem:[#allocation7 + $0x170] sm:$0xff]
    %v1463 = vld [vmem:[#allocation7 + $0x178] sm:$0xf]
    %v1464 = vld [vmem:[#allocation7 + $0x17c] sm:$0xff]
    %v1465 = vld [vmem:[#allocation7 + $0x184] sm:$0xff]
    %v1466 = vld [vmem:[#allocation7 + $0x18c] sm:$0xf]
    %v1467 = vld [vmem:[#allocation7 + $0x190] sm:$0xff]
    %v1468 = vld [vmem:[#allocation7 + $0x198] sm:$0xff]
    %v1469 = vld [vmem:[#allocation7 + $0x1a0] sm:$0xf]
    %v1470 = vld [vmem:[#allocation7 + $0x1a4] sm:$0xff]
    %v1471 = vld [vmem:[#allocation7 + $0x1ac] sm:$0xff]
    %v1472 = vld [vmem:[#allocation7 + $0x1b4] sm:$0xf]
    %v1473 = vld [vmem:[#allocation7 + $0x1b8] sm:$0xff]
    %v1474 = vld [vmem:[#allocation7 + $0x1c0] sm:$0xff]
    %v1475 = vld [vmem:[#allocation7 + $0x1c8] sm:$0xf]
    %v1476 = vld [vmem:[#allocation7 + $0x1cc] sm:$0xff]
    %v1477 = vld [vmem:[#allocation7 + $0x1d4] sm:$0xff]
    %v1478 = vld [vmem:[#allocation7 + $0x1dc] sm:$0xf]
    %v1479 = vld [vmem:[#allocation7 + $0x1e0] sm:$0xff]
    %v1480 = vld [vmem:[#allocation7 + $0x1e8] sm:$0xff]
    %v1481 = vld [vmem:[#allocation7 + $0x1f0] sm:$0xf]
    %v1482 = vld [vmem:[#allocation7 + $0x1f4] sm:$0xff]
    %v1483 = vld [vmem:[#allocation7 + $0x1fc] sm:$0xff]
    %v1484 = vld [vmem:[#allocation7 + $0x204] sm:$0xf]
    %v1485 = vld [vmem:[#allocation7 + $0x208] sm:$0xff]
    %v1486 = vld [vmem:[#allocation7 + $0x210] sm:$0xff]
    %v1487 = vld [vmem:[#allocation7 + $0x218] sm:$0xf]
    %v1488 = vld [vmem:[#allocation7 + $0x21c] sm:$0xff]
    %v1489 = vld [vmem:[#allocation7 + $0x224] sm:$0xff]
    %v1490 = vld [vmem:[#allocation7 + $0x22c] sm:$0xf]
    %v1491 = vld [vmem:[#allocation7 + $0x230] sm:$0xff]
    %v1492 = vld [vmem:[#allocation7 + $0x238] sm:$0xff]
    %v1493 = vld [vmem:[#allocation7 + $0x240] sm:$0xf]
    %v1494 = vld [vmem:[#allocation7 + $0x244] sm:$0xff]
    %v1495 = vld [vmem:[#allocation7 + $0x24c] sm:$0xff]
    %v1496 = vld [vmem:[#allocation7 + $0x254] sm:$0xf]
    %v1497 = vld [vmem:[#allocation7 + $0x258] sm:$0xff]
    %v1498 = vld [vmem:[#allocation7 + $0x260] sm:$0xff]
    %v1499 = vld [vmem:[#allocation7 + $0x268] sm:$0xf]
    %v1500 = vld [vmem:[#allocation7 + $0x26c] sm:$0xff]
    %v1501 = vld [vmem:[#allocation7 + $0x274] sm:$0xff]
    %v1502 = vld [vmem:[#allocation7 + $0x27c] sm:$0xf]
    %v1503 = vld [vmem:[#allocation7 + $0x280] sm:$0xff]
    %v1504 = vld [vmem:[#allocation7 + $0x288] sm:$0xff]
    %v1505 = vld [vmem:[#allocation7 + $0x290] sm:$0xf]
    %v1506 = vld [vmem:[#allocation7 + $0x294] sm:$0xff]
    %v1507 = vld [vmem:[#allocation7 + $0x29c] sm:$0xff]
    %v1508 = vld [vmem:[#allocation7 + $0x2a4] sm:$0xf]
    %v1509 = vld [vmem:[#allocation7 + $0x2a8] sm:$0xff]
    %v1510 = vld [vmem:[#allocation7 + $0x2b0] sm:$0xff]
    %v1511 = vld [vmem:[#allocation7 + $0x2b8] sm:$0xf]
    %v1512 = vld [vmem:[#allocation7 + $0x2bc] sm:$0xff]
    %v1513 = vld [vmem:[#allocation7 + $0x2c4] sm:$0xff]
    %v1514 = vld [vmem:[#allocation7 + $0x2cc] sm:$0xf]
    %v1515 = vld [vmem:[#allocation7 + $0x2d0] sm:$0xff]
    %v1516 = vld [vmem:[#allocation7 + $0x2d8] sm:$0xff]
    %v1517 = vld [vmem:[#allocation7 + $0x2e0] sm:$0xf]
    %v1518 = vld [vmem:[#allocation7 + $0x2e4] sm:$0xff]
    %v1519 = vld [vmem:[#allocation7 + $0x2ec] sm:$0xff]
    %v1520 = vld [vmem:[#allocation7 + $0x2f4] sm:$0xf]
    %v1521 = vld [vmem:[#allocation7 + $0x2f8] sm:$0xff]
    %v1522 = vld [vmem:[#allocation7 + $0x300] sm:$0xff]
    %v1523 = vld [vmem:[#allocation7 + $0x308] sm:$0xf]
    %v1524 = vld [vmem:[#allocation7 + $0x30c] sm:$0xff]
    %v1525 = vld [vmem:[#allocation7 + $0x314] sm:$0xff]
    %v1526 = vld [vmem:[#allocation7 + $0x31c] sm:$0xf]
    %v1527 = vld [vmem:[#allocation7 + $0x320] sm:$0xff]
    %v1528 = vld [vmem:[#allocation7 + $0x328] sm:$0xff]
    %v1529 = vld [vmem:[#allocation7 + $0x330] sm:$0xf]
    %v1530 = vld [vmem:[#allocation7 + $0x334] sm:$0xff]
    %v1531 = vld [vmem:[#allocation7 + $0x33c] sm:$0xff]
    %v1532 = vld [vmem:[#allocation7 + $0x344] sm:$0xf]
    %v1533 = vld [vmem:[#allocation7 + $0x348] sm:$0xff]
    %v1534 = vld [vmem:[#allocation7 + $0x350] sm:$0xff]
    %v1535 = vld [vmem:[#allocation7 + $0x358] sm:$0xf]
    %v1536 = vld [vmem:[#allocation7 + $0x35c] sm:$0xff]
    %v1537 = vld [vmem:[#allocation7 + $0x364] sm:$0xff]
    %v1538 = vld [vmem:[#allocation7 + $0x36c] sm:$0xf]
    %v1539 = vld [vmem:[#allocation7 + $0x370] sm:$0xff]
    %v1540 = vld [vmem:[#allocation7 + $0x378] sm:$0xff]
    %v1541 = vld [vmem:[#allocation7 + $0x380] sm:$0xf]
    %v1542 = vld [vmem:[#allocation7 + $0x384] sm:$0xff]
    %v1543 = vld [vmem:[#allocation7 + $0x38c] sm:$0xff]
    %v1544 = vld [vmem:[#allocation7 + $0x394] sm:$0xf]
    %v1545 = vld [vmem:[#allocation7 + $0x398] sm:$0xff]
    %v1546 = vld [vmem:[#allocation7 + $0x3a0] sm:$0xff]
    %v1547 = vld [vmem:[#allocation7 + $0x3a8] sm:$0xf]
    %v1548 = vld [vmem:[#allocation7 + $0x3ac] sm:$0xff]
    %v1549 = vld [vmem:[#allocation7 + $0x3b4] sm:$0xff]
    %v1550 = vld [vmem:[#allocation7 + $0x3bc] sm:$0xf]
    %v1551 = vld [vmem:[#allocation7 + $0x3c0] sm:$0xff]
    %v1552 = vld [vmem:[#allocation7 + $0x3c8] sm:$0xff]
    %v1553 = vld [vmem:[#allocation7 + $0x3d0] sm:$0xf]
    %v1554 = vld [vmem:[#allocation7 + $0x3d4] sm:$0xff]
    %v1555 = vld [vmem:[#allocation7 + $0x3dc] sm:$0xff]
    %v1556 = vld [vmem:[#allocation7 + $0x3e4] sm:$0xf]
    %v1557 = vld [vmem:[#allocation7 + $0x3e8] sm:$0xff]
    %v1558 = vld [vmem:[#allocation7 + $0x3f0] sm:$0xff]
    %v1559 = vld [vmem:[#allocation7 + $0x3f8] sm:$0xf]
    %v1560 = vld [vmem:[#allocation7 + $0x3fc] sm:$0xff]
    %v1561 = vld [vmem:[#allocation7 + $0x404] sm:$0xff]
    %v1562 = vld [vmem:[#allocation7 + $0x40c] sm:$0xf]
    %v1563 = vld [vmem:[#allocation7 + $0x410] sm:$0xff]
    %v1564 = vld [vmem:[#allocation7 + $0x418] sm:$0xff]
    %v1565 = vld [vmem:[#allocation7 + $0x420] sm:$0xf]
    %v1566 = vld [vmem:[#allocation7 + $0x424] sm:$0xff]
    %v1567 = vld [vmem:[#allocation7 + $0x42c] sm:$0xff]
    %v1568 = vld [vmem:[#allocation7 + $0x434] sm:$0xf]
    %v1569 = vld [vmem:[#allocation7 + $0x438] sm:$0xff]
    %v1570 = vld [vmem:[#allocation7 + $0x440] sm:$0xff]
    %v1571 = vld [vmem:[#allocation7 + $0x448] sm:$0xf]
    %v1572 = vld [vmem:[#allocation7 + $0x44c] sm:$0xff]
    %v1573 = vld [vmem:[#allocation7 + $0x454] sm:$0xff]
    %v1574 = vld [vmem:[#allocation7 + $0x45c] sm:$0xf]
    %v1575 = vld [vmem:[#allocation7 + $0x460] sm:$0xff]
    %v1576 = vld [vmem:[#allocation7 + $0x468] sm:$0xff]
    %v1577 = vld [vmem:[#allocation7 + $0x470] sm:$0xf]
    %v1578 = vld [vmem:[#allocation7 + $0x474] sm:$0xff]
    %v1579 = vld [vmem:[#allocation7 + $0x47c] sm:$0xff]
    %v1580 = vld [vmem:[#allocation7 + $0x484] sm:$0xf]
    %v1581 = vld [vmem:[#allocation7 + $0x488] sm:$0xff]
    %v1582 = vld [vmem:[#allocation7 + $0x490] sm:$0xff]
    %v1583 = vld [vmem:[#allocation7 + $0x498] sm:$0xf]
    %v1584 = vld [vmem:[#allocation7 + $0x49c] sm:$0xff]
    %v1585 = vld [vmem:[#allocation7 + $0x4a4] sm:$0xff]
    %v1586 = vld [vmem:[#allocation7 + $0x4ac] sm:$0xf]
    %v1587 = vld [vmem:[#allocation7 + $0x4b0] sm:$0xff]
    %v1588 = vld [vmem:[#allocation7 + $0x4b8] sm:$0xff]
    %v1589 = vld [vmem:[#allocation7 + $0x4c0] sm:$0xf]
    %v1590 = vld [vmem:[#allocation7 + $0x4c4] sm:$0xff]
    %v1591 = vld [vmem:[#allocation7 + $0x4cc] sm:$0xff]
    %v1592 = vld [vmem:[#allocation7 + $0x4d4] sm:$0xf]
    %v1593 = vld [vmem:[#allocation7 + $0x4d8] sm:$0xff]
    %v1594 = vld [vmem:[#allocation7 + $0x4e0] sm:$0xff]
    %v1595 = vld [vmem:[#allocation7 + $0x4e8] sm:$0xf]
    %v1596 = vld [vmem:[#allocation7 + $0x4ec] sm:$0xff]
    %v1597 = vld [vmem:[#allocation7 + $0x4f4] sm:$0xff]
    %v1598 = vld [vmem:[#allocation7 + $0x4fc] sm:$0xf]
    %v1599 = vld [vmem:[#allocation7 + $0x500] sm:$0xff]
    %v1600 = vld [vmem:[#allocation7 + $0x508] sm:$0xff]
    %v1601 = vld [vmem:[#allocation7 + $0x510] sm:$0xf]
    %v1602 = vld [vmem:[#allocation7 + $0x514] sm:$0xff]
    %v1603 = vld [vmem:[#allocation7 + $0x51c] sm:$0xff]
    %v1604 = vld [vmem:[#allocation7 + $0x524] sm:$0xf]
    %v1605 = vld [vmem:[#allocation7 + $0x528] sm:$0xff]
    %v1606 = vld [vmem:[#allocation7 + $0x530] sm:$0xff]
    %v1607 = vld [vmem:[#allocation7 + $0x538] sm:$0xf]
    %v1608 = vld [vmem:[#allocation7 + $0x53c] sm:$0xff]
    %v1609 = vld [vmem:[#allocation7 + $0x544] sm:$0xff]
    %v1610 = vld [vmem:[#allocation7 + $0x54c] sm:$0xf]
    %v1611 = vld [vmem:[#allocation7 + $0x550] sm:$0xff]
    %v1612 = vld [vmem:[#allocation7 + $0x558] sm:$0xff]
    %v1613 = vld [vmem:[#allocation7 + $0x560] sm:$0xf]
    %v1614 = vld [vmem:[#allocation7 + $0x564] sm:$0xff]
    %v1615 = vld [vmem:[#allocation7 + $0x56c] sm:$0xff]
    %v1616 = vld [vmem:[#allocation7 + $0x574] sm:$0xf]
    %v1617 = vld [vmem:[#allocation7 + $0x578] sm:$0xff]
    %v1618 = vld [vmem:[#allocation7 + $0x580] sm:$0xff]
    %v1619 = vld [vmem:[#allocation7 + $0x588] sm:$0xf]
    %v1620 = vld [vmem:[#allocation7 + $0x58c] sm:$0xff]
    %v1621 = vld [vmem:[#allocation7 + $0x594] sm:$0xff]
    %v1622 = vld [vmem:[#allocation7 + $0x59c] sm:$0xf]
    %v1623 = vld [vmem:[#allocation7 + $0x5a0] sm:$0xff]
    %v1624 = vld [vmem:[#allocation7 + $0x5a8] sm:$0xff]
    %v1625 = vld [vmem:[#allocation7 + $0x5b0] sm:$0xf]
    %v1626 = vld [vmem:[#allocation7 + $0x5b4] sm:$0xff]
    %v1627 = vld [vmem:[#allocation7 + $0x5bc] sm:$0xff]
    %v1628 = vld [vmem:[#allocation7 + $0x5c4] sm:$0xf]
    %v1629 = vld [vmem:[#allocation7 + $0x5c8] sm:$0xff]
    %v1630 = vld [vmem:[#allocation7 + $0x5d0] sm:$0xff]
    %v1631 = vld [vmem:[#allocation7 + $0x5d8] sm:$0xf]
    %v1632 = vld [vmem:[#allocation7 + $0x5dc] sm:$0xff]
    %v1633 = vld [vmem:[#allocation7 + $0x5e4] sm:$0xff]
    %v1634 = vld [vmem:[#allocation7 + $0x5ec] sm:$0xf]
    %v1635 = vld [vmem:[#allocation7 + $0x5f0] sm:$0xff]
    %v1636 = vld [vmem:[#allocation7 + $0x5f8] sm:$0xff]
    %v1637 = vld [vmem:[#allocation7 + $0x600] sm:$0xf]
    %v1638 = vld [vmem:[#allocation7 + $0x604] sm:$0xff]
    %v1639 = vld [vmem:[#allocation7 + $0x60c] sm:$0xff]
    %v1640 = vld [vmem:[#allocation7 + $0x614] sm:$0xf]
    %v1641 = vld [vmem:[#allocation7 + $0x618] sm:$0xff]
    %v1642 = vld [vmem:[#allocation7 + $0x620] sm:$0xff]
    %v1643 = vld [vmem:[#allocation7 + $0x628] sm:$0xf]
    %v1644 = vld [vmem:[#allocation7 + $0x62c] sm:$0xff]
    %v1645 = vld [vmem:[#allocation7 + $0x634] sm:$0xff]
    %v1646 = vld [vmem:[#allocation7 + $0x63c] sm:$0xf]
    %v1647 = vld [vmem:[#allocation7 + $0x640] sm:$0xff]
    %v1648 = vld [vmem:[#allocation7 + $0x648] sm:$0xff]
    %v1649 = vld [vmem:[#allocation7 + $0x650] sm:$0xf]
    %v1650 = vld [vmem:[#allocation7 + $0x654] sm:$0xff]
    %v1651 = vld [vmem:[#allocation7 + $0x65c] sm:$0xff]
    %v1652 = vld [vmem:[#allocation7 + $0x664] sm:$0xf]
    %v1653 = vld [vmem:[#allocation7 + $0x668] sm:$0xff]
    %v1654 = vld [vmem:[#allocation7 + $0x670] sm:$0xff]
    %v1655 = vld [vmem:[#allocation7 + $0x678] sm:$0xf]
    %v1656 = vld [vmem:[#allocation7 + $0x67c] sm:$0xff]
    %v1657 = vld [vmem:[#allocation7 + $0x684] sm:$0xff]
    %v1658 = vld [vmem:[#allocation7 + $0x68c] sm:$0xf]
    %v1659 = vld [vmem:[#allocation7 + $0x690] sm:$0xff]
    %v1660 = vld [vmem:[#allocation7 + $0x698] sm:$0xff]
    %v1661 = vld [vmem:[#allocation7 + $0x6a0] sm:$0xf]
    %v1662 = vld [vmem:[#allocation7 + $0x6a4] sm:$0xff]
    %v1663 = vld [vmem:[#allocation7 + $0x6ac] sm:$0xff]
    %v1664 = vld [vmem:[#allocation7 + $0x6b4] sm:$0xf]
    %v1665 = vld [vmem:[#allocation7 + $0x6b8] sm:$0xff]
    %v1666 = vld [vmem:[#allocation7 + $0x6c0] sm:$0xff]
    %v1667 = vld [vmem:[#allocation7 + $0x6c8] sm:$0xf]
    %v1668 = vld [vmem:[#allocation7 + $0x6cc] sm:$0xff]
    %v1669 = vld [vmem:[#allocation7 + $0x6d4] sm:$0xff]
    %v1670 = vld [vmem:[#allocation7 + $0x6dc] sm:$0xf]
    %v1671 = vld [vmem:[#allocation7 + $0x6e0] sm:$0xff]
    %v1672 = vld [vmem:[#allocation7 + $0x6e8] sm:$0xff]
    %v1673 = vld [vmem:[#allocation7 + $0x6f0] sm:$0xf]
    %v1674 = vld [vmem:[#allocation7 + $0x6f4] sm:$0xff]
    %v1675 = vld [vmem:[#allocation7 + $0x6fc] sm:$0xff]
    %v1676 = vld [vmem:[#allocation7 + $0x704] sm:$0xf]
    %v1677 = vld [vmem:[#allocation7 + $0x708] sm:$0xff]
    %v1678 = vld [vmem:[#allocation7 + $0x710] sm:$0xff]
    %v1679 = vld [vmem:[#allocation7 + $0x718] sm:$0xf]
    %v1680 = vld [vmem:[#allocation7 + $0x71c] sm:$0xff]
    %v1681 = vld [vmem:[#allocation7 + $0x724] sm:$0xff]
    %v1682 = vld [vmem:[#allocation7 + $0x72c] sm:$0xf]
    %v1683 = vld [vmem:[#allocation7 + $0x730] sm:$0xff]
    %v1684 = vld [vmem:[#allocation7 + $0x738] sm:$0xff]
    %v1685 = vld [vmem:[#allocation7 + $0x740] sm:$0xf]
    %v1686 = vld [vmem:[#allocation7 + $0x744] sm:$0xff]
    %v1687 = vld [vmem:[#allocation7 + $0x74c] sm:$0xff]
    %v1688 = vld [vmem:[#allocation7 + $0x754] sm:$0xf]
    %v1689 = vld [vmem:[#allocation7 + $0x758] sm:$0xff]
    %v1690 = vld [vmem:[#allocation7 + $0x760] sm:$0xff]
    %v1691 = vld [vmem:[#allocation7 + $0x768] sm:$0xf]
    %v1692 = vld [vmem:[#allocation7 + $0x76c] sm:$0xff]
    %v1693 = vld [vmem:[#allocation7 + $0x774] sm:$0xff]
    %v1694 = vld [vmem:[#allocation7 + $0x77c] sm:$0xf]
    %v1695 = vld [vmem:[#allocation7 + $0x780] sm:$0xff]
    %v1696 = vld [vmem:[#allocation7 + $0x788] sm:$0xff]
    %v1697 = vld [vmem:[#allocation7 + $0x790] sm:$0xf]
    %v1698 = vld [vmem:[#allocation7 + $0x794] sm:$0xff]
    %v1699 = vld [vmem:[#allocation7 + $0x79c] sm:$0xff]
    %v1700 = vld [vmem:[#allocation7 + $0x7a4] sm:$0xf]
    %v1701 = vld [vmem:[#allocation7 + $0x7a8] sm:$0xff]
    %v1702 = vld [vmem:[#allocation7 + $0x7b0] sm:$0xff]
    %v1703 = vld [vmem:[#allocation7 + $0x7b8] sm:$0xf]
    %v1704 = vld [vmem:[#allocation7 + $0x7bc] sm:$0xff]
    %v1705 = vld [vmem:[#allocation7 + $0x7c4] sm:$0xff]
    %v1706 = vld [vmem:[#allocation7 + $0x7cc] sm:$0xf]
    %v1707 = vld [vmem:[#allocation7 + $0x7d0] sm:$0xff]
    %v1708 = vld [vmem:[#allocation7 + $0x7d8] sm:$0xff]
    %v1709 = vld [vmem:[#allocation7 + $0x7e0] sm:$0xf]
    %v1710 = vld [vmem:[#allocation7 + $0x7e4] sm:$0xff]
    %v1711 = vld [vmem:[#allocation7 + $0x7ec] sm:$0xff]
    %v1712 = vld [vmem:[#allocation7 + $0x7f4] sm:$0xf]
    %v1713 = vld [vmem:[#allocation7 + $0x7f8] sm:$0xff]
    %v1714 = vld [vmem:[#allocation7 + $0x800] sm:$0xff]
    %v1715 = vld [vmem:[#allocation7 + $0x808] sm:$0xf]
    %v1716 = vld [vmem:[#allocation7 + $0x80c] sm:$0xff]
    %v1717 = vld [vmem:[#allocation7 + $0x814] sm:$0xff]
    %v1718 = vld [vmem:[#allocation7 + $0x81c] sm:$0xf]
    %v1719 = vld [vmem:[#allocation7 + $0x820] sm:$0xff]
    %v1720 = vld [vmem:[#allocation7 + $0x828] sm:$0xff]
    %v1721 = vld [vmem:[#allocation7 + $0x830] sm:$0xf]
    %v1722 = vld [vmem:[#allocation7 + $0x834] sm:$0xff]
    %v1723 = vld [vmem:[#allocation7 + $0x83c] sm:$0xff]
    %v1724 = vld [vmem:[#allocation7 + $0x844] sm:$0xf]
    %v1725 = vld [vmem:[#allocation7 + $0x848] sm:$0xff]
    %v1726 = vld [vmem:[#allocation7 + $0x850] sm:$0xff]
    %v1727 = vld [vmem:[#allocation7 + $0x858] sm:$0xf]
    %v1728 = vld [vmem:[#allocation7 + $0x85c] sm:$0xff]
    %v1729 = vld [vmem:[#allocation7 + $0x864] sm:$0xff]
    %v1730 = vld [vmem:[#allocation7 + $0x86c] sm:$0xf]
    %v1731 = vld [vmem:[#allocation7 + $0x870] sm:$0xff]
    %v1732 = vld [vmem:[#allocation7 + $0x878] sm:$0xff]
    %v1733 = vld [vmem:[#allocation7 + $0x880] sm:$0xf]
    %v1734 = vld [vmem:[#allocation7 + $0x884] sm:$0xff]
    %v1735 = vld [vmem:[#allocation7 + $0x88c] sm:$0xff]
    %v1736 = vld [vmem:[#allocation7 + $0x894] sm:$0xf]
    %v1737 = vld [vmem:[#allocation7 + $0x898] sm:$0xff]
    %v1738 = vld [vmem:[#allocation7 + $0x8a0] sm:$0xff]
    %v1739 = vld [vmem:[#allocation7 + $0x8a8] sm:$0xf]
    %v1740 = vld [vmem:[#allocation7 + $0x8ac] sm:$0xff]
    %v1741 = vld [vmem:[#allocation7 + $0x8b4] sm:$0xff]
    %v1742 = vld [vmem:[#allocation7 + $0x8bc] sm:$0xf]
    %v1743 = vld [vmem:[#allocation7 + $0x8c0] sm:$0xff]
    %v1744 = vld [vmem:[#allocation7 + $0x8c8] sm:$0xff]
    %v1745 = vld [vmem:[#allocation7 + $0x8d0] sm:$0xf]
    %v1746 = vld [vmem:[#allocation7 + $0x8d4] sm:$0xff]
    %v1747 = vld [vmem:[#allocation7 + $0x8dc] sm:$0xff]
    %v1748 = vld [vmem:[#allocation7 + $0x8e4] sm:$0xf]
    %v1749 = vld [vmem:[#allocation7 + $0x8e8] sm:$0xff]
    %v1750 = vld [vmem:[#allocation7 + $0x8f0] sm:$0xff]
    %v1751 = vld [vmem:[#allocation7 + $0x8f8] sm:$0xf]
    %v1752 = vld [vmem:[#allocation7 + $0x8fc] sm:$0xff]
    %v1753 = vld [vmem:[#allocation7 + $0x904] sm:$0xff]
    %v1754 = vld [vmem:[#allocation7 + $0x90c] sm:$0xf]
    %v1755 = vld [vmem:[#allocation7 + $0x910] sm:$0xff]
    %v1756 = vld [vmem:[#allocation7 + $0x918] sm:$0xff]
    %v1757 = vld [vmem:[#allocation7 + $0x920] sm:$0xf]
    %v1758 = vld [vmem:[#allocation7 + $0x924] sm:$0xff]
    %v1759 = vld [vmem:[#allocation7 + $0x92c] sm:$0xff]
    %v1760 = vld [vmem:[#allocation7 + $0x934] sm:$0xf]
    %v1761 = vld [vmem:[#allocation7 + $0x938] sm:$0xff]
    %v1762 = vld [vmem:[#allocation7 + $0x940] sm:$0xff]
    %v1763 = vld [vmem:[#allocation7 + $0x948] sm:$0xf]
    %v1764 = vld [vmem:[#allocation7 + $0x94c] sm:$0xff]
    %v1765 = vld [vmem:[#allocation7 + $0x954] sm:$0xff]
    %v1766 = vld [vmem:[#allocation7 + $0x95c] sm:$0xf]
    %v1767 = vld [vmem:[#allocation7 + $0x960] sm:$0xff]
    %v1768 = vld [vmem:[#allocation7 + $0x968] sm:$0xff]
    %v1769 = vld [vmem:[#allocation7 + $0x970] sm:$0xf]
    %v1770 = vld [vmem:[#allocation7 + $0x974] sm:$0xff]
    %v1771 = vld [vmem:[#allocation7 + $0x97c] sm:$0xff]
    %v1772 = vld [vmem:[#allocation7 + $0x984] sm:$0xf]
    %v1773 = vld [vmem:[#allocation7 + $0x988] sm:$0xff]
    %v1774 = vld [vmem:[#allocation7 + $0x990] sm:$0xff]
    %v1775 = vld [vmem:[#allocation7 + $0x998] sm:$0xf]
    %v1776 = vld [vmem:[#allocation7 + $0x99c] sm:$0xff]
    %v1777 = vld [vmem:[#allocation7 + $0x9a4] sm:$0xff]
    %v1778 = vld [vmem:[#allocation7 + $0x9ac] sm:$0xf]
    %v1779 = vld [vmem:[#allocation7 + $0x9b0] sm:$0xff]
    %v1780 = vld [vmem:[#allocation7 + $0x9b8] sm:$0xff]
    %v1781 = vld [vmem:[#allocation7 + $0x9c0] sm:$0xf]
    %v1782 = vld [vmem:[#allocation7 + $0x9c4] sm:$0xff]
    %v1783 = vld [vmem:[#allocation7 + $0x9cc] sm:$0xff]
    %v1784 = vld [vmem:[#allocation7 + $0x9d4] sm:$0xf]
    %v1785 = vld [vmem:[#allocation7 + $0x9d8] sm:$0xff]
    %v1786 = vld [vmem:[#allocation7 + $0x9e0] sm:$0xff]
    %v1787 = vld [vmem:[#allocation7 + $0x9e8] sm:$0xf]
    %v1788 = vld [vmem:[#allocation7 + $0x9ec] sm:$0xff]
    %v1789 = vld [vmem:[#allocation7 + $0x9f4] sm:$0xff]
    %v1790 = vld [vmem:[#allocation7 + $0x9fc] sm:$0xf]
    %v2175 = vunpack.c.l.b16 %v1407
    %v2176 = vunpack.c.h.b16 %v1407
    %v2177 = vunpack.c.l.b16 %v1408
    %v2178 = vunpack.c.h.b16 %v1408
    %v2179 = vunpack.c.l.b16 %v1409
    %v2180 = vunpack.c.l.b16 %v1410
    %v2181 = vunpack.c.h.b16 %v1410
    %v2182 = vunpack.c.l.b16 %v1411
    %v2183 = vunpack.c.h.b16 %v1411
    %v2184 = vunpack.c.l.b16 %v1412
    %v2185 = vunpack.c.l.b16 %v1413
    %v2186 = vunpack.c.h.b16 %v1413
    %v2187 = vunpack.c.l.b16 %v1414
    %v2188 = vunpack.c.h.b16 %v1414
    %v2189 = vunpack.c.l.b16 %v1415
    %v2190 = vunpack.c.l.b16 %v1416
    %v2191 = vunpack.c.h.b16 %v1416
    %v2192 = vunpack.c.l.b16 %v1417
    %v2193 = vunpack.c.h.b16 %v1417
    %v2194 = vunpack.c.l.b16 %v1418
    %v2195 = vunpack.c.l.b16 %v1419
    %v2196 = vunpack.c.h.b16 %v1419
    %v2197 = vunpack.c.l.b16 %v1420
    %v2198 = vunpack.c.h.b16 %v1420
    %v2199 = vunpack.c.l.b16 %v1421
    %v2200 = vunpack.c.l.b16 %v1422
    %v2201 = vunpack.c.h.b16 %v1422
    %v2202 = vunpack.c.l.b16 %v1423
    %v2203 = vunpack.c.h.b16 %v1423
    %v2204 = vunpack.c.l.b16 %v1424
    %v2205 = vunpack.c.l.b16 %v1425
    %v2206 = vunpack.c.h.b16 %v1425
    %v2207 = vunpack.c.l.b16 %v1426
    %v2208 = vunpack.c.h.b16 %v1426
    %v2209 = vunpack.c.l.b16 %v1427
    %v2210 = vunpack.c.l.b16 %v1428
    %v2211 = vunpack.c.h.b16 %v1428
    %v2212 = vunpack.c.l.b16 %v1429
    %v2213 = vunpack.c.h.b16 %v1429
    %v2214 = vunpack.c.l.b16 %v1430
    %v2215 = vunpack.c.l.b16 %v1431
    %v2216 = vunpack.c.h.b16 %v1431
    %v2217 = vunpack.c.l.b16 %v1432
    %v2218 = vunpack.c.h.b16 %v1432
    %v2219 = vunpack.c.l.b16 %v1433
    %v2220 = vunpack.c.l.b16 %v1434
    %v2221 = vunpack.c.h.b16 %v1434
    %v2222 = vunpack.c.l.b16 %v1435
    %v2223 = vunpack.c.h.b16 %v1435
    %v2224 = vunpack.c.l.b16 %v1436
    %v2225 = vunpack.c.l.b16 %v1437
    %v2226 = vunpack.c.h.b16 %v1437
    %v2227 = vunpack.c.l.b16 %v1438
    %v2228 = vunpack.c.h.b16 %v1438
    %v2229 = vunpack.c.l.b16 %v1439
    %v2230 = vunpack.c.l.b16 %v1440
    %v2231 = vunpack.c.h.b16 %v1440
    %v2232 = vunpack.c.l.b16 %v1441
    %v2233 = vunpack.c.h.b16 %v1441
    %v2234 = vunpack.c.l.b16 %v1442
    %v2235 = vunpack.c.l.b16 %v1443
    %v2236 = vunpack.c.h.b16 %v1443
    %v2237 = vunpack.c.l.b16 %v1444
    %v2238 = vunpack.c.h.b16 %v1444
    %v2239 = vunpack.c.l.b16 %v1445
    %v2240 = vunpack.c.l.b16 %v1446
    %v2241 = vunpack.c.h.b16 %v1446
    %v2242 = vunpack.c.l.b16 %v1447
    %v2243 = vunpack.c.h.b16 %v1447
    %v2244 = vunpack.c.l.b16 %v1448
    %v2245 = vunpack.c.l.b16 %v1449
    %v2246 = vunpack.c.h.b16 %v1449
    %v2247 = vunpack.c.l.b16 %v1450
    %v2248 = vunpack.c.h.b16 %v1450
    %v2249 = vunpack.c.l.b16 %v1451
    %v2250 = vunpack.c.l.b16 %v1452
    %v2251 = vunpack.c.h.b16 %v1452
    %v2252 = vunpack.c.l.b16 %v1453
    %v2253 = vunpack.c.h.b16 %v1453
    %v2254 = vunpack.c.l.b16 %v1454
    %v2255 = vunpack.c.l.b16 %v1455
    %v2256 = vunpack.c.h.b16 %v1455
    %v2257 = vunpack.c.l.b16 %v1456
    %v2258 = vunpack.c.h.b16 %v1456
    %v2259 = vunpack.c.l.b16 %v1457
    %v2260 = vunpack.c.l.b16 %v1458
    %v2261 = vunpack.c.h.b16 %v1458
    %v2262 = vunpack.c.l.b16 %v1459
    %v2263 = vunpack.c.h.b16 %v1459
    %v2264 = vunpack.c.l.b16 %v1460
    %v2265 = vunpack.c.l.b16 %v1461
    %v2266 = vunpack.c.h.b16 %v1461
    %v2267 = vunpack.c.l.b16 %v1462
    %v2268 = vunpack.c.h.b16 %v1462
    %v2269 = vunpack.c.l.b16 %v1463
    %v2270 = vunpack.c.l.b16 %v1464
    %v2271 = vunpack.c.h.b16 %v1464
    %v2272 = vunpack.c.l.b16 %v1465
    %v2273 = vunpack.c.h.b16 %v1465
    %v2274 = vunpack.c.l.b16 %v1466
    %v2275 = vunpack.c.l.b16 %v1467
    %v2276 = vunpack.c.h.b16 %v1467
    %v2277 = vunpack.c.l.b16 %v1468
    %v2278 = vunpack.c.h.b16 %v1468
    %v2279 = vunpack.c.l.b16 %v1469
    %v2280 = vunpack.c.l.b16 %v1470
    %v2281 = vunpack.c.h.b16 %v1470
    %v2282 = vunpack.c.l.b16 %v1471
    %v2283 = vunpack.c.h.b16 %v1471
    %v2284 = vunpack.c.l.b16 %v1472
    %v2285 = vunpack.c.l.b16 %v1473
    %v2286 = vunpack.c.h.b16 %v1473
    %v2287 = vunpack.c.l.b16 %v1474
    %v2288 = vunpack.c.h.b16 %v1474
    %v2289 = vunpack.c.l.b16 %v1475
    %v2290 = vunpack.c.l.b16 %v1476
    %v2291 = vunpack.c.h.b16 %v1476
    %v2292 = vunpack.c.l.b16 %v1477
    %v2293 = vunpack.c.h.b16 %v1477
    %v2294 = vunpack.c.l.b16 %v1478
    %v2295 = vunpack.c.l.b16 %v1479
    %v2296 = vunpack.c.h.b16 %v1479
    %v2297 = vunpack.c.l.b16 %v1480
    %v2298 = vunpack.c.h.b16 %v1480
    %v2299 = vunpack.c.l.b16 %v1481
    %v2300 = vunpack.c.l.b16 %v1482
    %v2301 = vunpack.c.h.b16 %v1482
    %v2302 = vunpack.c.l.b16 %v1483
    %v2303 = vunpack.c.h.b16 %v1483
    %v2304 = vunpack.c.l.b16 %v1484
    %v2305 = vunpack.c.l.b16 %v1485
    %v2306 = vunpack.c.h.b16 %v1485
    %v2307 = vunpack.c.l.b16 %v1486
    %v2308 = vunpack.c.h.b16 %v1486
    %v2309 = vunpack.c.l.b16 %v1487
    %v2310 = vunpack.c.l.b16 %v1488
    %v2311 = vunpack.c.h.b16 %v1488
    %v2312 = vunpack.c.l.b16 %v1489
    %v2313 = vunpack.c.h.b16 %v1489
    %v2314 = vunpack.c.l.b16 %v1490
    %v2315 = vunpack.c.l.b16 %v1491
    %v2316 = vunpack.c.h.b16 %v1491
    %v2317 = vunpack.c.l.b16 %v1492
    %v2318 = vunpack.c.h.b16 %v1492
    %v2319 = vunpack.c.l.b16 %v1493
    %v2320 = vunpack.c.l.b16 %v1494
    %v2321 = vunpack.c.h.b16 %v1494
    %v2322 = vunpack.c.l.b16 %v1495
    %v2323 = vunpack.c.h.b16 %v1495
    %v2324 = vunpack.c.l.b16 %v1496
    %v2325 = vunpack.c.l.b16 %v1497
    %v2326 = vunpack.c.h.b16 %v1497
    %v2327 = vunpack.c.l.b16 %v1498
    %v2328 = vunpack.c.h.b16 %v1498
    %v2329 = vunpack.c.l.b16 %v1499
    %v2330 = vunpack.c.l.b16 %v1500
    %v2331 = vunpack.c.h.b16 %v1500
    %v2332 = vunpack.c.l.b16 %v1501
    %v2333 = vunpack.c.h.b16 %v1501
    %v2334 = vunpack.c.l.b16 %v1502
    %v2335 = vunpack.c.l.b16 %v1503
    %v2336 = vunpack.c.h.b16 %v1503
    %v2337 = vunpack.c.l.b16 %v1504
    %v2338 = vunpack.c.h.b16 %v1504
    %v2339 = vunpack.c.l.b16 %v1505
    %v2340 = vunpack.c.l.b16 %v1506
    %v2341 = vunpack.c.h.b16 %v1506
    %v2342 = vunpack.c.l.b16 %v1507
    %v2343 = vunpack.c.h.b16 %v1507
    %v2344 = vunpack.c.l.b16 %v1508
    %v2345 = vunpack.c.l.b16 %v1509
    %v2346 = vunpack.c.h.b16 %v1509
    %v2347 = vunpack.c.l.b16 %v1510
    %v2348 = vunpack.c.h.b16 %v1510
    %v2349 = vunpack.c.l.b16 %v1511
    %v2350 = vunpack.c.l.b16 %v1512
    %v2351 = vunpack.c.h.b16 %v1512
    %v2352 = vunpack.c.l.b16 %v1513
    %v2353 = vunpack.c.h.b16 %v1513
    %v2354 = vunpack.c.l.b16 %v1514
    %v2355 = vunpack.c.l.b16 %v1515
    %v2356 = vunpack.c.h.b16 %v1515
    %v2357 = vunpack.c.l.b16 %v1516
    %v2358 = vunpack.c.h.b16 %v1516
    %v2359 = vunpack.c.l.b16 %v1517
    %v2360 = vunpack.c.l.b16 %v1518
    %v2361 = vunpack.c.h.b16 %v1518
    %v2362 = vunpack.c.l.b16 %v1519
    %v2363 = vunpack.c.h.b16 %v1519
    %v2364 = vunpack.c.l.b16 %v1520
    %v2365 = vunpack.c.l.b16 %v1521
    %v2366 = vunpack.c.h.b16 %v1521
    %v2367 = vunpack.c.l.b16 %v1522
    %v2368 = vunpack.c.h.b16 %v1522
    %v2369 = vunpack.c.l.b16 %v1523
    %v2370 = vunpack.c.l.b16 %v1524
    %v2371 = vunpack.c.h.b16 %v1524
    %v2372 = vunpack.c.l.b16 %v1525
    %v2373 = vunpack.c.h.b16 %v1525
    %v2374 = vunpack.c.l.b16 %v1526
    %v2375 = vunpack.c.l.b16 %v1527
    %v2376 = vunpack.c.h.b16 %v1527
    %v2377 = vunpack.c.l.b16 %v1528
    %v2378 = vunpack.c.h.b16 %v1528
    %v2379 = vunpack.c.l.b16 %v1529
    %v2380 = vunpack.c.l.b16 %v1530
    %v2381 = vunpack.c.h.b16 %v1530
    %v2382 = vunpack.c.l.b16 %v1531
    %v2383 = vunpack.c.h.b16 %v1531
    %v2384 = vunpack.c.l.b16 %v1532
    %v2385 = vunpack.c.l.b16 %v1533
    %v2386 = vunpack.c.h.b16 %v1533
    %v2387 = vunpack.c.l.b16 %v1534
    %v2388 = vunpack.c.h.b16 %v1534
    %v2389 = vunpack.c.l.b16 %v1535
    %v2390 = vunpack.c.l.b16 %v1536
    %v2391 = vunpack.c.h.b16 %v1536
    %v2392 = vunpack.c.l.b16 %v1537
    %v2393 = vunpack.c.h.b16 %v1537
    %v2394 = vunpack.c.l.b16 %v1538
    %v2395 = vunpack.c.l.b16 %v1539
    %v2396 = vunpack.c.h.b16 %v1539
    %v2397 = vunpack.c.l.b16 %v1540
    %v2398 = vunpack.c.h.b16 %v1540
    %v2399 = vunpack.c.l.b16 %v1541
    %v2400 = vunpack.c.l.b16 %v1542
    %v2401 = vunpack.c.h.b16 %v1542
    %v2402 = vunpack.c.l.b16 %v1543
    %v2403 = vunpack.c.h.b16 %v1543
    %v2404 = vunpack.c.l.b16 %v1544
    %v2405 = vunpack.c.l.b16 %v1545
    %v2406 = vunpack.c.h.b16 %v1545
    %v2407 = vunpack.c.l.b16 %v1546
    %v2408 = vunpack.c.h.b16 %v1546
    %v2409 = vunpack.c.l.b16 %v1547
    %v2410 = vunpack.c.l.b16 %v1548
    %v2411 = vunpack.c.h.b16 %v1548
    %v2412 = vunpack.c.l.b16 %v1549
    %v2413 = vunpack.c.h.b16 %v1549
    %v2414 = vunpack.c.l.b16 %v1550
    %v2415 = vunpack.c.l.b16 %v1551
    %v2416 = vunpack.c.h.b16 %v1551
    %v2417 = vunpack.c.l.b16 %v1552
    %v2418 = vunpack.c.h.b16 %v1552
    %v2419 = vunpack.c.l.b16 %v1553
    %v2420 = vunpack.c.l.b16 %v1554
    %v2421 = vunpack.c.h.b16 %v1554
    %v2422 = vunpack.c.l.b16 %v1555
    %v2423 = vunpack.c.h.b16 %v1555
    %v2424 = vunpack.c.l.b16 %v1556
    %v2425 = vunpack.c.l.b16 %v1557
    %v2426 = vunpack.c.h.b16 %v1557
    %v2427 = vunpack.c.l.b16 %v1558
    %v2428 = vunpack.c.h.b16 %v1558
    %v2429 = vunpack.c.l.b16 %v1559
    %v2430 = vunpack.c.l.b16 %v1560
    %v2431 = vunpack.c.h.b16 %v1560
    %v2432 = vunpack.c.l.b16 %v1561
    %v2433 = vunpack.c.h.b16 %v1561
    %v2434 = vunpack.c.l.b16 %v1562
    %v2435 = vunpack.c.l.b16 %v1563
    %v2436 = vunpack.c.h.b16 %v1563
    %v2437 = vunpack.c.l.b16 %v1564
    %v2438 = vunpack.c.h.b16 %v1564
    %v2439 = vunpack.c.l.b16 %v1565
    %v2440 = vunpack.c.l.b16 %v1566
    %v2441 = vunpack.c.h.b16 %v1566
    %v2442 = vunpack.c.l.b16 %v1567
    %v2443 = vunpack.c.h.b16 %v1567
    %v2444 = vunpack.c.l.b16 %v1568
    %v2445 = vunpack.c.l.b16 %v1569
    %v2446 = vunpack.c.h.b16 %v1569
    %v2447 = vunpack.c.l.b16 %v1570
    %v2448 = vunpack.c.h.b16 %v1570
    %v2449 = vunpack.c.l.b16 %v1571
    %v2450 = vunpack.c.l.b16 %v1572
    %v2451 = vunpack.c.h.b16 %v1572
    %v2452 = vunpack.c.l.b16 %v1573
    %v2453 = vunpack.c.h.b16 %v1573
    %v2454 = vunpack.c.l.b16 %v1574
    %v2455 = vunpack.c.l.b16 %v1575
    %v2456 = vunpack.c.h.b16 %v1575
    %v2457 = vunpack.c.l.b16 %v1576
    %v2458 = vunpack.c.h.b16 %v1576
    %v2459 = vunpack.c.l.b16 %v1577
    %v2460 = vunpack.c.l.b16 %v1578
    %v2461 = vunpack.c.h.b16 %v1578
    %v2462 = vunpack.c.l.b16 %v1579
    %v2463 = vunpack.c.h.b16 %v1579
    %v2464 = vunpack.c.l.b16 %v1580
    %v2465 = vunpack.c.l.b16 %v1581
    %v2466 = vunpack.c.h.b16 %v1581
    %v2467 = vunpack.c.l.b16 %v1582
    %v2468 = vunpack.c.h.b16 %v1582
    %v2469 = vunpack.c.l.b16 %v1583
    %v2470 = vunpack.c.l.b16 %v1584
    %v2471 = vunpack.c.h.b16 %v1584
    %v2472 = vunpack.c.l.b16 %v1585
    %v2473 = vunpack.c.h.b16 %v1585
    %v2474 = vunpack.c.l.b16 %v1586
    %v2475 = vunpack.c.l.b16 %v1587
    %v2476 = vunpack.c.h.b16 %v1587
    %v2477 = vunpack.c.l.b16 %v1588
    %v2478 = vunpack.c.h.b16 %v1588
    %v2479 = vunpack.c.l.b16 %v1589
    %v2480 = vunpack.c.l.b16 %v1590
    %v2481 = vunpack.c.h.b16 %v1590
    %v2482 = vunpack.c.l.b16 %v1591
    %v2483 = vunpack.c.h.b16 %v1591
    %v2484 = vunpack.c.l.b16 %v1592
    %v2485 = vunpack.c.l.b16 %v1593
    %v2486 = vunpack.c.h.b16 %v1593
    %v2487 = vunpack.c.l.b16 %v1594
    %v2488 = vunpack.c.h.b16 %v1594
    %v2489 = vunpack.c.l.b16 %v1595
    %v2490 = vunpack.c.l.b16 %v1596
    %v2491 = vunpack.c.h.b16 %v1596
    %v2492 = vunpack.c.l.b16 %v1597
    %v2493 = vunpack.c.h.b16 %v1597
    %v2494 = vunpack.c.l.b16 %v1598
    %v2495 = vunpack.c.l.b16 %v1599
    %v2496 = vunpack.c.h.b16 %v1599
    %v2497 = vunpack.c.l.b16 %v1600
    %v2498 = vunpack.c.h.b16 %v1600
    %v2499 = vunpack.c.l.b16 %v1601
    %v2500 = vunpack.c.l.b16 %v1602
    %v2501 = vunpack.c.h.b16 %v1602
    %v2502 = vunpack.c.l.b16 %v1603
    %v2503 = vunpack.c.h.b16 %v1603
    %v2504 = vunpack.c.l.b16 %v1604
    %v2505 = vunpack.c.l.b16 %v1605
    %v2506 = vunpack.c.h.b16 %v1605
    %v2507 = vunpack.c.l.b16 %v1606
    %v2508 = vunpack.c.h.b16 %v1606
    %v2509 = vunpack.c.l.b16 %v1607
    %v2510 = vunpack.c.l.b16 %v1608
    %v2511 = vunpack.c.h.b16 %v1608
    %v2512 = vunpack.c.l.b16 %v1609
    %v2513 = vunpack.c.h.b16 %v1609
    %v2514 = vunpack.c.l.b16 %v1610
    %v2515 = vunpack.c.l.b16 %v1611
    %v2516 = vunpack.c.h.b16 %v1611
    %v2517 = vunpack.c.l.b16 %v1612
    %v2518 = vunpack.c.h.b16 %v1612
    %v2519 = vunpack.c.l.b16 %v1613
    %v2520 = vunpack.c.l.b16 %v1614
    %v2521 = vunpack.c.h.b16 %v1614
    %v2522 = vunpack.c.l.b16 %v1615
    %v2523 = vunpack.c.h.b16 %v1615
    %v2524 = vunpack.c.l.b16 %v1616
    %v2525 = vunpack.c.l.b16 %v1617
    %v2526 = vunpack.c.h.b16 %v1617
    %v2527 = vunpack.c.l.b16 %v1618
    %v2528 = vunpack.c.h.b16 %v1618
    %v2529 = vunpack.c.l.b16 %v1619
    %v2530 = vunpack.c.l.b16 %v1620
    %v2531 = vunpack.c.h.b16 %v1620
    %v2532 = vunpack.c.l.b16 %v1621
    %v2533 = vunpack.c.h.b16 %v1621
    %v2534 = vunpack.c.l.b16 %v1622
    %v2535 = vunpack.c.l.b16 %v1623
    %v2536 = vunpack.c.h.b16 %v1623
    %v2537 = vunpack.c.l.b16 %v1624
    %v2538 = vunpack.c.h.b16 %v1624
    %v2539 = vunpack.c.l.b16 %v1625
    %v2540 = vunpack.c.l.b16 %v1626
    %v2541 = vunpack.c.h.b16 %v1626
    %v2542 = vunpack.c.l.b16 %v1627
    %v2543 = vunpack.c.h.b16 %v1627
    %v2544 = vunpack.c.l.b16 %v1628
    %v2545 = vunpack.c.l.b16 %v1629
    %v2546 = vunpack.c.h.b16 %v1629
    %v2547 = vunpack.c.l.b16 %v1630
    %v2548 = vunpack.c.h.b16 %v1630
    %v2549 = vunpack.c.l.b16 %v1631
    %v2550 = vunpack.c.l.b16 %v1632
    %v2551 = vunpack.c.h.b16 %v1632
    %v2552 = vunpack.c.l.b16 %v1633
    %v2553 = vunpack.c.h.b16 %v1633
    %v2554 = vunpack.c.l.b16 %v1634
    %v2555 = vunpack.c.l.b16 %v1635
    %v2556 = vunpack.c.h.b16 %v1635
    %v2557 = vunpack.c.l.b16 %v1636
    %v2558 = vunpack.c.h.b16 %v1636
    %v2559 = vunpack.c.l.b16 %v1637
    %v2560 = vunpack.c.l.b16 %v1638
    %v2561 = vunpack.c.h.b16 %v1638
    %v2562 = vunpack.c.l.b16 %v1639
    %v2563 = vunpack.c.h.b16 %v1639
    %v2564 = vunpack.c.l.b16 %v1640
    %v2565 = vunpack.c.l.b16 %v1641
    %v2566 = vunpack.c.h.b16 %v1641
    %v2567 = vunpack.c.l.b16 %v1642
    %v2568 = vunpack.c.h.b16 %v1642
    %v2569 = vunpack.c.l.b16 %v1643
    %v2570 = vunpack.c.l.b16 %v1644
    %v2571 = vunpack.c.h.b16 %v1644
    %v2572 = vunpack.c.l.b16 %v1645
    %v2573 = vunpack.c.h.b16 %v1645
    %v2574 = vunpack.c.l.b16 %v1646
    %v2575 = vunpack.c.l.b16 %v1647
    %v2576 = vunpack.c.h.b16 %v1647
    %v2577 = vunpack.c.l.b16 %v1648
    %v2578 = vunpack.c.h.b16 %v1648
    %v2579 = vunpack.c.l.b16 %v1649
    %v2580 = vunpack.c.l.b16 %v1650
    %v2581 = vunpack.c.h.b16 %v1650
    %v2582 = vunpack.c.l.b16 %v1651
    %v2583 = vunpack.c.h.b16 %v1651
    %v2584 = vunpack.c.l.b16 %v1652
    %v2585 = vunpack.c.l.b16 %v1653
    %v2586 = vunpack.c.h.b16 %v1653
    %v2587 = vunpack.c.l.b16 %v1654
    %v2588 = vunpack.c.h.b16 %v1654
    %v2589 = vunpack.c.l.b16 %v1655
    %v2590 = vunpack.c.l.b16 %v1656
    %v2591 = vunpack.c.h.b16 %v1656
    %v2592 = vunpack.c.l.b16 %v1657
    %v2593 = vunpack.c.h.b16 %v1657
    %v2594 = vunpack.c.l.b16 %v1658
    %v2595 = vunpack.c.l.b16 %v1659
    %v2596 = vunpack.c.h.b16 %v1659
    %v2597 = vunpack.c.l.b16 %v1660
    %v2598 = vunpack.c.h.b16 %v1660
    %v2599 = vunpack.c.l.b16 %v1661
    %v2600 = vunpack.c.l.b16 %v1662
    %v2601 = vunpack.c.h.b16 %v1662
    %v2602 = vunpack.c.l.b16 %v1663
    %v2603 = vunpack.c.h.b16 %v1663
    %v2604 = vunpack.c.l.b16 %v1664
    %v2605 = vunpack.c.l.b16 %v1665
    %v2606 = vunpack.c.h.b16 %v1665
    %v2607 = vunpack.c.l.b16 %v1666
    %v2608 = vunpack.c.h.b16 %v1666
    %v2609 = vunpack.c.l.b16 %v1667
    %v2610 = vunpack.c.l.b16 %v1668
    %v2611 = vunpack.c.h.b16 %v1668
    %v2612 = vunpack.c.l.b16 %v1669
    %v2613 = vunpack.c.h.b16 %v1669
    %v2614 = vunpack.c.l.b16 %v1670
    %v2615 = vunpack.c.l.b16 %v1671
    %v2616 = vunpack.c.h.b16 %v1671
    %v2617 = vunpack.c.l.b16 %v1672
    %v2618 = vunpack.c.h.b16 %v1672
    %v2619 = vunpack.c.l.b16 %v1673
    %v2620 = vunpack.c.l.b16 %v1674
    %v2621 = vunpack.c.h.b16 %v1674
    %v2622 = vunpack.c.l.b16 %v1675
    %v2623 = vunpack.c.h.b16 %v1675
    %v2624 = vunpack.c.l.b16 %v1676
    %v2625 = vunpack.c.l.b16 %v1677
    %v2626 = vunpack.c.h.b16 %v1677
    %v2627 = vunpack.c.l.b16 %v1678
    %v2628 = vunpack.c.h.b16 %v1678
    %v2629 = vunpack.c.l.b16 %v1679
    %v2630 = vunpack.c.l.b16 %v1680
    %v2631 = vunpack.c.h.b16 %v1680
    %v2632 = vunpack.c.l.b16 %v1681
    %v2633 = vunpack.c.h.b16 %v1681
    %v2634 = vunpack.c.l.b16 %v1682
    %v2635 = vunpack.c.l.b16 %v1683
    %v2636 = vunpack.c.h.b16 %v1683
    %v2637 = vunpack.c.l.b16 %v1684
    %v2638 = vunpack.c.h.b16 %v1684
    %v2639 = vunpack.c.l.b16 %v1685
    %v2640 = vunpack.c.l.b16 %v1686
    %v2641 = vunpack.c.h.b16 %v1686
    %v2642 = vunpack.c.l.b16 %v1687
    %v2643 = vunpack.c.h.b16 %v1687
    %v2644 = vunpack.c.l.b16 %v1688
    %v2645 = vunpack.c.l.b16 %v1689
    %v2646 = vunpack.c.h.b16 %v1689
    %v2647 = vunpack.c.l.b16 %v1690
    %v2648 = vunpack.c.h.b16 %v1690
    %v2649 = vunpack.c.l.b16 %v1691
    %v2650 = vunpack.c.l.b16 %v1692
    %v2651 = vunpack.c.h.b16 %v1692
    %v2652 = vunpack.c.l.b16 %v1693
    %v2653 = vunpack.c.h.b16 %v1693
    %v2654 = vunpack.c.l.b16 %v1694
    %v2655 = vunpack.c.l.b16 %v1695
    %v2656 = vunpack.c.h.b16 %v1695
    %v2657 = vunpack.c.l.b16 %v1696
    %v2658 = vunpack.c.h.b16 %v1696
    %v2659 = vunpack.c.l.b16 %v1697
    %v2660 = vunpack.c.l.b16 %v1698
    %v2661 = vunpack.c.h.b16 %v1698
    %v2662 = vunpack.c.l.b16 %v1699
    %v2663 = vunpack.c.h.b16 %v1699
    %v2664 = vunpack.c.l.b16 %v1700
    %v2665 = vunpack.c.l.b16 %v1701
    %v2666 = vunpack.c.h.b16 %v1701
    %v2667 = vunpack.c.l.b16 %v1702
    %v2668 = vunpack.c.h.b16 %v1702
    %v2669 = vunpack.c.l.b16 %v1703
    %v2670 = vunpack.c.l.b16 %v1704
    %v2671 = vunpack.c.h.b16 %v1704
    %v2672 = vunpack.c.l.b16 %v1705
    %v2673 = vunpack.c.h.b16 %v1705
    %v2674 = vunpack.c.l.b16 %v1706
    %v2675 = vunpack.c.l.b16 %v1707
    %v2676 = vunpack.c.h.b16 %v1707
    %v2677 = vunpack.c.l.b16 %v1708
    %v2678 = vunpack.c.h.b16 %v1708
    %v2679 = vunpack.c.l.b16 %v1709
    %v2680 = vunpack.c.l.b16 %v1710
    %v2681 = vunpack.c.h.b16 %v1710
    %v2682 = vunpack.c.l.b16 %v1711
    %v2683 = vunpack.c.h.b16 %v1711
    %v2684 = vunpack.c.l.b16 %v1712
    %v2685 = vunpack.c.l.b16 %v1713
    %v2686 = vunpack.c.h.b16 %v1713
    %v2687 = vunpack.c.l.b16 %v1714
    %v2688 = vunpack.c.h.b16 %v1714
    %v2689 = vunpack.c.l.b16 %v1715
    %v2690 = vunpack.c.l.b16 %v1716
    %v2691 = vunpack.c.h.b16 %v1716
    %v2692 = vunpack.c.l.b16 %v1717
    %v2693 = vunpack.c.h.b16 %v1717
    %v2694 = vunpack.c.l.b16 %v1718
    %v2695 = vunpack.c.l.b16 %v1719
    %v2696 = vunpack.c.h.b16 %v1719
    %v2697 = vunpack.c.l.b16 %v1720
    %v2698 = vunpack.c.h.b16 %v1720
    %v2699 = vunpack.c.l.b16 %v1721
    %v2700 = vunpack.c.l.b16 %v1722
    %v2701 = vunpack.c.h.b16 %v1722
    %v2702 = vunpack.c.l.b16 %v1723
    %v2703 = vunpack.c.h.b16 %v1723
    %v2704 = vunpack.c.l.b16 %v1724
    %v2705 = vunpack.c.l.b16 %v1725
    %v2706 = vunpack.c.h.b16 %v1725
    %v2707 = vunpack.c.l.b16 %v1726
    %v2708 = vunpack.c.h.b16 %v1726
    %v2709 = vunpack.c.l.b16 %v1727
    %v2710 = vunpack.c.l.b16 %v1728
    %v2711 = vunpack.c.h.b16 %v1728
    %v2712 = vunpack.c.l.b16 %v1729
    %v2713 = vunpack.c.h.b16 %v1729
    %v2714 = vunpack.c.l.b16 %v1730
    %v2715 = vunpack.c.l.b16 %v1731
    %v2716 = vunpack.c.h.b16 %v1731
    %v2717 = vunpack.c.l.b16 %v1732
    %v2718 = vunpack.c.h.b16 %v1732
    %v2719 = vunpack.c.l.b16 %v1733
    %v2720 = vunpack.c.l.b16 %v1734
    %v2721 = vunpack.c.h.b16 %v1734
    %v2722 = vunpack.c.l.b16 %v1735
    %v2723 = vunpack.c.h.b16 %v1735
    %v2724 = vunpack.c.l.b16 %v1736
    %v2725 = vunpack.c.l.b16 %v1737
    %v2726 = vunpack.c.h.b16 %v1737
    %v2727 = vunpack.c.l.b16 %v1738
    %v2728 = vunpack.c.h.b16 %v1738
    %v2729 = vunpack.c.l.b16 %v1739
    %v2730 = vunpack.c.l.b16 %v1740
    %v2731 = vunpack.c.h.b16 %v1740
    %v2732 = vunpack.c.l.b16 %v1741
    %v2733 = vunpack.c.h.b16 %v1741
    %v2734 = vunpack.c.l.b16 %v1742
    %v2735 = vunpack.c.l.b16 %v1743
    %v2736 = vunpack.c.h.b16 %v1743
    %v2737 = vunpack.c.l.b16 %v1744
    %v2738 = vunpack.c.h.b16 %v1744
    %v2739 = vunpack.c.l.b16 %v1745
    %v2740 = vunpack.c.l.b16 %v1746
    %v2741 = vunpack.c.h.b16 %v1746
    %v2742 = vunpack.c.l.b16 %v1747
    %v2743 = vunpack.c.h.b16 %v1747
    %v2744 = vunpack.c.l.b16 %v1748
    %v2745 = vunpack.c.l.b16 %v1749
    %v2746 = vunpack.c.h.b16 %v1749
    %v2747 = vunpack.c.l.b16 %v1750
    %v2748 = vunpack.c.h.b16 %v1750
    %v2749 = vunpack.c.l.b16 %v1751
    %v2750 = vunpack.c.l.b16 %v1752
    %v2751 = vunpack.c.h.b16 %v1752
    %v2752 = vunpack.c.l.b16 %v1753
    %v2753 = vunpack.c.h.b16 %v1753
    %v2754 = vunpack.c.l.b16 %v1754
    %v2755 = vunpack.c.l.b16 %v1755
    %v2756 = vunpack.c.h.b16 %v1755
    %v2757 = vunpack.c.l.b16 %v1756
    %v2758 = vunpack.c.h.b16 %v1756
    %v2759 = vunpack.c.l.b16 %v1757
    %v2760 = vunpack.c.l.b16 %v1758
    %v2761 = vunpack.c.h.b16 %v1758
    %v2762 = vunpack.c.l.b16 %v1759
    %v2763 = vunpack.c.h.b16 %v1759
    %v2764 = vunpack.c.l.b16 %v1760
    %v2765 = vunpack.c.l.b16 %v1761
    %v2766 = vunpack.c.h.b16 %v1761
    %v2767 = vunpack.c.l.b16 %v1762
    %v2768 = vunpack.c.h.b16 %v1762
    %v2769 = vunpack.c.l.b16 %v1763
    %v2770 = vunpack.c.l.b16 %v1764
    %v2771 = vunpack.c.h.b16 %v1764
    %v2772 = vunpack.c.l.b16 %v1765
    %v2773 = vunpack.c.h.b16 %v1765
    %v2774 = vunpack.c.l.b16 %v1766
    %v2775 = vunpack.c.l.b16 %v1767
    %v2776 = vunpack.c.h.b16 %v1767
    %v2777 = vunpack.c.l.b16 %v1768
    %v2778 = vunpack.c.h.b16 %v1768
    %v2779 = vunpack.c.l.b16 %v1769
    %v2780 = vunpack.c.l.b16 %v1770
    %v2781 = vunpack.c.h.b16 %v1770
    %v2782 = vunpack.c.l.b16 %v1771
    %v2783 = vunpack.c.h.b16 %v1771
    %v2784 = vunpack.c.l.b16 %v1772
    %v2785 = vunpack.c.l.b16 %v1773
    %v2786 = vunpack.c.h.b16 %v1773
    %v2787 = vunpack.c.l.b16 %v1774
    %v2788 = vunpack.c.h.b16 %v1774
    %v2789 = vunpack.c.l.b16 %v1775
    %v2790 = vunpack.c.l.b16 %v1776
    %v2791 = vunpack.c.h.b16 %v1776
    %v2792 = vunpack.c.l.b16 %v1777
    %v2793 = vunpack.c.h.b16 %v1777
    %v2794 = vunpack.c.l.b16 %v1778
    %v2795 = vunpack.c.l.b16 %v1779
    %v2796 = vunpack.c.h.b16 %v1779
    %v2797 = vunpack.c.l.b16 %v1780
    %v2798 = vunpack.c.h.b16 %v1780
    %v2799 = vunpack.c.l.b16 %v1781
    %v2800 = vunpack.c.l.b16 %v1782
    %v2801 = vunpack.c.h.b16 %v1782
    %v2802 = vunpack.c.l.b16 %v1783
    %v2803 = vunpack.c.h.b16 %v1783
    %v2804 = vunpack.c.l.b16 %v1784
    %v2805 = vunpack.c.l.b16 %v1785
    %v2806 = vunpack.c.h.b16 %v1785
    %v2807 = vunpack.c.l.b16 %v1786
    %v2808 = vunpack.c.h.b16 %v1786
    %v2809 = vunpack.c.l.b16 %v1787
    %v2810 = vunpack.c.l.b16 %v1788
    %v2811 = vunpack.c.h.b16 %v1788
    %v2812 = vunpack.c.l.b16 %v1789
    %v2813 = vunpack.c.h.b16 %v1789
    %v2814 = vunpack.c.l.b16 %v1790
    %v2815 = vpack.c.b16 %v2180, %v2175
    %v2816 = vpack.c.b16 %v2181, %v2176
    %v2817 = vpack.c.b16 %v2182, %v2177
    %v2818 = vpack.c.b16 %v2183, %v2178
    %v2819 = vpack.c.b16 %v2184, %v2179
    %v2820 = vpack.c.b16 %v2190, %v2185
    %v2821 = vpack.c.b16 %v2191, %v2186
    %v2822 = vpack.c.b16 %v2192, %v2187
    %v2823 = vpack.c.b16 %v2193, %v2188
    %v2824 = vpack.c.b16 %v2194, %v2189
    %v2825 = vpack.c.b16 %v2200, %v2195
    %v2826 = vpack.c.b16 %v2201, %v2196
    %v2827 = vpack.c.b16 %v2202, %v2197
    %v2828 = vpack.c.b16 %v2203, %v2198
    %v2829 = vpack.c.b16 %v2204, %v2199
    %v2830 = vpack.c.b16 %v2210, %v2205
    %v2831 = vpack.c.b16 %v2211, %v2206
    %v2832 = vpack.c.b16 %v2212, %v2207
    %v2833 = vpack.c.b16 %v2213, %v2208
    %v2834 = vpack.c.b16 %v2214, %v2209
    %v2835 = vpack.c.b16 %v2220, %v2215
    %v2836 = vpack.c.b16 %v2221, %v2216
    %v2837 = vpack.c.b16 %v2222, %v2217
    %v2838 = vpack.c.b16 %v2223, %v2218
    %v2839 = vpack.c.b16 %v2224, %v2219
    %v2840 = vpack.c.b16 %v2230, %v2225
    %v2841 = vpack.c.b16 %v2231, %v2226
    %v2842 = vpack.c.b16 %v2232, %v2227
    %v2843 = vpack.c.b16 %v2233, %v2228
    %v2844 = vpack.c.b16 %v2234, %v2229
    %v2845 = vpack.c.b16 %v2240, %v2235
    %v2846 = vpack.c.b16 %v2241, %v2236
    %v2847 = vpack.c.b16 %v2242, %v2237
    %v2848 = vpack.c.b16 %v2243, %v2238
    %v2849 = vpack.c.b16 %v2244, %v2239
    %v2850 = vpack.c.b16 %v2250, %v2245
    %v2851 = vpack.c.b16 %v2251, %v2246
    %v2852 = vpack.c.b16 %v2252, %v2247
    %v2853 = vpack.c.b16 %v2253, %v2248
    %v2854 = vpack.c.b16 %v2254, %v2249
    %v2855 = vpack.c.b16 %v2260, %v2255
    %v2856 = vpack.c.b16 %v2261, %v2256
    %v2857 = vpack.c.b16 %v2262, %v2257
    %v2858 = vpack.c.b16 %v2263, %v2258
    %v2859 = vpack.c.b16 %v2264, %v2259
    %v2860 = vpack.c.b16 %v2270, %v2265
    %v2861 = vpack.c.b16 %v2271, %v2266
    %v2862 = vpack.c.b16 %v2272, %v2267
    %v2863 = vpack.c.b16 %v2273, %v2268
    %v2864 = vpack.c.b16 %v2274, %v2269
    %v2865 = vpack.c.b16 %v2280, %v2275
    %v2866 = vpack.c.b16 %v2281, %v2276
    %v2867 = vpack.c.b16 %v2282, %v2277
    %v2868 = vpack.c.b16 %v2283, %v2278
    %v2869 = vpack.c.b16 %v2284, %v2279
    %v2870 = vpack.c.b16 %v2290, %v2285
    %v2871 = vpack.c.b16 %v2291, %v2286
    %v2872 = vpack.c.b16 %v2292, %v2287
    %v2873 = vpack.c.b16 %v2293, %v2288
    %v2874 = vpack.c.b16 %v2294, %v2289
    %v2875 = vpack.c.b16 %v2300, %v2295
    %v2876 = vpack.c.b16 %v2301, %v2296
    %v2877 = vpack.c.b16 %v2302, %v2297
    %v2878 = vpack.c.b16 %v2303, %v2298
    %v2879 = vpack.c.b16 %v2304, %v2299
    %v2880 = vpack.c.b16 %v2310, %v2305
    %v2881 = vpack.c.b16 %v2311, %v2306
    %v2882 = vpack.c.b16 %v2312, %v2307
    %v2883 = vpack.c.b16 %v2313, %v2308
    %v2884 = vpack.c.b16 %v2314, %v2309
    %v2885 = vpack.c.b16 %v2320, %v2315
    %v2886 = vpack.c.b16 %v2321, %v2316
    %v2887 = vpack.c.b16 %v2322, %v2317
    %v2888 = vpack.c.b16 %v2323, %v2318
    %v2889 = vpack.c.b16 %v2324, %v2319
    %v2890 = vpack.c.b16 %v2330, %v2325
    %v2891 = vpack.c.b16 %v2331, %v2326
    %v2892 = vpack.c.b16 %v2332, %v2327
    %v2893 = vpack.c.b16 %v2333, %v2328
    %v2894 = vpack.c.b16 %v2334, %v2329
    %v2895 = vpack.c.b16 %v2340, %v2335
    %v2896 = vpack.c.b16 %v2341, %v2336
    %v2897 = vpack.c.b16 %v2342, %v2337
    %v2898 = vpack.c.b16 %v2343, %v2338
    %v2899 = vpack.c.b16 %v2344, %v2339
    %v2900 = vpack.c.b16 %v2350, %v2345
    %v2901 = vpack.c.b16 %v2351, %v2346
    %v2902 = vpack.c.b16 %v2352, %v2347
    %v2903 = vpack.c.b16 %v2353, %v2348
    %v2904 = vpack.c.b16 %v2354, %v2349
    %v2905 = vpack.c.b16 %v2360, %v2355
    %v2906 = vpack.c.b16 %v2361, %v2356
    %v2907 = vpack.c.b16 %v2362, %v2357
    %v2908 = vpack.c.b16 %v2363, %v2358
    %v2909 = vpack.c.b16 %v2364, %v2359
    %v2910 = vpack.c.b16 %v2370, %v2365
    %v2911 = vpack.c.b16 %v2371, %v2366
    %v2912 = vpack.c.b16 %v2372, %v2367
    %v2913 = vpack.c.b16 %v2373, %v2368
    %v2914 = vpack.c.b16 %v2374, %v2369
    %v2915 = vpack.c.b16 %v2380, %v2375
    %v2916 = vpack.c.b16 %v2381, %v2376
    %v2917 = vpack.c.b16 %v2382, %v2377
    %v2918 = vpack.c.b16 %v2383, %v2378
    %v2919 = vpack.c.b16 %v2384, %v2379
    %v2920 = vpack.c.b16 %v2390, %v2385
    %v2921 = vpack.c.b16 %v2391, %v2386
    %v2922 = vpack.c.b16 %v2392, %v2387
    %v2923 = vpack.c.b16 %v2393, %v2388
    %v2924 = vpack.c.b16 %v2394, %v2389
    %v2925 = vpack.c.b16 %v2400, %v2395
    %v2926 = vpack.c.b16 %v2401, %v2396
    %v2927 = vpack.c.b16 %v2402, %v2397
    %v2928 = vpack.c.b16 %v2403, %v2398
    %v2929 = vpack.c.b16 %v2404, %v2399
    %v2930 = vpack.c.b16 %v2410, %v2405
    %v2931 = vpack.c.b16 %v2411, %v2406
    %v2932 = vpack.c.b16 %v2412, %v2407
    %v2933 = vpack.c.b16 %v2413, %v2408
    %v2934 = vpack.c.b16 %v2414, %v2409
    %v2935 = vpack.c.b16 %v2420, %v2415
    %v2936 = vpack.c.b16 %v2421, %v2416
    %v2937 = vpack.c.b16 %v2422, %v2417
    %v2938 = vpack.c.b16 %v2423, %v2418
    %v2939 = vpack.c.b16 %v2424, %v2419
    %v2940 = vpack.c.b16 %v2430, %v2425
    %v2941 = vpack.c.b16 %v2431, %v2426
    %v2942 = vpack.c.b16 %v2432, %v2427
    %v2943 = vpack.c.b16 %v2433, %v2428
    %v2944 = vpack.c.b16 %v2434, %v2429
    %v2945 = vpack.c.b16 %v2440, %v2435
    %v2946 = vpack.c.b16 %v2441, %v2436
    %v2947 = vpack.c.b16 %v2442, %v2437
    %v2948 = vpack.c.b16 %v2443, %v2438
    %v2949 = vpack.c.b16 %v2444, %v2439
    %v2950 = vpack.c.b16 %v2450, %v2445
    %v2951 = vpack.c.b16 %v2451, %v2446
    %v2952 = vpack.c.b16 %v2452, %v2447
    %v2953 = vpack.c.b16 %v2453, %v2448
    %v2954 = vpack.c.b16 %v2454, %v2449
    %v2955 = vpack.c.b16 %v2460, %v2455
    %v2956 = vpack.c.b16 %v2461, %v2456
    %v2957 = vpack.c.b16 %v2462, %v2457
    %v2958 = vpack.c.b16 %v2463, %v2458
    %v2959 = vpack.c.b16 %v2464, %v2459
    %v2960 = vpack.c.b16 %v2470, %v2465
    %v2961 = vpack.c.b16 %v2471, %v2466
    %v2962 = vpack.c.b16 %v2472, %v2467
    %v2963 = vpack.c.b16 %v2473, %v2468
    %v2964 = vpack.c.b16 %v2474, %v2469
    %v2965 = vpack.c.b16 %v2480, %v2475
    %v2966 = vpack.c.b16 %v2481, %v2476
    %v2967 = vpack.c.b16 %v2482, %v2477
    %v2968 = vpack.c.b16 %v2483, %v2478
    %v2969 = vpack.c.b16 %v2484, %v2479
    %v2970 = vpack.c.b16 %v2490, %v2485
    %v2971 = vpack.c.b16 %v2491, %v2486
    %v2972 = vpack.c.b16 %v2492, %v2487
    %v2973 = vpack.c.b16 %v2493, %v2488
    %v2974 = vpack.c.b16 %v2494, %v2489
    %v2975 = vpack.c.b16 %v2500, %v2495
    %v2976 = vpack.c.b16 %v2501, %v2496
    %v2977 = vpack.c.b16 %v2502, %v2497
    %v2978 = vpack.c.b16 %v2503, %v2498
    %v2979 = vpack.c.b16 %v2504, %v2499
    %v2980 = vpack.c.b16 %v2510, %v2505
    %v2981 = vpack.c.b16 %v2511, %v2506
    %v2982 = vpack.c.b16 %v2512, %v2507
    %v2983 = vpack.c.b16 %v2513, %v2508
    %v2984 = vpack.c.b16 %v2514, %v2509
    %v2985 = vpack.c.b16 %v2520, %v2515
    %v2986 = vpack.c.b16 %v2521, %v2516
    %v2987 = vpack.c.b16 %v2522, %v2517
    %v2988 = vpack.c.b16 %v2523, %v2518
    %v2989 = vpack.c.b16 %v2524, %v2519
    %v2990 = vpack.c.b16 %v2530, %v2525
    %v2991 = vpack.c.b16 %v2531, %v2526
    %v2992 = vpack.c.b16 %v2532, %v2527
    %v2993 = vpack.c.b16 %v2533, %v2528
    %v2994 = vpack.c.b16 %v2534, %v2529
    %v2995 = vpack.c.b16 %v2540, %v2535
    %v2996 = vpack.c.b16 %v2541, %v2536
    %v2997 = vpack.c.b16 %v2542, %v2537
    %v2998 = vpack.c.b16 %v2543, %v2538
    %v2999 = vpack.c.b16 %v2544, %v2539
    %v3000 = vpack.c.b16 %v2550, %v2545
    %v3001 = vpack.c.b16 %v2551, %v2546
    %v3002 = vpack.c.b16 %v2552, %v2547
    %v3003 = vpack.c.b16 %v2553, %v2548
    %v3004 = vpack.c.b16 %v2554, %v2549
    %v3005 = vpack.c.b16 %v2560, %v2555
    %v3006 = vpack.c.b16 %v2561, %v2556
    %v3007 = vpack.c.b16 %v2562, %v2557
    %v3008 = vpack.c.b16 %v2563, %v2558
    %v3009 = vpack.c.b16 %v2564, %v2559
    %v3010 = vpack.c.b16 %v2570, %v2565
    %v3011 = vpack.c.b16 %v2571, %v2566
    %v3012 = vpack.c.b16 %v2572, %v2567
    %v3013 = vpack.c.b16 %v2573, %v2568
    %v3014 = vpack.c.b16 %v2574, %v2569
    %v3015 = vpack.c.b16 %v2580, %v2575
    %v3016 = vpack.c.b16 %v2581, %v2576
    %v3017 = vpack.c.b16 %v2582, %v2577
    %v3018 = vpack.c.b16 %v2583, %v2578
    %v3019 = vpack.c.b16 %v2584, %v2579
    %v3020 = vpack.c.b16 %v2590, %v2585
    %v3021 = vpack.c.b16 %v2591, %v2586
    %v3022 = vpack.c.b16 %v2592, %v2587
    %v3023 = vpack.c.b16 %v2593, %v2588
    %v3024 = vpack.c.b16 %v2594, %v2589
    %v3025 = vpack.c.b16 %v2600, %v2595
    %v3026 = vpack.c.b16 %v2601, %v2596
    %v3027 = vpack.c.b16 %v2602, %v2597
    %v3028 = vpack.c.b16 %v2603, %v2598
    %v3029 = vpack.c.b16 %v2604, %v2599
    %v3030 = vpack.c.b16 %v2610, %v2605
    %v3031 = vpack.c.b16 %v2611, %v2606
    %v3032 = vpack.c.b16 %v2612, %v2607
    %v3033 = vpack.c.b16 %v2613, %v2608
    %v3034 = vpack.c.b16 %v2614, %v2609
    %v3035 = vpack.c.b16 %v2620, %v2615
    %v3036 = vpack.c.b16 %v2621, %v2616
    %v3037 = vpack.c.b16 %v2622, %v2617
    %v3038 = vpack.c.b16 %v2623, %v2618
    %v3039 = vpack.c.b16 %v2624, %v2619
    %v3040 = vpack.c.b16 %v2630, %v2625
    %v3041 = vpack.c.b16 %v2631, %v2626
    %v3042 = vpack.c.b16 %v2632, %v2627
    %v3043 = vpack.c.b16 %v2633, %v2628
    %v3044 = vpack.c.b16 %v2634, %v2629
    %v3045 = vpack.c.b16 %v2640, %v2635
    %v3046 = vpack.c.b16 %v2641, %v2636
    %v3047 = vpack.c.b16 %v2642, %v2637
    %v3048 = vpack.c.b16 %v2643, %v2638
    %v3049 = vpack.c.b16 %v2644, %v2639
    %v3050 = vpack.c.b16 %v2650, %v2645
    %v3051 = vpack.c.b16 %v2651, %v2646
    %v3052 = vpack.c.b16 %v2652, %v2647
    %v3053 = vpack.c.b16 %v2653, %v2648
    %v3054 = vpack.c.b16 %v2654, %v2649
    %v3055 = vpack.c.b16 %v2660, %v2655
    %v3056 = vpack.c.b16 %v2661, %v2656
    %v3057 = vpack.c.b16 %v2662, %v2657
    %v3058 = vpack.c.b16 %v2663, %v2658
    %v3059 = vpack.c.b16 %v2664, %v2659
    %v3060 = vpack.c.b16 %v2670, %v2665
    %v3061 = vpack.c.b16 %v2671, %v2666
    %v3062 = vpack.c.b16 %v2672, %v2667
    %v3063 = vpack.c.b16 %v2673, %v2668
    %v3064 = vpack.c.b16 %v2674, %v2669
    %v3065 = vpack.c.b16 %v2680, %v2675
    %v3066 = vpack.c.b16 %v2681, %v2676
    %v3067 = vpack.c.b16 %v2682, %v2677
    %v3068 = vpack.c.b16 %v2683, %v2678
    %v3069 = vpack.c.b16 %v2684, %v2679
    %v3070 = vpack.c.b16 %v2690, %v2685
    %v3071 = vpack.c.b16 %v2691, %v2686
    %v3072 = vpack.c.b16 %v2692, %v2687
    %v3073 = vpack.c.b16 %v2693, %v2688
    %v3074 = vpack.c.b16 %v2694, %v2689
    %v3075 = vpack.c.b16 %v2700, %v2695
    %v3076 = vpack.c.b16 %v2701, %v2696
    %v3077 = vpack.c.b16 %v2702, %v2697
    %v3078 = vpack.c.b16 %v2703, %v2698
    %v3079 = vpack.c.b16 %v2704, %v2699
    %v3080 = vpack.c.b16 %v2710, %v2705
    %v3081 = vpack.c.b16 %v2711, %v2706
    %v3082 = vpack.c.b16 %v2712, %v2707
    %v3083 = vpack.c.b16 %v2713, %v2708
    %v3084 = vpack.c.b16 %v2714, %v2709
    %v3085 = vpack.c.b16 %v2720, %v2715
    %v3086 = vpack.c.b16 %v2721, %v2716
    %v3087 = vpack.c.b16 %v2722, %v2717
    %v3088 = vpack.c.b16 %v2723, %v2718
    %v3089 = vpack.c.b16 %v2724, %v2719
    %v3090 = vpack.c.b16 %v2730, %v2725
    %v3091 = vpack.c.b16 %v2731, %v2726
    %v3092 = vpack.c.b16 %v2732, %v2727
    %v3093 = vpack.c.b16 %v2733, %v2728
    %v3094 = vpack.c.b16 %v2734, %v2729
    %v3095 = vpack.c.b16 %v2740, %v2735
    %v3096 = vpack.c.b16 %v2741, %v2736
    %v3097 = vpack.c.b16 %v2742, %v2737
    %v3098 = vpack.c.b16 %v2743, %v2738
    %v3099 = vpack.c.b16 %v2744, %v2739
    %v3100 = vpack.c.b16 %v2750, %v2745
    %v3101 = vpack.c.b16 %v2751, %v2746
    %v3102 = vpack.c.b16 %v2752, %v2747
    %v3103 = vpack.c.b16 %v2753, %v2748
    %v3104 = vpack.c.b16 %v2754, %v2749
    %v3105 = vpack.c.b16 %v2760, %v2755
    %v3106 = vpack.c.b16 %v2761, %v2756
    %v3107 = vpack.c.b16 %v2762, %v2757
    %v3108 = vpack.c.b16 %v2763, %v2758
    %v3109 = vpack.c.b16 %v2764, %v2759
    %v3110 = vpack.c.b16 %v2770, %v2765
    %v3111 = vpack.c.b16 %v2771, %v2766
    %v3112 = vpack.c.b16 %v2772, %v2767
    %v3113 = vpack.c.b16 %v2773, %v2768
    %v3114 = vpack.c.b16 %v2774, %v2769
    %v3115 = vpack.c.b16 %v2780, %v2775
    %v3116 = vpack.c.b16 %v2781, %v2776
    %v3117 = vpack.c.b16 %v2782, %v2777
    %v3118 = vpack.c.b16 %v2783, %v2778
    %v3119 = vpack.c.b16 %v2784, %v2779
    %v3120 = vpack.c.b16 %v2790, %v2785
    %v3121 = vpack.c.b16 %v2791, %v2786
    %v3122 = vpack.c.b16 %v2792, %v2787
    %v3123 = vpack.c.b16 %v2793, %v2788
    %v3124 = vpack.c.b16 %v2794, %v2789
    %v3125 = vpack.c.b16 %v2800, %v2795
    %v3126 = vpack.c.b16 %v2801, %v2796
    %v3127 = vpack.c.b16 %v2802, %v2797
    %v3128 = vpack.c.b16 %v2803, %v2798
    %v3129 = vpack.c.b16 %v2804, %v2799
    %v3130 = vpack.c.b16 %v2810, %v2805
    %v3131 = vpack.c.b16 %v2811, %v2806
    %v3132 = vpack.c.b16 %v2812, %v2807
    %v3133 = vpack.c.b16 %v2813, %v2808
    %v3134 = vpack.c.b16 %v2814, %v2809
    %3455 = vmatpush.bf16.msra.mxu0 %v2850
    %3456 = vmatpush.bf16.msra.mxu0 %v2845
    %3457 = vmatpush.bf16.msra.mxu0 %v2840
    %3458 = vmatpush.bf16.msra.mxu0 %v2835
    %3459 = vmatpush.bf16.msra.mxu0 %v2830
    %3460 = vmatpush.bf16.msra.mxu0 %v2825
    %3461 = vmatpush.bf16.msra.mxu0 %v2820
    %3462 = vmatpush.bf16.msra.mxu0 %v2815
    %3463 = vmatmul.bf16.gmra.mxu0 %v1399
    %v3464 = vpop.f32.mrf.mxu0
    %v3465 = vadd.f32 0.0, %v3464
    %v3466 = vpop.f32.mrf.mxu0
    %3467 = vdwg.mxu0
    %3468 = vmatpush.bf16.msra.mxu0 %v2890
    %3469 = vmatpush.bf16.msra.mxu0 %v2885
    %3470 = vmatpush.bf16.msra.mxu0 %v2880
    %3471 = vmatpush.bf16.msra.mxu0 %v2875
    %3472 = vmatpush.bf16.msra.mxu0 %v2870
    %3473 = vmatpush.bf16.msra.mxu0 %v2865
    %3474 = vmatpush.bf16.msra.mxu0 %v2860
    %3475 = vmatpush.bf16.msra.mxu0 %v2855
    %3476 = vmatmul.bf16.gmra.mxu0 %v1400
    %v3477 = vpop.f32.mrf.mxu0
    %v3478 = vadd.f32 %v3465, %v3477
    %v3479 = vpop.f32.mrf.mxu0
    %3480 = vdwg.mxu0
    %3481 = vmatpush.bf16.msra.mxu0 %v2930
    %3482 = vmatpush.bf16.msra.mxu0 %v2925
    %3483 = vmatpush.bf16.msra.mxu0 %v2920
    %3484 = vmatpush.bf16.msra.mxu0 %v2915
    %3485 = vmatpush.bf16.msra.mxu0 %v2910
    %3486 = vmatpush.bf16.msra.mxu0 %v2905
    %3487 = vmatpush.bf16.msra.mxu0 %v2900
    %3488 = vmatpush.bf16.msra.mxu0 %v2895
    %3489 = vmatmul.bf16.gmra.mxu0 %v1401
    %v3490 = vpop.f32.mrf.mxu0
    %v3491 = vadd.f32 %v3478, %v3490
    %v3492 = vpop.f32.mrf.mxu0
    %3493 = vdwg.mxu0
    %3494 = vmatpush.bf16.msra.mxu0 %v2970
    %3495 = vmatpush.bf16.msra.mxu0 %v2965
    %3496 = vmatpush.bf16.msra.mxu0 %v2960
    %3497 = vmatpush.bf16.msra.mxu0 %v2955
    %3498 = vmatpush.bf16.msra.mxu0 %v2950
    %3499 = vmatpush.bf16.msra.mxu0 %v2945
    %3500 = vmatpush.bf16.msra.mxu0 %v2940
    %3501 = vmatpush.bf16.msra.mxu0 %v2935
    %3502 = vmatmul.bf16.gmra.mxu0 %v1402
    %v3503 = vpop.f32.mrf.mxu0
    %v3504 = vadd.f32 %v3491, %v3503
    %v3505 = vpop.f32.mrf.mxu0
    %3506 = vdwg.mxu0
    %3507 = vmatpush.bf16.msra.mxu0 %v3010
    %3508 = vmatpush.bf16.msra.mxu0 %v3005
    %3509 = vmatpush.bf16.msra.mxu0 %v3000
    %3510 = vmatpush.bf16.msra.mxu0 %v2995
    %3511 = vmatpush.bf16.msra.mxu0 %v2990
    %3512 = vmatpush.bf16.msra.mxu0 %v2985
    %3513 = vmatpush.bf16.msra.mxu0 %v2980
    %3514 = vmatpush.bf16.msra.mxu0 %v2975
    %3515 = vmatmul.bf16.gmra.mxu0 %v1403
    %v3516 = vpop.f32.mrf.mxu0
    %v3517 = vadd.f32 %v3504, %v3516
    %v3518 = vpop.f32.mrf.mxu0
    %3519 = vdwg.mxu0
    %3520 = vmatpush.bf16.msra.mxu0 %v3050
    %3521 = vmatpush.bf16.msra.mxu0 %v3045
    %3522 = vmatpush.bf16.msra.mxu0 %v3040
    %3523 = vmatpush.bf16.msra.mxu0 %v3035
    %3524 = vmatpush.bf16.msra.mxu0 %v3030
    %3525 = vmatpush.bf16.msra.mxu0 %v3025
    %3526 = vmatpush.bf16.msra.mxu0 %v3020
    %3527 = vmatpush.bf16.msra.mxu0 %v3015
    %3528 = vmatmul.bf16.gmra.mxu0 %v1404
    %v3529 = vpop.f32.mrf.mxu0
    %v3530 = vadd.f32 %v3517, %v3529
    %v3531 = vpop.f32.mrf.mxu0
    %3532 = vdwg.mxu0
    %3533 = vmatpush.bf16.msra.mxu0 %v3090
    %3534 = vmatpush.bf16.msra.mxu0 %v3085
    %3535 = vmatpush.bf16.msra.mxu0 %v3080
    %3536 = vmatpush.bf16.msra.mxu0 %v3075
    %3537 = vmatpush.bf16.msra.mxu0 %v3070
    %3538 = vmatpush.bf16.msra.mxu0 %v3065
    %3539 = vmatpush.bf16.msra.mxu0 %v3060
    %3540 = vmatpush.bf16.msra.mxu0 %v3055
    %3541 = vmatmul.bf16.gmra.mxu0 %v1405
    %v3542 = vpop.f32.mrf.mxu0
    %v3543 = vadd.f32 %v3530, %v3542
    %v3544 = vpop.f32.mrf.mxu0
    %3545 = vdwg.mxu0
    %3546 = vmatpush.bf16.msra.mxu0 %v3130
    %3547 = vmatpush.bf16.msra.mxu0 %v3125
    %3548 = vmatpush.bf16.msra.mxu0 %v3120
    %3549 = vmatpush.bf16.msra.mxu0 %v3115
    %3550 = vmatpush.bf16.msra.mxu0 %v3110
    %3551 = vmatpush.bf16.msra.mxu0 %v3105
    %3552 = vmatpush.bf16.msra.mxu0 %v3100
    %3553 = vmatpush.bf16.msra.mxu0 %v3095
    %3554 = vmatmul.bf16.gmra.mxu0 %v1406
    %v3555 = vpop.f32.mrf.mxu0
    %v3556 = vadd.f32 %v3543, %v3555
    %v3557 = vpop.f32.mrf.mxu0
    %3558 = vdwg.mxu0
    %3559 = vmatpush.bf16.msra.mxu0 %v2851
    %3560 = vmatpush.bf16.msra.mxu0 %v2846
    %3561 = vmatpush.bf16.msra.mxu0 %v2841
    %3562 = vmatpush.bf16.msra.mxu0 %v2836
    %3563 = vmatpush.bf16.msra.mxu0 %v2831
    %3564 = vmatpush.bf16.msra.mxu0 %v2826
    %3565 = vmatpush.bf16.msra.mxu0 %v2821
    %3566 = vmatpush.bf16.msra.mxu0 %v2816
    %3567 = vmatmul.bf16.gmra.mxu0 %v1399
    %v3568 = vpop.f32.mrf.mxu0
    %v3569 = vadd.f32 0.0, %v3568
    %v3570 = vpop.f32.mrf.mxu0
    %3571 = vdwg.mxu0
    %3572 = vmatpush.bf16.msra.mxu0 %v2891
    %3573 = vmatpush.bf16.msra.mxu0 %v2886
    %3574 = vmatpush.bf16.msra.mxu0 %v2881
    %3575 = vmatpush.bf16.msra.mxu0 %v2876
    %3576 = vmatpush.bf16.msra.mxu0 %v2871
    %3577 = vmatpush.bf16.msra.mxu0 %v2866
    %3578 = vmatpush.bf16.msra.mxu0 %v2861
    %3579 = vmatpush.bf16.msra.mxu0 %v2856
    %3580 = vmatmul.bf16.gmra.mxu0 %v1400
    %v3581 = vpop.f32.mrf.mxu0
    %v3582 = vadd.f32 %v3569, %v3581
    %v3583 = vpop.f32.mrf.mxu0
    %3584 = vdwg.mxu0
    %3585 = vmatpush.bf16.msra.mxu0 %v2931
    %3586 = vmatpush.bf16.msra.mxu0 %v2926
    %3587 = vmatpush.bf16.msra.mxu0 %v2921
    %3588 = vmatpush.bf16.msra.mxu0 %v2916
    %3589 = vmatpush.bf16.msra.mxu0 %v2911
    %3590 = vmatpush.bf16.msra.mxu0 %v2906
    %3591 = vmatpush.bf16.msra.mxu0 %v2901
    %3592 = vmatpush.bf16.msra.mxu0 %v2896
    %3593 = vmatmul.bf16.gmra.mxu0 %v1401
    %v3594 = vpop.f32.mrf.mxu0
    %v3595 = vadd.f32 %v3582, %v3594
    %v3596 = vpop.f32.mrf.mxu0
    %3597 = vdwg.mxu0
    %3598 = vmatpush.bf16.msra.mxu0 %v2971
    %3599 = vmatpush.bf16.msra.mxu0 %v2966
    %3600 = vmatpush.bf16.msra.mxu0 %v2961
    %3601 = vmatpush.bf16.msra.mxu0 %v2956
    %3602 = vmatpush.bf16.msra.mxu0 %v2951
    %3603 = vmatpush.bf16.msra.mxu0 %v2946
    %3604 = vmatpush.bf16.msra.mxu0 %v2941
    %3605 = vmatpush.bf16.msra.mxu0 %v2936
    %3606 = vmatmul.bf16.gmra.mxu0 %v1402
    %v3607 = vpop.f32.mrf.mxu0
    %v3608 = vadd.f32 %v3595, %v3607
    %v3609 = vpop.f32.mrf.mxu0
    %3610 = vdwg.mxu0
    %3611 = vmatpush.bf16.msra.mxu0 %v3011
    %3612 = vmatpush.bf16.msra.mxu0 %v3006
    %3613 = vmatpush.bf16.msra.mxu0 %v3001
    %3614 = vmatpush.bf16.msra.mxu0 %v2996
    %3615 = vmatpush.bf16.msra.mxu0 %v2991
    %3616 = vmatpush.bf16.msra.mxu0 %v2986
    %3617 = vmatpush.bf16.msra.mxu0 %v2981
    %3618 = vmatpush.bf16.msra.mxu0 %v2976
    %3619 = vmatmul.bf16.gmra.mxu0 %v1403
    %v3620 = vpop.f32.mrf.mxu0
    %v3621 = vadd.f32 %v3608, %v3620
    %v3622 = vpop.f32.mrf.mxu0
    %3623 = vdwg.mxu0
    %3624 = vmatpush.bf16.msra.mxu0 %v3051
    %3625 = vmatpush.bf16.msra.mxu0 %v3046
    %3626 = vmatpush.bf16.msra.mxu0 %v3041
    %3627 = vmatpush.bf16.msra.mxu0 %v3036
    %3628 = vmatpush.bf16.msra.mxu0 %v3031
    %3629 = vmatpush.bf16.msra.mxu0 %v3026
    %3630 = vmatpush.bf16.msra.mxu0 %v3021
    %3631 = vmatpush.bf16.msra.mxu0 %v3016
    %3632 = vmatmul.bf16.gmra.mxu0 %v1404
    %v3633 = vpop.f32.mrf.mxu0
    %v3634 = vadd.f32 %v3621, %v3633
    %v3635 = vpop.f32.mrf.mxu0
    %3636 = vdwg.mxu0
    %3637 = vmatpush.bf16.msra.mxu0 %v3091
    %3638 = vmatpush.bf16.msra.mxu0 %v3086
    %3639 = vmatpush.bf16.msra.mxu0 %v3081
    %3640 = vmatpush.bf16.msra.mxu0 %v3076
    %3641 = vmatpush.bf16.msra.mxu0 %v3071
    %3642 = vmatpush.bf16.msra.mxu0 %v3066
    %3643 = vmatpush.bf16.msra.mxu0 %v3061
    %3644 = vmatpush.bf16.msra.mxu0 %v3056
    %3645 = vmatmul.bf16.gmra.mxu0 %v1405
    %v3646 = vpop.f32.mrf.mxu0
    %v3647 = vadd.f32 %v3634, %v3646
    %v3648 = vpop.f32.mrf.mxu0
    %3649 = vdwg.mxu0
    %3650 = vmatpush.bf16.msra.mxu0 %v3131
    %3651 = vmatpush.bf16.msra.mxu0 %v3126
    %3652 = vmatpush.bf16.msra.mxu0 %v3121
    %3653 = vmatpush.bf16.msra.mxu0 %v3116
    %3654 = vmatpush.bf16.msra.mxu0 %v3111
    %3655 = vmatpush.bf16.msra.mxu0 %v3106
    %3656 = vmatpush.bf16.msra.mxu0 %v3101
    %3657 = vmatpush.bf16.msra.mxu0 %v3096
    %3658 = vmatmul.bf16.gmra.mxu0 %v1406
    %v3659 = vpop.f32.mrf.mxu0
    %v3660 = vadd.f32 %v3647, %v3659
    %v3661 = vpop.f32.mrf.mxu0
    %3662 = vdwg.mxu0
    %3663 = vmatpush.bf16.msra.mxu0 %v2852
    %3664 = vmatpush.bf16.msra.mxu0 %v2847
    %3665 = vmatpush.bf16.msra.mxu0 %v2842
    %3666 = vmatpush.bf16.msra.mxu0 %v2837
    %3667 = vmatpush.bf16.msra.mxu0 %v2832
    %3668 = vmatpush.bf16.msra.mxu0 %v2827
    %3669 = vmatpush.bf16.msra.mxu0 %v2822
    %3670 = vmatpush.bf16.msra.mxu0 %v2817
    %3671 = vmatmul.bf16.gmra.mxu0 %v1399
    %v3672 = vpop.f32.mrf.mxu0
    %v3673 = vadd.f32 0.0, %v3672
    %v3674 = vpop.f32.mrf.mxu0
    %3675 = vdwg.mxu0
    %3676 = vmatpush.bf16.msra.mxu0 %v2892
    %3677 = vmatpush.bf16.msra.mxu0 %v2887
    %3678 = vmatpush.bf16.msra.mxu0 %v2882
    %3679 = vmatpush.bf16.msra.mxu0 %v2877
    %3680 = vmatpush.bf16.msra.mxu0 %v2872
    %3681 = vmatpush.bf16.msra.mxu0 %v2867
    %3682 = vmatpush.bf16.msra.mxu0 %v2862
    %3683 = vmatpush.bf16.msra.mxu0 %v2857
    %3684 = vmatmul.bf16.gmra.mxu0 %v1400
    %v3685 = vpop.f32.mrf.mxu0
    %v3686 = vadd.f32 %v3673, %v3685
    %v3687 = vpop.f32.mrf.mxu0
    %3688 = vdwg.mxu0
    %3689 = vmatpush.bf16.msra.mxu0 %v2932
    %3690 = vmatpush.bf16.msra.mxu0 %v2927
    %3691 = vmatpush.bf16.msra.mxu0 %v2922
    %3692 = vmatpush.bf16.msra.mxu0 %v2917
    %3693 = vmatpush.bf16.msra.mxu0 %v2912
    %3694 = vmatpush.bf16.msra.mxu0 %v2907
    %3695 = vmatpush.bf16.msra.mxu0 %v2902
    %3696 = vmatpush.bf16.msra.mxu0 %v2897
    %3697 = vmatmul.bf16.gmra.mxu0 %v1401
    %v3698 = vpop.f32.mrf.mxu0
    %v3699 = vadd.f32 %v3686, %v3698
    %v3700 = vpop.f32.mrf.mxu0
    %3701 = vdwg.mxu0
    %3702 = vmatpush.bf16.msra.mxu0 %v2972
    %3703 = vmatpush.bf16.msra.mxu0 %v2967
    %3704 = vmatpush.bf16.msra.mxu0 %v2962
    %3705 = vmatpush.bf16.msra.mxu0 %v2957
    %3706 = vmatpush.bf16.msra.mxu0 %v2952
    %3707 = vmatpush.bf16.msra.mxu0 %v2947
    %3708 = vmatpush.bf16.msra.mxu0 %v2942
    %3709 = vmatpush.bf16.msra.mxu0 %v2937
    %3710 = vmatmul.bf16.gmra.mxu0 %v1402
    %v3711 = vpop.f32.mrf.mxu0
    %v3712 = vadd.f32 %v3699, %v3711
    %v3713 = vpop.f32.mrf.mxu0
    %3714 = vdwg.mxu0
    %3715 = vmatpush.bf16.msra.mxu0 %v3012
    %3716 = vmatpush.bf16.msra.mxu0 %v3007
    %3717 = vmatpush.bf16.msra.mxu0 %v3002
    %3718 = vmatpush.bf16.msra.mxu0 %v2997
    %3719 = vmatpush.bf16.msra.mxu0 %v2992
    %3720 = vmatpush.bf16.msra.mxu0 %v2987
    %3721 = vmatpush.bf16.msra.mxu0 %v2982
    %3722 = vmatpush.bf16.msra.mxu0 %v2977
    %3723 = vmatmul.bf16.gmra.mxu0 %v1403
    %v3724 = vpop.f32.mrf.mxu0
    %v3725 = vadd.f32 %v3712, %v3724
    %v3726 = vpop.f32.mrf.mxu0
    %3727 = vdwg.mxu0
    %3728 = vmatpush.bf16.msra.mxu0 %v3052
    %3729 = vmatpush.bf16.msra.mxu0 %v3047
    %3730 = vmatpush.bf16.msra.mxu0 %v3042
    %3731 = vmatpush.bf16.msra.mxu0 %v3037
    %3732 = vmatpush.bf16.msra.mxu0 %v3032
    %3733 = vmatpush.bf16.msra.mxu0 %v3027
    %3734 = vmatpush.bf16.msra.mxu0 %v3022
    %3735 = vmatpush.bf16.msra.mxu0 %v3017
    %3736 = vmatmul.bf16.gmra.mxu0 %v1404
    %v3737 = vpop.f32.mrf.mxu0
    %v3738 = vadd.f32 %v3725, %v3737
    %v3739 = vpop.f32.mrf.mxu0
    %3740 = vdwg.mxu0
    %3741 = vmatpush.bf16.msra.mxu0 %v3092
    %3742 = vmatpush.bf16.msra.mxu0 %v3087
    %3743 = vmatpush.bf16.msra.mxu0 %v3082
    %3744 = vmatpush.bf16.msra.mxu0 %v3077
    %3745 = vmatpush.bf16.msra.mxu0 %v3072
    %3746 = vmatpush.bf16.msra.mxu0 %v3067
    %3747 = vmatpush.bf16.msra.mxu0 %v3062
    %3748 = vmatpush.bf16.msra.mxu0 %v3057
    %3749 = vmatmul.bf16.gmra.mxu0 %v1405
    %v3750 = vpop.f32.mrf.mxu0
    %v3751 = vadd.f32 %v3738, %v3750
    %v3752 = vpop.f32.mrf.mxu0
    %3753 = vdwg.mxu0
    %3754 = vmatpush.bf16.msra.mxu0 %v3132
    %3755 = vmatpush.bf16.msra.mxu0 %v3127
    %3756 = vmatpush.bf16.msra.mxu0 %v3122
    %3757 = vmatpush.bf16.msra.mxu0 %v3117
    %3758 = vmatpush.bf16.msra.mxu0 %v3112
    %3759 = vmatpush.bf16.msra.mxu0 %v3107
    %3760 = vmatpush.bf16.msra.mxu0 %v3102
    %3761 = vmatpush.bf16.msra.mxu0 %v3097
    %3762 = vmatmul.bf16.gmra.mxu0 %v1406
    %v3763 = vpop.f32.mrf.mxu0
    %v3764 = vadd.f32 %v3751, %v3763
    %v3765 = vpop.f32.mrf.mxu0
    %3766 = vdwg.mxu0
    %3767 = vmatpush.bf16.msra.mxu0 %v2853
    %3768 = vmatpush.bf16.msra.mxu0 %v2848
    %3769 = vmatpush.bf16.msra.mxu0 %v2843
    %3770 = vmatpush.bf16.msra.mxu0 %v2838
    %3771 = vmatpush.bf16.msra.mxu0 %v2833
    %3772 = vmatpush.bf16.msra.mxu0 %v2828
    %3773 = vmatpush.bf16.msra.mxu0 %v2823
    %3774 = vmatpush.bf16.msra.mxu0 %v2818
    %3775 = vmatmul.bf16.gmra.mxu0 %v1399
    %v3776 = vpop.f32.mrf.mxu0
    %v3777 = vadd.f32 0.0, %v3776
    %v3778 = vpop.f32.mrf.mxu0
    %3779 = vdwg.mxu0
    %3780 = vmatpush.bf16.msra.mxu0 %v2893
    %3781 = vmatpush.bf16.msra.mxu0 %v2888
    %3782 = vmatpush.bf16.msra.mxu0 %v2883
    %3783 = vmatpush.bf16.msra.mxu0 %v2878
    %3784 = vmatpush.bf16.msra.mxu0 %v2873
    %3785 = vmatpush.bf16.msra.mxu0 %v2868
    %3786 = vmatpush.bf16.msra.mxu0 %v2863
    %3787 = vmatpush.bf16.msra.mxu0 %v2858
    %3788 = vmatmul.bf16.gmra.mxu0 %v1400
    %v3789 = vpop.f32.mrf.mxu0
    %v3790 = vadd.f32 %v3777, %v3789
    %v3791 = vpop.f32.mrf.mxu0
    %3792 = vdwg.mxu0
    %3793 = vmatpush.bf16.msra.mxu0 %v2933
    %3794 = vmatpush.bf16.msra.mxu0 %v2928
    %3795 = vmatpush.bf16.msra.mxu0 %v2923
    %3796 = vmatpush.bf16.msra.mxu0 %v2918
    %3797 = vmatpush.bf16.msra.mxu0 %v2913
    %3798 = vmatpush.bf16.msra.mxu0 %v2908
    %3799 = vmatpush.bf16.msra.mxu0 %v2903
    %3800 = vmatpush.bf16.msra.mxu0 %v2898
    %3801 = vmatmul.bf16.gmra.mxu0 %v1401
    %v3802 = vpop.f32.mrf.mxu0
    %v3803 = vadd.f32 %v3790, %v3802
    %v3804 = vpop.f32.mrf.mxu0
    %3805 = vdwg.mxu0
    %3806 = vmatpush.bf16.msra.mxu0 %v2973
    %3807 = vmatpush.bf16.msra.mxu0 %v2968
    %3808 = vmatpush.bf16.msra.mxu0 %v2963
    %3809 = vmatpush.bf16.msra.mxu0 %v2958
    %3810 = vmatpush.bf16.msra.mxu0 %v2953
    %3811 = vmatpush.bf16.msra.mxu0 %v2948
    %3812 = vmatpush.bf16.msra.mxu0 %v2943
    %3813 = vmatpush.bf16.msra.mxu0 %v2938
    %3814 = vmatmul.bf16.gmra.mxu0 %v1402
    %v3815 = vpop.f32.mrf.mxu0
    %v3816 = vadd.f32 %v3803, %v3815
    %v3817 = vpop.f32.mrf.mxu0
    %3818 = vdwg.mxu0
    %3819 = vmatpush.bf16.msra.mxu0 %v3013
    %3820 = vmatpush.bf16.msra.mxu0 %v3008
    %3821 = vmatpush.bf16.msra.mxu0 %v3003
    %3822 = vmatpush.bf16.msra.mxu0 %v2998
    %3823 = vmatpush.bf16.msra.mxu0 %v2993
    %3824 = vmatpush.bf16.msra.mxu0 %v2988
    %3825 = vmatpush.bf16.msra.mxu0 %v2983
    %3826 = vmatpush.bf16.msra.mxu0 %v2978
    %3827 = vmatmul.bf16.gmra.mxu0 %v1403
    %v3828 = vpop.f32.mrf.mxu0
    %v3829 = vadd.f32 %v3816, %v3828
    %v3830 = vpop.f32.mrf.mxu0
    %3831 = vdwg.mxu0
    %3832 = vmatpush.bf16.msra.mxu0 %v3053
    %3833 = vmatpush.bf16.msra.mxu0 %v3048
    %3834 = vmatpush.bf16.msra.mxu0 %v3043
    %3835 = vmatpush.bf16.msra.mxu0 %v3038
    %3836 = vmatpush.bf16.msra.mxu0 %v3033
    %3837 = vmatpush.bf16.msra.mxu0 %v3028
    %3838 = vmatpush.bf16.msra.mxu0 %v3023
    %3839 = vmatpush.bf16.msra.mxu0 %v3018
    %3840 = vmatmul.bf16.gmra.mxu0 %v1404
    %v3841 = vpop.f32.mrf.mxu0
    %v3842 = vadd.f32 %v3829, %v3841
    %v3843 = vpop.f32.mrf.mxu0
    %3844 = vdwg.mxu0
    %3845 = vmatpush.bf16.msra.mxu0 %v3093
    %3846 = vmatpush.bf16.msra.mxu0 %v3088
    %3847 = vmatpush.bf16.msra.mxu0 %v3083
    %3848 = vmatpush.bf16.msra.mxu0 %v3078
    %3849 = vmatpush.bf16.msra.mxu0 %v3073
    %3850 = vmatpush.bf16.msra.mxu0 %v3068
    %3851 = vmatpush.bf16.msra.mxu0 %v3063
    %3852 = vmatpush.bf16.msra.mxu0 %v3058
    %3853 = vmatmul.bf16.gmra.mxu0 %v1405
    %v3854 = vpop.f32.mrf.mxu0
    %v3855 = vadd.f32 %v3842, %v3854
    %v3856 = vpop.f32.mrf.mxu0
    %3857 = vdwg.mxu0
    %3858 = vmatpush.bf16.msra.mxu0 %v3133
    %3859 = vmatpush.bf16.msra.mxu0 %v3128
    %3860 = vmatpush.bf16.msra.mxu0 %v3123
    %3861 = vmatpush.bf16.msra.mxu0 %v3118
    %3862 = vmatpush.bf16.msra.mxu0 %v3113
    %3863 = vmatpush.bf16.msra.mxu0 %v3108
    %3864 = vmatpush.bf16.msra.mxu0 %v3103
    %3865 = vmatpush.bf16.msra.mxu0 %v3098
    %3866 = vmatmul.bf16.gmra.mxu0 %v1406
    %v3867 = vpop.f32.mrf.mxu0
    %v3868 = vadd.f32 %v3855, %v3867
    %v3869 = vpop.f32.mrf.mxu0
    %3870 = vdwg.mxu0
    %3871 = vmatpush.bf16.msra.mxu0 %v2854
    %3872 = vmatpush.bf16.msra.mxu0 %v2849
    %3873 = vmatpush.bf16.msra.mxu0 %v2844
    %3874 = vmatpush.bf16.msra.mxu0 %v2839
    %3875 = vmatpush.bf16.msra.mxu0 %v2834
    %3876 = vmatpush.bf16.msra.mxu0 %v2829
    %3877 = vmatpush.bf16.msra.mxu0 %v2824
    %3878 = vmatpush.bf16.msra.mxu0 %v2819
    %3879 = vmatmul.bf16.gmra.mxu0 %v1399
    %v3880 = vpop.f32.mrf.mxu0
    %v3881 = vadd.f32 0.0, %v3880
    %v3882 = vpop.f32.mrf.mxu0
    %3883 = vdwg.mxu0
    %3884 = vmatpush.bf16.msra.mxu0 %v2894
    %3885 = vmatpush.bf16.msra.mxu0 %v2889
    %3886 = vmatpush.bf16.msra.mxu0 %v2884
    %3887 = vmatpush.bf16.msra.mxu0 %v2879
    %3888 = vmatpush.bf16.msra.mxu0 %v2874
    %3889 = vmatpush.bf16.msra.mxu0 %v2869
    %3890 = vmatpush.bf16.msra.mxu0 %v2864
    %3891 = vmatpush.bf16.msra.mxu0 %v2859
    %3892 = vmatmul.bf16.gmra.mxu0 %v1400
    %v3893 = vpop.f32.mrf.mxu0
    %v3894 = vadd.f32 %v3881, %v3893
    %v3895 = vpop.f32.mrf.mxu0
    %3896 = vdwg.mxu0
    %3897 = vmatpush.bf16.msra.mxu0 %v2934
    %3898 = vmatpush.bf16.msra.mxu0 %v2929
    %3899 = vmatpush.bf16.msra.mxu0 %v2924
    %3900 = vmatpush.bf16.msra.mxu0 %v2919
    %3901 = vmatpush.bf16.msra.mxu0 %v2914
    %3902 = vmatpush.bf16.msra.mxu0 %v2909
    %3903 = vmatpush.bf16.msra.mxu0 %v2904
    %3904 = vmatpush.bf16.msra.mxu0 %v2899
    %3905 = vmatmul.bf16.gmra.mxu0 %v1401
    %v3906 = vpop.f32.mrf.mxu0
    %v3907 = vadd.f32 %v3894, %v3906
    %v3908 = vpop.f32.mrf.mxu0
    %3909 = vdwg.mxu0
    %3910 = vmatpush.bf16.msra.mxu0 %v2974
    %3911 = vmatpush.bf16.msra.mxu0 %v2969
    %3912 = vmatpush.bf16.msra.mxu0 %v2964
    %3913 = vmatpush.bf16.msra.mxu0 %v2959
    %3914 = vmatpush.bf16.msra.mxu0 %v2954
    %3915 = vmatpush.bf16.msra.mxu0 %v2949
    %3916 = vmatpush.bf16.msra.mxu0 %v2944
    %3917 = vmatpush.bf16.msra.mxu0 %v2939
    %3918 = vmatmul.bf16.gmra.mxu0 %v1402
    %v3919 = vpop.f32.mrf.mxu0
    %v3920 = vadd.f32 %v3907, %v3919
    %v3921 = vpop.f32.mrf.mxu0
    %3922 = vdwg.mxu0
    %3923 = vmatpush.bf16.msra.mxu0 %v3014
    %3924 = vmatpush.bf16.msra.mxu0 %v3009
    %3925 = vmatpush.bf16.msra.mxu0 %v3004
    %3926 = vmatpush.bf16.msra.mxu0 %v2999
    %3927 = vmatpush.bf16.msra.mxu0 %v2994
    %3928 = vmatpush.bf16.msra.mxu0 %v2989
    %3929 = vmatpush.bf16.msra.mxu0 %v2984
    %3930 = vmatpush.bf16.msra.mxu0 %v2979
    %3931 = vmatmul.bf16.gmra.mxu0 %v1403
    %v3932 = vpop.f32.mrf.mxu0
    %v3933 = vadd.f32 %v3920, %v3932
    %v3934 = vpop.f32.mrf.mxu0
    %3935 = vdwg.mxu0
    %3936 = vmatpush.bf16.msra.mxu0 %v3054
    %3937 = vmatpush.bf16.msra.mxu0 %v3049
    %3938 = vmatpush.bf16.msra.mxu0 %v3044
    %3939 = vmatpush.bf16.msra.mxu0 %v3039
    %3940 = vmatpush.bf16.msra.mxu0 %v3034
    %3941 = vmatpush.bf16.msra.mxu0 %v3029
    %3942 = vmatpush.bf16.msra.mxu0 %v3024
    %3943 = vmatpush.bf16.msra.mxu0 %v3019
    %3944 = vmatmul.bf16.gmra.mxu0 %v1404
    %v3945 = vpop.f32.mrf.mxu0
    %v3946 = vadd.f32 %v3933, %v3945
    %v3947 = vpop.f32.mrf.mxu0
    %3948 = vdwg.mxu0
    %3949 = vmatpush.bf16.msra.mxu0 %v3094
    %3950 = vmatpush.bf16.msra.mxu0 %v3089
    %3951 = vmatpush.bf16.msra.mxu0 %v3084
    %3952 = vmatpush.bf16.msra.mxu0 %v3079
    %3953 = vmatpush.bf16.msra.mxu0 %v3074
    %3954 = vmatpush.bf16.msra.mxu0 %v3069
    %3955 = vmatpush.bf16.msra.mxu0 %v3064
    %3956 = vmatpush.bf16.msra.mxu0 %v3059
    %3957 = vmatmul.bf16.gmra.mxu0 %v1405
    %v3958 = vpop.f32.mrf.mxu0
    %v3959 = vadd.f32 %v3946, %v3958
    %v3960 = vpop.f32.mrf.mxu0
    %3961 = vdwg.mxu0
    %3962 = vmatpush.bf16.msra.mxu0 %v3134
    %3963 = vmatpush.bf16.msra.mxu0 %v3129
    %3964 = vmatpush.bf16.msra.mxu0 %v3124
    %3965 = vmatpush.bf16.msra.mxu0 %v3119
    %3966 = vmatpush.bf16.msra.mxu0 %v3114
    %3967 = vmatpush.bf16.msra.mxu0 %v3109
    %3968 = vmatpush.bf16.msra.mxu0 %v3104
    %3969 = vmatpush.bf16.msra.mxu0 %v3099
    %3970 = vmatmul.bf16.gmra.mxu0 %v1406
    %v3971 = vpop.f32.mrf.mxu0
    %v3972 = vadd.f32 %v3959, %v3971
    %v3973 = vpop.f32.mrf.mxu0
    %3974 = vdwg.mxu0
    %v3975 = vrot.slane %v3556, 4
    %v3976 = vadd.f32 %v3556, %v3975
    %v3977 = vrot.slane %v3976, 2
    %v3978 = vadd.f32 %v3976, %v3977
    %v3979 = vrot.slane %v3978, 1
    %v3980 = vadd.f32 %v3978, %v3979
    %v3981 = vrot.slane %v3660, 4
    %v3982 = vadd.f32 %v3660, %v3981
    %v3983 = vrot.slane %v3982, 2
    %v3984 = vadd.f32 %v3982, %v3983
    %v3985 = vrot.slane %v3984, 1
    %v3986 = vadd.f32 %v3984, %v3985
    %v3987 = vrot.slane %v3764, 4
    %v3988 = vadd.f32 %v3764, %v3987
    %v3989 = vrot.slane %v3988, 2
    %v3990 = vadd.f32 %v3988, %v3989
    %v3991 = vrot.slane %v3990, 1
    %v3992 = vadd.f32 %v3990, %v3991
    %v3993 = vrot.slane %v3868, 4
    %v3994 = vadd.f32 %v3868, %v3993
    %v3995 = vrot.slane %v3994, 2
    %v3996 = vadd.f32 %v3994, %v3995
    %v3997 = vrot.slane %v3996, 1
    %v3998 = vadd.f32 %v3996, %v3997
    %v3999 = vrot.slane %v3972, 4
    %v4000 = vadd.f32 %v3972, %v3999
    %v4001 = vrot.slane %v4000, 2
    %v4002 = vadd.f32 %v4000, %v4001
    %v4003 = vrot.slane %v4002, 1
    %v4004 = vadd.f32 %v4002, %v4003
    %v4005 = vmul.f32 %v3980, %v1166
    %v4006 = vmul.f32 %v3986, %v1166
    %v4007 = vmul.f32 %v3992, %v1166
    %v4008 = vmul.f32 %v3998, %v1166
    %v4009 = vmul.f32 %v4004, %v1166
    %v4010 = vmul.f32 %v3556, %v3556
    %v4011 = vmul.f32 %v3660, %v3660
    %v4012 = vmul.f32 %v3764, %v3764
    %v4013 = vmul.f32 %v3868, %v3868
    %v4014 = vmul.f32 %v3972, %v3972
    %v4015 = vrot.slane %v4010, 4
    %v4016 = vadd.f32 %v4010, %v4015
    %v4017 = vrot.slane %v4016, 2
    %v4018 = vadd.f32 %v4016, %v4017
    %v4019 = vrot.slane %v4018, 1
    %v4020 = vadd.f32 %v4018, %v4019
    %v4021 = vrot.slane %v4011, 4
    %v4022 = vadd.f32 %v4011, %v4021
    %v4023 = vrot.slane %v4022, 2
    %v4024 = vadd.f32 %v4022, %v4023
    %v4025 = vrot.slane %v4024, 1
    %v4026 = vadd.f32 %v4024, %v4025
    %v4027 = vrot.slane %v4012, 4
    %v4028 = vadd.f32 %v4012, %v4027
    %v4029 = vrot.slane %v4028, 2
    %v4030 = vadd.f32 %v4028, %v4029
    %v4031 = vrot.slane %v4030, 1
    %v4032 = vadd.f32 %v4030, %v4031
    %v4033 = vrot.slane %v4013, 4
    %v4034 = vadd.f32 %v4013, %v4033
    %v4035 = vrot.slane %v4034, 2
    %v4036 = vadd.f32 %v4034, %v4035
    %v4037 = vrot.slane %v4036, 1
    %v4038 = vadd.f32 %v4036, %v4037
    %v4039 = vrot.slane %v4014, 4
    %v4040 = vadd.f32 %v4014, %v4039
    %v4041 = vrot.slane %v4040, 2
    %v4042 = vadd.f32 %v4040, %v4041
    %v4043 = vrot.slane %v4042, 1
    %v4044 = vadd.f32 %v4042, %v4043
    %v4045 = vmul.f32 %v4020, %v1166
    %v4046 = vmul.f32 %v4026, %v1166
    %v4047 = vmul.f32 %v4032, %v1166
    %v4048 = vmul.f32 %v4038, %v1166
    %v4049 = vmul.f32 %v4044, %v1166
    %v4050 = vmul.f32 %v4005, %v4005
    %v4051 = vmul.f32 %v4006, %v4006
    %v4052 = vmul.f32 %v4007, %v4007
    %v4053 = vmul.f32 %v4008, %v4008
    %v4054 = vmul.f32 %v4009, %v4009
    %v4055 = vsub.f32 %v4045, %v4050
    %v4056 = vsub.f32 %v4046, %v4051
    %v4057 = vsub.f32 %v4047, %v4052
    %v4058 = vsub.f32 %v4048, %v4053
    %v4059 = vsub.f32 %v4049, %v4054
    %v4060 = vmax.f32 %v4055, 0.0
    %v4061 = vmax.f32 %v4056, 0.0
    %v4062 = vmax.f32 %v4057, 0.0
    %v4063 = vmax.f32 %v4058, 0.0
    %v4064 = vmax.f32 %v4059, 0.0
    %v4065 = vadd.f32 %v4060, 1e-05
    %v4066 = vadd.f32 %v4061, 1e-05
    %v4067 = vadd.f32 %v4062, 1e-05
    %v4068 = vadd.f32 %v4063, 1e-05
    %v4069 = vadd.f32 %v4064, 1e-05
    %v4070 = vrsqrt.pop %v4065
    %v4071 = vmul.f32 %v4070, %v4065
    %v4072 = vmul.f32 %v4071, %v4070
    %v4073 = vmul.f32 0.5, %v4072
    %v4074 = vsub.f32 1.5, %v4073
    %v4075 = vmul.f32 %v4070, %v4074
    %vm4076 = vweird.f32 %v4065
    %vm4077 = vweird.f32 %v4070
    %vm4078 = vmor %vm4076, %vm4077
    %v4079 = vsel %vm4078, %v4070, %v4075
    %v4080 = vrsqrt.pop %v4066
    %v4081 = vmul.f32 %v4080, %v4066
    %v4082 = vmul.f32 %v4081, %v4080
    %v4083 = vmul.f32 0.5, %v4082
    %v4084 = vsub.f32 1.5, %v4083
    %v4085 = vmul.f32 %v4080, %v4084
    %vm4086 = vweird.f32 %v4066
    %vm4087 = vweird.f32 %v4080
    %vm4088 = vmor %vm4086, %vm4087
    %v4089 = vsel %vm4088, %v4080, %v4085
    %v4090 = vrsqrt.pop %v4067
    %v4091 = vmul.f32 %v4090, %v4067
    %v4092 = vmul.f32 %v4091, %v4090
    %v4093 = vmul.f32 0.5, %v4092
    %v4094 = vsub.f32 1.5, %v4093
    %v4095 = vmul.f32 %v4090, %v4094
    %vm4096 = vweird.f32 %v4067
    %vm4097 = vweird.f32 %v4090
    %vm4098 = vmor %vm4096, %vm4097
    %v4099 = vsel %vm4098, %v4090, %v4095
    %v4100 = vrsqrt.pop %v4068
    %v4101 = vmul.f32 %v4100, %v4068
    %v4102 = vmul.f32 %v4101, %v4100
    %v4103 = vmul.f32 0.5, %v4102
    %v4104 = vsub.f32 1.5, %v4103
    %v4105 = vmul.f32 %v4100, %v4104
    %vm4106 = vweird.f32 %v4068
    %vm4107 = vweird.f32 %v4100
    %vm4108 = vmor %vm4106, %vm4107
    %v4109 = vsel %vm4108, %v4100, %v4105
    %v4110 = vrsqrt.pop %v4069
    %v4111 = vmul.f32 %v4110, %v4069
    %v4112 = vmul.f32 %v4111, %v4110
    %v4113 = vmul.f32 0.5, %v4112
    %v4114 = vsub.f32 1.5, %v4113
    %v4115 = vmul.f32 %v4110, %v4114
    %vm4116 = vweird.f32 %v4069
    %vm4117 = vweird.f32 %v4110
    %vm4118 = vmor %vm4116, %vm4117
    %v4119 = vsel %vm4118, %v4110, %v4115
    %v4120 = vmul.f32 %v4005, %v4079
    %v4121 = vmul.f32 %v4006, %v4089
    %v4122 = vmul.f32 %v4007, %v4099
    %v4123 = vmul.f32 %v4008, %v4109
    %v4124 = vmul.f32 %v4009, %v4119
    %v4125 = vmul.f32 %v3556, %v4079
    %v4126 = vmul.f32 %v3660, %v4089
    %v4127 = vmul.f32 %v3764, %v4099
    %v4128 = vmul.f32 %v3868, %v4109
    %v4129 = vmul.f32 %v3972, %v4119
    %v4130 = vsub.f32 %v4125, %v4120
    %v4131 = vsub.f32 %v4126, %v4121
    %v4132 = vsub.f32 %v4127, %v4122
    %v4133 = vsub.f32 %v4128, %v4123
    %v4134 = vsub.f32 %v4129, %v4124
    %vm4135 = vcmp.ge.f32.partialorder %v4130, 0.0
    %vm4136 = vcmp.ge.f32.partialorder %v4131, 0.0
    %vm4137 = vcmp.ge.f32.partialorder %v4132, 0.0
    %vm4138 = vcmp.ge.f32.partialorder %v4133, 0.0
    %vm4139 = vcmp.ge.f32.partialorder %v4134, 0.0
    %v4140 = vmul.f32 %v4130, 0.01
    %v4141 = vmul.f32 %v4131, 0.01
    %v4142 = vmul.f32 %v4132, 0.01
    %v4143 = vmul.f32 %v4133, 0.01
    %v4144 = vmul.f32 %v4134, 0.01
    %v4145 = vsel %vm4135, %v4130, %v4140
    %v4146 = vsel %vm4136, %v4131, %v4141
    %v4147 = vsel %vm4137, %v4132, %v4142
    %v4148 = vsel %vm4138, %v4133, %v4143
    %v4149 = vsel %vm4139, %v4134, %v4144
    %v4150 = vpack.c.bf16 %v4145, %v4145
    %v4151 = vpack.c.bf16 %v4146, %v4146
    %v4152 = vpack.c.bf16 %v4147, %v4147
    %v4153 = vpack.c.bf16 %v4148, %v4148
    %v4154 = vpack.c.bf16 %v4149, %v4149
    %v4155 = vld [vmem:[#allocation8] sm:$0xff]
    %v4156 = vld [vmem:[#allocation8 + $0x8] sm:$0xff]
    %v4157 = vld [vmem:[#allocation8 + $0x10] sm:$0xff]
    %v4158 = vld [vmem:[#allocation8 + $0x18] sm:$0xff]
    %v4159 = vld [vmem:[#allocation8 + $0x20] sm:$0xff]
    %v4160 = vld [vmem:[#allocation8 + $0x28] sm:$0xff]
    %v4161 = vld [vmem:[#allocation8 + $0x30] sm:$0xff]
    %v4162 = vld [vmem:[#allocation8 + $0x38] sm:$0xff]
    %v4163 = vld [vmem:[#allocation8 + $0x40] sm:$0xff]
    %v4164 = vld [vmem:[#allocation8 + $0x48] sm:$0xff]
    %v4165 = vld [vmem:[#allocation8 + $0x50] sm:$0xff]
    %v4166 = vld [vmem:[#allocation8 + $0x58] sm:$0xff]
    %v4167 = vld [vmem:[#allocation8 + $0x60] sm:$0xff]
    %v4168 = vld [vmem:[#allocation8 + $0x68] sm:$0xff]
    %v4169 = vld [vmem:[#allocation8 + $0x70] sm:$0xff]
    %v4170 = vld [vmem:[#allocation8 + $0x78] sm:$0xff]
    %v4171 = vld [vmem:[#allocation8 + $0x80] sm:$0xff]
    %v4172 = vld [vmem:[#allocation8 + $0x88] sm:$0xff]
    %v4173 = vld [vmem:[#allocation8 + $0x90] sm:$0xff]
    %v4174 = vld [vmem:[#allocation8 + $0x98] sm:$0xff]
    %v4175 = vld [vmem:[#allocation8 + $0xa0] sm:$0xff]
    %v4176 = vld [vmem:[#allocation8 + $0xa8] sm:$0xff]
    %v4177 = vld [vmem:[#allocation8 + $0xb0] sm:$0xff]
    %v4178 = vld [vmem:[#allocation8 + $0xb8] sm:$0xff]
    %v4179 = vld [vmem:[#allocation8 + $0xc0] sm:$0xff]
    %v4180 = vld [vmem:[#allocation8 + $0xc8] sm:$0xff]
    %v4181 = vld [vmem:[#allocation8 + $0xd0] sm:$0xff]
    %v4182 = vld [vmem:[#allocation8 + $0xd8] sm:$0xff]
    %v4183 = vld [vmem:[#allocation8 + $0xe0] sm:$0xff]
    %v4184 = vld [vmem:[#allocation8 + $0xe8] sm:$0xff]
    %v4185 = vld [vmem:[#allocation8 + $0xf0] sm:$0xff]
    %v4186 = vld [vmem:[#allocation8 + $0xf8] sm:$0xff]
    %v4187 = vld [vmem:[#allocation8 + $0x100] sm:$0xff]
    %v4188 = vld [vmem:[#allocation8 + $0x108] sm:$0xff]
    %v4189 = vld [vmem:[#allocation8 + $0x110] sm:$0xff]
    %v4190 = vld [vmem:[#allocation8 + $0x118] sm:$0xff]
    %v4191 = vld [vmem:[#allocation8 + $0x120] sm:$0xff]
    %v4192 = vld [vmem:[#allocation8 + $0x128] sm:$0xff]
    %v4193 = vld [vmem:[#allocation8 + $0x130] sm:$0xff]
    %v4194 = vld [vmem:[#allocation8 + $0x138] sm:$0xff]
    %v4195 = vld [vmem:[#allocation8 + $0x140] sm:$0xff]
    %v4196 = vld [vmem:[#allocation8 + $0x148] sm:$0xff]
    %v4197 = vld [vmem:[#allocation8 + $0x150] sm:$0xff]
    %v4198 = vld [vmem:[#allocation8 + $0x158] sm:$0xff]
    %v4199 = vld [vmem:[#allocation8 + $0x160] sm:$0xff]
    %v4200 = vld [vmem:[#allocation8 + $0x168] sm:$0xff]
    %v4201 = vld [vmem:[#allocation8 + $0x170] sm:$0xff]
    %v4202 = vld [vmem:[#allocation8 + $0x178] sm:$0xff]
    %v4203 = vld [vmem:[#allocation8 + $0x180] sm:$0xff]
    %v4204 = vld [vmem:[#allocation8 + $0x188] sm:$0xff]
    %v4205 = vld [vmem:[#allocation8 + $0x190] sm:$0xff]
    %v4206 = vld [vmem:[#allocation8 + $0x198] sm:$0xff]
    %v4207 = vld [vmem:[#allocation8 + $0x1a0] sm:$0xff]
    %v4208 = vld [vmem:[#allocation8 + $0x1a8] sm:$0xff]
    %v4209 = vld [vmem:[#allocation8 + $0x1b0] sm:$0xff]
    %v4210 = vld [vmem:[#allocation8 + $0x1b8] sm:$0xff]
    %v4211 = vld [vmem:[#allocation8 + $0x1c0] sm:$0xff]
    %v4212 = vld [vmem:[#allocation8 + $0x1c8] sm:$0xff]
    %v4213 = vld [vmem:[#allocation8 + $0x1d0] sm:$0xff]
    %v4214 = vld [vmem:[#allocation8 + $0x1d8] sm:$0xff]
    %v4215 = vld [vmem:[#allocation8 + $0x1e0] sm:$0xff]
    %v4216 = vld [vmem:[#allocation8 + $0x1e8] sm:$0xff]
    %v4217 = vld [vmem:[#allocation8 + $0x1f0] sm:$0xff]
    %v4218 = vld [vmem:[#allocation8 + $0x1f8] sm:$0xff]
    %v4219 = vld [vmem:[#allocation8 + $0x200] sm:$0xff]
    %v4220 = vld [vmem:[#allocation8 + $0x208] sm:$0xff]
    %v4221 = vld [vmem:[#allocation8 + $0x210] sm:$0xff]
    %v4222 = vld [vmem:[#allocation8 + $0x218] sm:$0xff]
    %v4223 = vld [vmem:[#allocation8 + $0x220] sm:$0xff]
    %v4224 = vld [vmem:[#allocation8 + $0x228] sm:$0xff]
    %v4225 = vld [vmem:[#allocation8 + $0x230] sm:$0xff]
    %v4226 = vld [vmem:[#allocation8 + $0x238] sm:$0xff]
    %v4227 = vld [vmem:[#allocation8 + $0x240] sm:$0xff]
    %v4228 = vld [vmem:[#allocation8 + $0x248] sm:$0xff]
    %v4229 = vld [vmem:[#allocation8 + $0x250] sm:$0xff]
    %v4230 = vld [vmem:[#allocation8 + $0x258] sm:$0xff]
    %v4231 = vld [vmem:[#allocation8 + $0x260] sm:$0xff]
    %v4232 = vld [vmem:[#allocation8 + $0x268] sm:$0xff]
    %v4233 = vld [vmem:[#allocation8 + $0x270] sm:$0xff]
    %v4234 = vld [vmem:[#allocation8 + $0x278] sm:$0xff]
    %v4315 = vunpack.c.l.b16 %v4155
    %v4316 = vunpack.c.h.b16 %v4155
    %v4317 = vunpack.c.l.b16 %v4156
    %v4318 = vunpack.c.h.b16 %v4156
    %v4319 = vunpack.c.l.b16 %v4157
    %v4320 = vunpack.c.h.b16 %v4157
    %v4321 = vunpack.c.l.b16 %v4158
    %v4322 = vunpack.c.h.b16 %v4158
    %v4323 = vunpack.c.l.b16 %v4159
    %v4324 = vunpack.c.h.b16 %v4159
    %v4325 = vunpack.c.l.b16 %v4160
    %v4326 = vunpack.c.h.b16 %v4160
    %v4327 = vunpack.c.l.b16 %v4161
    %v4328 = vunpack.c.h.b16 %v4161
    %v4329 = vunpack.c.l.b16 %v4162
    %v4330 = vunpack.c.h.b16 %v4162
    %v4331 = vunpack.c.l.b16 %v4163
    %v4332 = vunpack.c.h.b16 %v4163
    %v4333 = vunpack.c.l.b16 %v4164
    %v4334 = vunpack.c.h.b16 %v4164
    %v4335 = vunpack.c.l.b16 %v4165
    %v4336 = vunpack.c.h.b16 %v4165
    %v4337 = vunpack.c.l.b16 %v4166
    %v4338 = vunpack.c.h.b16 %v4166
    %v4339 = vunpack.c.l.b16 %v4167
    %v4340 = vunpack.c.h.b16 %v4167
    %v4341 = vunpack.c.l.b16 %v4168
    %v4342 = vunpack.c.h.b16 %v4168
    %v4343 = vunpack.c.l.b16 %v4169
    %v4344 = vunpack.c.h.b16 %v4169
    %v4345 = vunpack.c.l.b16 %v4170
    %v4346 = vunpack.c.h.b16 %v4170
    %v4347 = vunpack.c.l.b16 %v4171
    %v4348 = vunpack.c.h.b16 %v4171
    %v4349 = vunpack.c.l.b16 %v4172
    %v4350 = vunpack.c.h.b16 %v4172
    %v4351 = vunpack.c.l.b16 %v4173
    %v4352 = vunpack.c.h.b16 %v4173
    %v4353 = vunpack.c.l.b16 %v4174
    %v4354 = vunpack.c.h.b16 %v4174
    %v4355 = vunpack.c.l.b16 %v4175
    %v4356 = vunpack.c.h.b16 %v4175
    %v4357 = vunpack.c.l.b16 %v4176
    %v4358 = vunpack.c.h.b16 %v4176
    %v4359 = vunpack.c.l.b16 %v4177
    %v4360 = vunpack.c.h.b16 %v4177
    %v4361 = vunpack.c.l.b16 %v4178
    %v4362 = vunpack.c.h.b16 %v4178
    %v4363 = vunpack.c.l.b16 %v4179
    %v4364 = vunpack.c.h.b16 %v4179
    %v4365 = vunpack.c.l.b16 %v4180
    %v4366 = vunpack.c.h.b16 %v4180
    %v4367 = vunpack.c.l.b16 %v4181
    %v4368 = vunpack.c.h.b16 %v4181
    %v4369 = vunpack.c.l.b16 %v4182
    %v4370 = vunpack.c.h.b16 %v4182
    %v4371 = vunpack.c.l.b16 %v4183
    %v4372 = vunpack.c.h.b16 %v4183
    %v4373 = vunpack.c.l.b16 %v4184
    %v4374 = vunpack.c.h.b16 %v4184
    %v4375 = vunpack.c.l.b16 %v4185
    %v4376 = vunpack.c.h.b16 %v4185
    %v4377 = vunpack.c.l.b16 %v4186
    %v4378 = vunpack.c.h.b16 %v4186
    %v4379 = vunpack.c.l.b16 %v4187
    %v4380 = vunpack.c.h.b16 %v4187
    %v4381 = vunpack.c.l.b16 %v4188
    %v4382 = vunpack.c.h.b16 %v4188
    %v4383 = vunpack.c.l.b16 %v4189
    %v4384 = vunpack.c.h.b16 %v4189
    %v4385 = vunpack.c.l.b16 %v4190
    %v4386 = vunpack.c.h.b16 %v4190
    %v4387 = vunpack.c.l.b16 %v4191
    %v4388 = vunpack.c.h.b16 %v4191
    %v4389 = vunpack.c.l.b16 %v4192
    %v4390 = vunpack.c.h.b16 %v4192
    %v4391 = vunpack.c.l.b16 %v4193
    %v4392 = vunpack.c.h.b16 %v4193
    %v4393 = vunpack.c.l.b16 %v4194
    %v4394 = vunpack.c.h.b16 %v4194
    %v4395 = vunpack.c.l.b16 %v4195
    %v4396 = vunpack.c.h.b16 %v4195
    %v4397 = vunpack.c.l.b16 %v4196
    %v4398 = vunpack.c.h.b16 %v4196
    %v4399 = vunpack.c.l.b16 %v4197
    %v4400 = vunpack.c.h.b16 %v4197
    %v4401 = vunpack.c.l.b16 %v4198
    %v4402 = vunpack.c.h.b16 %v4198
    %v4403 = vunpack.c.l.b16 %v4199
    %v4404 = vunpack.c.h.b16 %v4199
    %v4405 = vunpack.c.l.b16 %v4200
    %v4406 = vunpack.c.h.b16 %v4200
    %v4407 = vunpack.c.l.b16 %v4201
    %v4408 = vunpack.c.h.b16 %v4201
    %v4409 = vunpack.c.l.b16 %v4202
    %v4410 = vunpack.c.h.b16 %v4202
    %v4411 = vunpack.c.l.b16 %v4203
    %v4412 = vunpack.c.h.b16 %v4203
    %v4413 = vunpack.c.l.b16 %v4204
    %v4414 = vunpack.c.h.b16 %v4204
    %v4415 = vunpack.c.l.b16 %v4205
    %v4416 = vunpack.c.h.b16 %v4205
    %v4417 = vunpack.c.l.b16 %v4206
    %v4418 = vunpack.c.h.b16 %v4206
    %v4419 = vunpack.c.l.b16 %v4207
    %v4420 = vunpack.c.h.b16 %v4207
    %v4421 = vunpack.c.l.b16 %v4208
    %v4422 = vunpack.c.h.b16 %v4208
    %v4423 = vunpack.c.l.b16 %v4209
    %v4424 = vunpack.c.h.b16 %v4209
    %v4425 = vunpack.c.l.b16 %v4210
    %v4426 = vunpack.c.h.b16 %v4210
    %v4427 = vunpack.c.l.b16 %v4211
    %v4428 = vunpack.c.h.b16 %v4211
    %v4429 = vunpack.c.l.b16 %v4212
    %v4430 = vunpack.c.h.b16 %v4212
    %v4431 = vunpack.c.l.b16 %v4213
    %v4432 = vunpack.c.h.b16 %v4213
    %v4433 = vunpack.c.l.b16 %v4214
    %v4434 = vunpack.c.h.b16 %v4214
    %v4435 = vunpack.c.l.b16 %v4215
    %v4436 = vunpack.c.h.b16 %v4215
    %v4437 = vunpack.c.l.b16 %v4216
    %v4438 = vunpack.c.h.b16 %v4216
    %v4439 = vunpack.c.l.b16 %v4217
    %v4440 = vunpack.c.h.b16 %v4217
    %v4441 = vunpack.c.l.b16 %v4218
    %v4442 = vunpack.c.h.b16 %v4218
    %v4443 = vunpack.c.l.b16 %v4219
    %v4444 = vunpack.c.h.b16 %v4219
    %v4445 = vunpack.c.l.b16 %v4220
    %v4446 = vunpack.c.h.b16 %v4220
    %v4447 = vunpack.c.l.b16 %v4221
    %v4448 = vunpack.c.h.b16 %v4221
    %v4449 = vunpack.c.l.b16 %v4222
    %v4450 = vunpack.c.h.b16 %v4222
    %v4451 = vunpack.c.l.b16 %v4223
    %v4452 = vunpack.c.h.b16 %v4223
    %v4453 = vunpack.c.l.b16 %v4224
    %v4454 = vunpack.c.h.b16 %v4224
    %v4455 = vunpack.c.l.b16 %v4225
    %v4456 = vunpack.c.h.b16 %v4225
    %v4457 = vunpack.c.l.b16 %v4226
    %v4458 = vunpack.c.h.b16 %v4226
    %v4459 = vunpack.c.l.b16 %v4227
    %v4460 = vunpack.c.h.b16 %v4227
    %v4461 = vunpack.c.l.b16 %v4228
    %v4462 = vunpack.c.h.b16 %v4228
    %v4463 = vunpack.c.l.b16 %v4229
    %v4464 = vunpack.c.h.b16 %v4229
    %v4465 = vunpack.c.l.b16 %v4230
    %v4466 = vunpack.c.h.b16 %v4230
    %v4467 = vunpack.c.l.b16 %v4231
    %v4468 = vunpack.c.h.b16 %v4231
    %v4469 = vunpack.c.l.b16 %v4232
    %v4470 = vunpack.c.h.b16 %v4232
    %v4471 = vunpack.c.l.b16 %v4233
    %v4472 = vunpack.c.h.b16 %v4233
    %v4473 = vunpack.c.l.b16 %v4234
    %v4474 = vunpack.c.h.b16 %v4234
    %v4475 = vpack.c.b16 %v4317, %v4315
    %v4476 = vpack.c.b16 %v4318, %v4316
    %v4477 = vpack.c.b16 %v4321, %v4319
    %v4478 = vpack.c.b16 %v4322, %v4320
    %v4479 = vpack.c.b16 %v4325, %v4323
    %v4480 = vpack.c.b16 %v4326, %v4324
    %v4481 = vpack.c.b16 %v4329, %v4327
    %v4482 = vpack.c.b16 %v4330, %v4328
    %v4483 = vpack.c.b16 %v4333, %v4331
    %v4484 = vpack.c.b16 %v4334, %v4332
    %v4485 = vpack.c.b16 %v4337, %v4335
    %v4486 = vpack.c.b16 %v4338, %v4336
    %v4487 = vpack.c.b16 %v4341, %v4339
    %v4488 = vpack.c.b16 %v4342, %v4340
    %v4489 = vpack.c.b16 %v4345, %v4343
    %v4490 = vpack.c.b16 %v4346, %v4344
    %v4491 = vpack.c.b16 %v4349, %v4347
    %v4492 = vpack.c.b16 %v4350, %v4348
    %v4493 = vpack.c.b16 %v4353, %v4351
    %v4494 = vpack.c.b16 %v4354, %v4352
    %v4495 = vpack.c.b16 %v4357, %v4355
    %v4496 = vpack.c.b16 %v4358, %v4356
    %v4497 = vpack.c.b16 %v4361, %v4359
    %v4498 = vpack.c.b16 %v4362, %v4360
    %v4499 = vpack.c.b16 %v4365, %v4363
    %v4500 = vpack.c.b16 %v4366, %v4364
    %v4501 = vpack.c.b16 %v4369, %v4367
    %v4502 = vpack.c.b16 %v4370, %v4368
    %v4503 = vpack.c.b16 %v4373, %v4371
    %v4504 = vpack.c.b16 %v4374, %v4372
    %v4505 = vpack.c.b16 %v4377, %v4375
    %v4506 = vpack.c.b16 %v4378, %v4376
    %v4507 = vpack.c.b16 %v4381, %v4379
    %v4508 = vpack.c.b16 %v4382, %v4380
    %v4509 = vpack.c.b16 %v4385, %v4383
    %v4510 = vpack.c.b16 %v4386, %v4384
    %v4511 = vpack.c.b16 %v4389, %v4387
    %v4512 = vpack.c.b16 %v4390, %v4388
    %v4513 = vpack.c.b16 %v4393, %v4391
    %v4514 = vpack.c.b16 %v4394, %v4392
    %v4515 = vpack.c.b16 %v4397, %v4395
    %v4516 = vpack.c.b16 %v4398, %v4396
    %v4517 = vpack.c.b16 %v4401, %v4399
    %v4518 = vpack.c.b16 %v4402, %v4400
    %v4519 = vpack.c.b16 %v4405, %v4403
    %v4520 = vpack.c.b16 %v4406, %v4404
    %v4521 = vpack.c.b16 %v4409, %v4407
    %v4522 = vpack.c.b16 %v4410, %v4408
    %v4523 = vpack.c.b16 %v4413, %v4411
    %v4524 = vpack.c.b16 %v4414, %v4412
    %v4525 = vpack.c.b16 %v4417, %v4415
    %v4526 = vpack.c.b16 %v4418, %v4416
    %v4527 = vpack.c.b16 %v4421, %v4419
    %v4528 = vpack.c.b16 %v4422, %v4420
    %v4529 = vpack.c.b16 %v4425, %v4423
    %v4530 = vpack.c.b16 %v4426, %v4424
    %v4531 = vpack.c.b16 %v4429, %v4427
    %v4532 = vpack.c.b16 %v4430, %v4428
    %v4533 = vpack.c.b16 %v4433, %v4431
    %v4534 = vpack.c.b16 %v4434, %v4432
    %v4535 = vpack.c.b16 %v4437, %v4435
    %v4536 = vpack.c.b16 %v4438, %v4436
    %v4537 = vpack.c.b16 %v4441, %v4439
    %v4538 = vpack.c.b16 %v4442, %v4440
    %v4539 = vpack.c.b16 %v4445, %v4443
    %v4540 = vpack.c.b16 %v4446, %v4444
    %v4541 = vpack.c.b16 %v4449, %v4447
    %v4542 = vpack.c.b16 %v4450, %v4448
    %v4543 = vpack.c.b16 %v4453, %v4451
    %v4544 = vpack.c.b16 %v4454, %v4452
    %v4545 = vpack.c.b16 %v4457, %v4455
    %v4546 = vpack.c.b16 %v4458, %v4456
    %v4547 = vpack.c.b16 %v4461, %v4459
    %v4548 = vpack.c.b16 %v4462, %v4460
    %v4549 = vpack.c.b16 %v4465, %v4463
    %v4550 = vpack.c.b16 %v4466, %v4464
    %v4551 = vpack.c.b16 %v4469, %v4467
    %v4552 = vpack.c.b16 %v4470, %v4468
    %v4553 = vpack.c.b16 %v4473, %v4471
    %v4554 = vpack.c.b16 %v4474, %v4472
    %4635 = vmatpush.bf16.msra.mxu0 %v4489
    %4636 = vmatpush.bf16.msra.mxu0 %v4487
    %4637 = vmatpush.bf16.msra.mxu0 %v4485
    %4638 = vmatpush.bf16.msra.mxu0 %v4483
    %4639 = vmatpush.bf16.msra.mxu0 %v4481
    %4640 = vmatpush.bf16.msra.mxu0 %v4479
    %4641 = vmatpush.bf16.msra.mxu0 %v4477
    %4642 = vmatpush.bf16.msra.mxu0 %v4475
    %4643 = vmatmul.bf16.gmra.mxu0 %v4150
    %v4644 = vpop.f32.mrf.mxu0
    %v4645 = vadd.f32 0.0, %v4644
    %v4646 = vpop.f32.mrf.mxu0
    %4647 = vdwg.mxu0
    %4648 = vmatpush.bf16.msra.mxu0 %v4505
    %4649 = vmatpush.bf16.msra.mxu0 %v4503
    %4650 = vmatpush.bf16.msra.mxu0 %v4501
    %4651 = vmatpush.bf16.msra.mxu0 %v4499
    %4652 = vmatpush.bf16.msra.mxu0 %v4497
    %4653 = vmatpush.bf16.msra.mxu0 %v4495
    %4654 = vmatpush.bf16.msra.mxu0 %v4493
    %4655 = vmatpush.bf16.msra.mxu0 %v4491
    %4656 = vmatmul.bf16.gmra.mxu0 %v4151
    %v4657 = vpop.f32.mrf.mxu0
    %v4658 = vadd.f32 %v4645, %v4657
    %v4659 = vpop.f32.mrf.mxu0
    %4660 = vdwg.mxu0
    %4661 = vmatpush.bf16.msra.mxu0 %v4521
    %4662 = vmatpush.bf16.msra.mxu0 %v4519
    %4663 = vmatpush.bf16.msra.mxu0 %v4517
    %4664 = vmatpush.bf16.msra.mxu0 %v4515
    %4665 = vmatpush.bf16.msra.mxu0 %v4513
    %4666 = vmatpush.bf16.msra.mxu0 %v4511
    %4667 = vmatpush.bf16.msra.mxu0 %v4509
    %4668 = vmatpush.bf16.msra.mxu0 %v4507
    %4669 = vmatmul.bf16.gmra.mxu0 %v4152
    %v4670 = vpop.f32.mrf.mxu0
    %v4671 = vadd.f32 %v4658, %v4670
    %v4672 = vpop.f32.mrf.mxu0
    %4673 = vdwg.mxu0
    %4674 = vmatpush.bf16.msra.mxu0 %v4537
    %4675 = vmatpush.bf16.msra.mxu0 %v4535
    %4676 = vmatpush.bf16.msra.mxu0 %v4533
    %4677 = vmatpush.bf16.msra.mxu0 %v4531
    %4678 = vmatpush.bf16.msra.mxu0 %v4529
    %4679 = vmatpush.bf16.msra.mxu0 %v4527
    %4680 = vmatpush.bf16.msra.mxu0 %v4525
    %4681 = vmatpush.bf16.msra.mxu0 %v4523
    %4682 = vmatmul.bf16.gmra.mxu0 %v4153
    %v4683 = vpop.f32.mrf.mxu0
    %v4684 = vadd.f32 %v4671, %v4683
    %v4685 = vpop.f32.mrf.mxu0
    %4686 = vdwg.mxu0
    %4687 = vmatpush.bf16.msra.mxu0 %v4553
    %4688 = vmatpush.bf16.msra.mxu0 %v4551
    %4689 = vmatpush.bf16.msra.mxu0 %v4549
    %4690 = vmatpush.bf16.msra.mxu0 %v4547
    %4691 = vmatpush.bf16.msra.mxu0 %v4545
    %4692 = vmatpush.bf16.msra.mxu0 %v4543
    %4693 = vmatpush.bf16.msra.mxu0 %v4541
    %4694 = vmatpush.bf16.msra.mxu0 %v4539
    %4695 = vmatmul.bf16.gmra.mxu0 %v4154
    %v4696 = vpop.f32.mrf.mxu0
    %v4697 = vadd.f32 %v4684, %v4696
    %v4698 = vpop.f32.mrf.mxu0
    %4699 = vdwg.mxu0
    %4700 = vmatpush.bf16.msra.mxu0 %v4490
    %4701 = vmatpush.bf16.msra.mxu0 %v4488
    %4702 = vmatpush.bf16.msra.mxu0 %v4486
    %4703 = vmatpush.bf16.msra.mxu0 %v4484
    %4704 = vmatpush.bf16.msra.mxu0 %v4482
    %4705 = vmatpush.bf16.msra.mxu0 %v4480
    %4706 = vmatpush.bf16.msra.mxu0 %v4478
    %4707 = vmatpush.bf16.msra.mxu0 %v4476
    %4708 = vmatmul.bf16.gmra.mxu0 %v4150
    %v4709 = vpop.f32.mrf.mxu0
    %v4710 = vadd.f32 0.0, %v4709
    %v4711 = vpop.f32.mrf.mxu0
    %4712 = vdwg.mxu0
    %4713 = vmatpush.bf16.msra.mxu0 %v4506
    %4714 = vmatpush.bf16.msra.mxu0 %v4504
    %4715 = vmatpush.bf16.msra.mxu0 %v4502
    %4716 = vmatpush.bf16.msra.mxu0 %v4500
    %4717 = vmatpush.bf16.msra.mxu0 %v4498
    %4718 = vmatpush.bf16.msra.mxu0 %v4496
    %4719 = vmatpush.bf16.msra.mxu0 %v4494
    %4720 = vmatpush.bf16.msra.mxu0 %v4492
    %4721 = vmatmul.bf16.gmra.mxu0 %v4151
    %v4722 = vpop.f32.mrf.mxu0
    %v4723 = vadd.f32 %v4710, %v4722
    %v4724 = vpop.f32.mrf.mxu0
    %4725 = vdwg.mxu0
    %4726 = vmatpush.bf16.msra.mxu0 %v4522
    %4727 = vmatpush.bf16.msra.mxu0 %v4520
    %4728 = vmatpush.bf16.msra.mxu0 %v4518
    %4729 = vmatpush.bf16.msra.mxu0 %v4516
    %4730 = vmatpush.bf16.msra.mxu0 %v4514
    %4731 = vmatpush.bf16.msra.mxu0 %v4512
    %4732 = vmatpush.bf16.msra.mxu0 %v4510
    %4733 = vmatpush.bf16.msra.mxu0 %v4508
    %4734 = vmatmul.bf16.gmra.mxu0 %v4152
    %v4735 = vpop.f32.mrf.mxu0
    %v4736 = vadd.f32 %v4723, %v4735
    %v4737 = vpop.f32.mrf.mxu0
    %4738 = vdwg.mxu0
    %4739 = vmatpush.bf16.msra.mxu0 %v4538
    %4740 = vmatpush.bf16.msra.mxu0 %v4536
    %4741 = vmatpush.bf16.msra.mxu0 %v4534
    %4742 = vmatpush.bf16.msra.mxu0 %v4532
    %4743 = vmatpush.bf16.msra.mxu0 %v4530
    %4744 = vmatpush.bf16.msra.mxu0 %v4528
    %4745 = vmatpush.bf16.msra.mxu0 %v4526
    %4746 = vmatpush.bf16.msra.mxu0 %v4524
    %4747 = vmatmul.bf16.gmra.mxu0 %v4153
    %v4748 = vpop.f32.mrf.mxu0
    %v4749 = vadd.f32 %v4736, %v4748
    %v4750 = vpop.f32.mrf.mxu0
    %4751 = vdwg.mxu0
    %4752 = vmatpush.bf16.msra.mxu0 %v4554
    %4753 = vmatpush.bf16.msra.mxu0 %v4552
    %4754 = vmatpush.bf16.msra.mxu0 %v4550
    %4755 = vmatpush.bf16.msra.mxu0 %v4548
    %4756 = vmatpush.bf16.msra.mxu0 %v4546
    %4757 = vmatpush.bf16.msra.mxu0 %v4544
    %4758 = vmatpush.bf16.msra.mxu0 %v4542
    %4759 = vmatpush.bf16.msra.mxu0 %v4540
    %4760 = vmatmul.bf16.gmra.mxu0 %v4154
    %v4761 = vpop.f32.mrf.mxu0
    %v4762 = vadd.f32 %v4749, %v4761
    %v4763 = vpop.f32.mrf.mxu0
    %4764 = vdwg.mxu0
    %v4765 = vrot.slane %v4697, 4
    %v4766 = vadd.f32 %v4697, %v4765
    %v4767 = vrot.slane %v4766, 2
    %v4768 = vadd.f32 %v4766, %v4767
    %v4769 = vrot.slane %v4768, 1
    %v4770 = vadd.f32 %v4768, %v4769
    %v4771 = vrot.slane %v4762, 4
    %v4772 = vadd.f32 %v4762, %v4771
    %v4773 = vrot.slane %v4772, 2
    %v4774 = vadd.f32 %v4772, %v4773
    %v4775 = vrot.slane %v4774, 1
    %v4776 = vadd.f32 %v4774, %v4775
    %v4777 = vmul.f32 %v4770, %v1166
    %v4778 = vmul.f32 %v4776, %v1166
    %v4779 = vmul.f32 %v4697, %v4697
    %v4780 = vmul.f32 %v4762, %v4762
    %v4781 = vrot.slane %v4779, 4
    %v4782 = vadd.f32 %v4779, %v4781
    %v4783 = vrot.slane %v4782, 2
    %v4784 = vadd.f32 %v4782, %v4783
    %v4785 = vrot.slane %v4784, 1
    %v4786 = vadd.f32 %v4784, %v4785
    %v4787 = vrot.slane %v4780, 4
    %v4788 = vadd.f32 %v4780, %v4787
    %v4789 = vrot.slane %v4788, 2
    %v4790 = vadd.f32 %v4788, %v4789
    %v4791 = vrot.slane %v4790, 1
    %v4792 = vadd.f32 %v4790, %v4791
    %v4793 = vmul.f32 %v4786, %v1166
    %v4794 = vmul.f32 %v4792, %v1166
    %v4795 = vmul.f32 %v4777, %v4777
    %v4796 = vmul.f32 %v4778, %v4778
    %v4797 = vsub.f32 %v4793, %v4795
    %v4798 = vsub.f32 %v4794, %v4796
    %v4799 = vmax.f32 %v4797, 0.0
    %v4800 = vmax.f32 %v4798, 0.0
    %v4801 = vadd.f32 %v4799, 1e-05
    %v4802 = vadd.f32 %v4800, 1e-05
    %v4803 = vrsqrt.pop %v4801
    %v4804 = vmul.f32 %v4803, %v4801
    %v4805 = vmul.f32 %v4804, %v4803
    %v4806 = vmul.f32 0.5, %v4805
    %v4807 = vsub.f32 1.5, %v4806
    %v4808 = vmul.f32 %v4803, %v4807
    %vm4809 = vweird.f32 %v4801
    %vm4810 = vweird.f32 %v4803
    %vm4811 = vmor %vm4809, %vm4810
    %v4812 = vsel %vm4811, %v4803, %v4808
    %v4813 = vrsqrt.pop %v4802
    %v4814 = vmul.f32 %v4813, %v4802
    %v4815 = vmul.f32 %v4814, %v4813
    %v4816 = vmul.f32 0.5, %v4815
    %v4817 = vsub.f32 1.5, %v4816
    %v4818 = vmul.f32 %v4813, %v4817
    %vm4819 = vweird.f32 %v4802
    %vm4820 = vweird.f32 %v4813
    %vm4821 = vmor %vm4819, %vm4820
    %v4822 = vsel %vm4821, %v4813, %v4818
    %v4823 = vmul.f32 %v4777, %v4812
    %v4824 = vmul.f32 %v4778, %v4822
    %v4825 = vmul.f32 %v4697, %v4812
    %v4826 = vmul.f32 %v4762, %v4822
    %v4827 = vsub.f32 %v4825, %v4823
    %v4828 = vsub.f32 %v4826, %v4824
    %vm4829 = vcmp.ge.f32.partialorder %v4827, 0.0
    %vm4830 = vcmp.ge.f32.partialorder %v4828, 0.0
    %v4831 = vmul.f32 %v4827, 0.01
    %v4832 = vmul.f32 %v4828, 0.01
    %v4833 = vsel %vm4829, %v4827, %v4831
    %v4834 = vsel %vm4830, %v4828, %v4832
    %v4835 = vpack.c.bf16 %v4833, %v4833
    %v4836 = vpack.c.bf16 %v4834, %v4834
    %v4837 = vld [vmem:[#allocation10] sm:$0xf]
    %v4838 = vld [vmem:[#allocation10 + $0x4] sm:$0xf]
    %v4839 = vld [vmem:[#allocation10 + $0x8] sm:$0xf]
    %v4840 = vld [vmem:[#allocation10 + $0xc] sm:$0xf]
    %v4841 = vld [vmem:[#allocation10 + $0x10] sm:$0xf]
    %v4842 = vld [vmem:[#allocation10 + $0x14] sm:$0xf]
    %v4843 = vld [vmem:[#allocation10 + $0x18] sm:$0xf]
    %v4844 = vld [vmem:[#allocation10 + $0x1c] sm:$0xf]
    %v4845 = vld [vmem:[#allocation10 + $0x20] sm:$0xf]
    %v4846 = vld [vmem:[#allocation10 + $0x24] sm:$0xf]
    %v4847 = vld [vmem:[#allocation10 + $0x28] sm:$0xf]
    %v4848 = vld [vmem:[#allocation10 + $0x2c] sm:$0xf]
    %v4849 = vld [vmem:[#allocation10 + $0x30] sm:$0xf]
    %v4850 = vld [vmem:[#allocation10 + $0x34] sm:$0xf]
    %v4851 = vld [vmem:[#allocation10 + $0x38] sm:$0xf]
    %v4852 = vld [vmem:[#allocation10 + $0x3c] sm:$0xf]
    %v4853 = vld [vmem:[#allocation10 + $0x40] sm:$0xf]
    %v4854 = vld [vmem:[#allocation10 + $0x44] sm:$0xf]
    %v4855 = vld [vmem:[#allocation10 + $0x48] sm:$0xf]
    %v4856 = vld [vmem:[#allocation10 + $0x4c] sm:$0xf]
    %v4857 = vld [vmem:[#allocation10 + $0x50] sm:$0xf]
    %v4858 = vld [vmem:[#allocation10 + $0x54] sm:$0xf]
    %v4859 = vld [vmem:[#allocation10 + $0x58] sm:$0xf]
    %v4860 = vld [vmem:[#allocation10 + $0x5c] sm:$0xf]
    %v4861 = vld [vmem:[#allocation10 + $0x60] sm:$0xf]
    %v4862 = vld [vmem:[#allocation10 + $0x64] sm:$0xf]
    %v4863 = vld [vmem:[#allocation10 + $0x68] sm:$0xf]
    %v4864 = vld [vmem:[#allocation10 + $0x6c] sm:$0xf]
    %v4865 = vld [vmem:[#allocation10 + $0x70] sm:$0xf]
    %v4866 = vld [vmem:[#allocation10 + $0x74] sm:$0xf]
    %v4867 = vld [vmem:[#allocation10 + $0x78] sm:$0xf]
    %v4868 = vld [vmem:[#allocation10 + $0x7c] sm:$0xf]
    %v4901 = vunpack.c.l.b16 %v4837
    %v4902 = vunpack.c.l.b16 %v4838
    %v4903 = vunpack.c.l.b16 %v4839
    %v4904 = vunpack.c.l.b16 %v4840
    %v4905 = vunpack.c.l.b16 %v4841
    %v4906 = vunpack.c.l.b16 %v4842
    %v4907 = vunpack.c.l.b16 %v4843
    %v4908 = vunpack.c.l.b16 %v4844
    %v4909 = vunpack.c.l.b16 %v4845
    %v4910 = vunpack.c.l.b16 %v4846
    %v4911 = vunpack.c.l.b16 %v4847
    %v4912 = vunpack.c.l.b16 %v4848
    %v4913 = vunpack.c.l.b16 %v4849
    %v4914 = vunpack.c.l.b16 %v4850
    %v4915 = vunpack.c.l.b16 %v4851
    %v4916 = vunpack.c.l.b16 %v4852
    %v4917 = vunpack.c.l.b16 %v4853
    %v4918 = vunpack.c.l.b16 %v4854
    %v4919 = vunpack.c.l.b16 %v4855
    %v4920 = vunpack.c.l.b16 %v4856
    %v4921 = vunpack.c.l.b16 %v4857
    %v4922 = vunpack.c.l.b16 %v4858
    %v4923 = vunpack.c.l.b16 %v4859
    %v4924 = vunpack.c.l.b16 %v4860
    %v4925 = vunpack.c.l.b16 %v4861
    %v4926 = vunpack.c.l.b16 %v4862
    %v4927 = vunpack.c.l.b16 %v4863
    %v4928 = vunpack.c.l.b16 %v4864
    %v4929 = vunpack.c.l.b16 %v4865
    %v4930 = vunpack.c.l.b16 %v4866
    %v4931 = vunpack.c.l.b16 %v4867
    %v4932 = vunpack.c.l.b16 %v4868
    %v4933 = vpack.c.b16 %v4902, %v4901
    %v4934 = vpack.c.b16 %v4904, %v4903
    %v4935 = vpack.c.b16 %v4906, %v4905
    %v4936 = vpack.c.b16 %v4908, %v4907
    %v4937 = vpack.c.b16 %v4910, %v4909
    %v4938 = vpack.c.b16 %v4912, %v4911
    %v4939 = vpack.c.b16 %v4914, %v4913
    %v4940 = vpack.c.b16 %v4916, %v4915
    %v4941 = vpack.c.b16 %v4918, %v4917
    %v4942 = vpack.c.b16 %v4920, %v4919
    %v4943 = vpack.c.b16 %v4922, %v4921
    %v4944 = vpack.c.b16 %v4924, %v4923
    %v4945 = vpack.c.b16 %v4926, %v4925
    %v4946 = vpack.c.b16 %v4928, %v4927
    %v4947 = vpack.c.b16 %v4930, %v4929
    %v4948 = vpack.c.b16 %v4932, %v4931
    %4965 = vmatpush.bf16.msra.mxu0 %v4940
    %4966 = vmatpush.bf16.msra.mxu0 %v4939
    %4967 = vmatpush.bf16.msra.mxu0 %v4938
    %4968 = vmatpush.bf16.msra.mxu0 %v4937
    %4969 = vmatpush.bf16.msra.mxu0 %v4936
    %4970 = vmatpush.bf16.msra.mxu0 %v4935
    %4971 = vmatpush.bf16.msra.mxu0 %v4934
    %4972 = vmatpush.bf16.msra.mxu0 %v4933
    %4973 = vmatmul.bf16.gmra.mxu0 %v4835
    %v4974 = vpop.f32.mrf.mxu0
    %v4975 = vadd.f32 0.0, %v4974
    %v4976 = vpop.f32.mrf.mxu0
    %4977 = vdwg.mxu0
    %4978 = vmatpush.bf16.msra.mxu0 %v4948
    %4979 = vmatpush.bf16.msra.mxu0 %v4947
    %4980 = vmatpush.bf16.msra.mxu0 %v4946
    %4981 = vmatpush.bf16.msra.mxu0 %v4945
    %4982 = vmatpush.bf16.msra.mxu0 %v4944
    %4983 = vmatpush.bf16.msra.mxu0 %v4943
    %4984 = vmatpush.bf16.msra.mxu0 %v4942
    %4985 = vmatpush.bf16.msra.mxu0 %v4941
    %4986 = vmatmul.bf16.gmra.mxu0 %v4836
    %v4987 = vpop.f32.mrf.mxu0
    %v4988 = vadd.f32 %v4975, %v4987
    %v4989 = vpop.f32.mrf.mxu0
    %4990 = vdwg.mxu0
    %v4991 = vrot.slane %v4988, 4
    %v4992 = vadd.f32 %v4988, %v4991
    %v4993 = vrot.slane %v4992, 2
    %v4994 = vadd.f32 %v4992, %v4993
    %v4995 = vrot.slane %v4994, 1
    %v4996 = vadd.f32 %v4994, %v4995
    %v4997 = vmul.f32 %v4996, %v1166
    %v4998 = vmul.f32 %v4988, %v4988
    %v4999 = vrot.slane %v4998, 4
    %v5000 = vadd.f32 %v4998, %v4999
    %v5001 = vrot.slane %v5000, 2
    %v5002 = vadd.f32 %v5000, %v5001
    %v5003 = vrot.slane %v5002, 1
    %v5004 = vadd.f32 %v5002, %v5003
    %v5005 = vmul.f32 %v5004, %v1166
    %v5006 = vmul.f32 %v4997, %v4997
    %v5007 = vsub.f32 %v5005, %v5006
    %v5008 = vmax.f32 %v5007, 0.0
    %v5009 = vadd.f32 %v5008, 1e-05
    %v5010 = vrsqrt.pop %v5009
    %v5011 = vmul.f32 %v5010, %v5009
    %v5012 = vmul.f32 %v5011, %v5010
    %v5013 = vmul.f32 0.5, %v5012
    %v5014 = vsub.f32 1.5, %v5013
    %v5015 = vmul.f32 %v5010, %v5014
    %vm5016 = vweird.f32 %v5009
    %vm5017 = vweird.f32 %v5010
    %vm5018 = vmor %vm5016, %vm5017
    %v5019 = vsel %vm5018, %v5010, %v5015
    %v5020 = vmul.f32 %v4997, %v5019
    %v5021 = vmul.f32 %v4988, %v5019
    %v5022 = vsub.f32 %v5021, %v5020
    %vm5023 = vcmp.ge.f32.partialorder %v5022, 0.0
    %v5024 = vmul.f32 %v5022, 0.01
    %v5025 = vsel %vm5023, %v5022, %v5024
    %v5026 = vpack.c.bf16 %v5025, %v5025
    %v5027 = vld [vmem:[#allocation11] sm:$0xf]
    %v5028 = vld [vmem:[#allocation11 + $0x4] sm:$0xf]
    %v5029 = vld [vmem:[#allocation11 + $0x8] sm:$0xf]
    %v5030 = vld [vmem:[#allocation11 + $0xc] sm:$0xf]
    %v5031 = vld [vmem:[#allocation11 + $0x10] sm:$0xf]
    %v5032 = vld [vmem:[#allocation11 + $0x14] sm:$0xf]
    %v5033 = vld [vmem:[#allocation11 + $0x18] sm:$0xf]
    %v5034 = vld [vmem:[#allocation11 + $0x1c] sm:$0xf]
    %v5035 = vld [vmem:[#allocation11 + $0x20] sm:$0xf]
    %v5036 = vld [vmem:[#allocation11 + $0x24] sm:$0xf]
    %v5037 = vld [vmem:[#allocation11 + $0x28] sm:$0xf]
    %v5038 = vld [vmem:[#allocation11 + $0x2c] sm:$0xf]
    %v5039 = vld [vmem:[#allocation11 + $0x30] sm:$0xf]
    %v5040 = vld [vmem:[#allocation11 + $0x34] sm:$0xf]
    %v5041 = vld [vmem:[#allocation11 + $0x38] sm:$0xf]
    %v5042 = vld [vmem:[#allocation11 + $0x3c] sm:$0xf]
    %v5043 = vld [vmem:[#allocation13] sm:$0x1]
    %v5045 = vperm.slane %v5043, 0
    %v5063 = vunpack.c.l.b16 %v5027
    %v5064 = vunpack.c.l.b16 %v5028
    %v5065 = vunpack.c.l.b16 %v5029
    %v5066 = vunpack.c.l.b16 %v5030
    %v5067 = vunpack.c.l.b16 %v5031
    %v5068 = vunpack.c.l.b16 %v5032
    %v5069 = vunpack.c.l.b16 %v5033
    %v5070 = vunpack.c.l.b16 %v5034
    %v5071 = vunpack.c.l.b16 %v5035
    %v5072 = vunpack.c.l.b16 %v5036
    %v5073 = vunpack.c.l.b16 %v5037
    %v5074 = vunpack.c.l.b16 %v5038
    %v5075 = vunpack.c.l.b16 %v5039
    %v5076 = vunpack.c.l.b16 %v5040
    %v5077 = vunpack.c.l.b16 %v5041
    %v5078 = vunpack.c.l.b16 %v5042
    %v5079 = vpack.c.b16 %v5064, %v5063
    %v5080 = vpack.c.b16 %v5066, %v5065
    %v5081 = vpack.c.b16 %v5068, %v5067
    %v5082 = vpack.c.b16 %v5070, %v5069
    %v5083 = vpack.c.b16 %v5072, %v5071
    %v5084 = vpack.c.b16 %v5074, %v5073
    %v5085 = vpack.c.b16 %v5076, %v5075
    %v5086 = vpack.c.b16 %v5078, %v5077
    %5095 = vmatpush.bf16.msra.mxu0 %v5086
    %5096 = vmatpush.bf16.msra.mxu0 %v5085
    %5097 = vmatpush.bf16.msra.mxu0 %v5084
    %5098 = vmatpush.bf16.msra.mxu0 %v5083
    %5099 = vmatpush.bf16.msra.mxu0 %v5082
    %5100 = vmatpush.bf16.msra.mxu0 %v5081
    %5101 = vmatpush.bf16.msra.mxu0 %v5080
    %5102 = vmatpush.bf16.msra.mxu0 %v5079
    %5103 = vmatmul.bf16.gmra.mxu0 %v5026
    %v5104 = vpop.f32.mrf.mxu0
    %v5105 = vadd.f32 %v5045, %v5104
    %v5106 = vpop.f32.mrf.mxu0
    %5107 = vdwg.mxu0
    %vm5108 = vcmp.ge.f32.partialorder %v5105, 0.0
    %v5109 = vmul.f32 %v5105, 0.01
    %v5110 = vsel %vm5108, %v5105, %v5109
    %5111 = vmax.xlane.f32.xlu0 %v5110
    %v5112 = vpop.xlane.xlu0 %5111
    %v5113 = vsub.f32 %v5110, %v5112
    %v5114 = vmul.f32 %v5113, 1.442695
    %v5115 = vpow.pop %v5114
    %5116 = vadd.xlane.f32.xlu0 %v5115
    %v5117 = vpop.xlane.xlu0 %5116
    %v5118 = vlog2.pop %v5117
    %v5119 = vmul.f32 %v5118, 0.6931472
    %v5120 = vsub.f32 %v5113, %v5119
    %5121 = vst [vmem:[#allocation14] sm:$0xff] %v5120
    // Predicated region
    $region58: #{tpu_custom_call.1} parent=1 // pred_check
      _
    $region59: #{tpu_custom_call.1} parent=1 // pred_check_branch
      %5123 = sbr.rel (0) target = $region61
    $region60: #{tpu_custom_call.1} parent=1 // pred_region
      %5125 = vsyncadd [#allocation4], 0
      %s5127 = sshll.u32 [#allocation14], 4
      %s5128 = int_to_ptr.vmem [resolvable:$true] %s5127
      %s5129 = sshll.u32 %s7, 4
      %s5130 = int_to_ptr.hbm [resolvable:$true] %s5129
      %5132 = dma.vmem_to_hbm [thread:$0]  %s5128, 128, %s5130, [#allocation4]
    $region61: #{tpu_custom_call.1} parent=1 // pred_fallthru
      _
    // Predicated region
    $region62: #{tpu_custom_call.1} parent=1 // pred_check
      _
    $region63: #{tpu_custom_call.1} parent=1 // pred_check_branch
      %5134 = sbr.rel (0) target = $region65
    $region64: #{tpu_custom_call.1} parent=1 // pred_region
      %5136 = dma.done [#allocation4], 128
    $region65: #{tpu_custom_call.1} parent=1 // pred_fallthru
      _
    %5137 = vsyncpa [#allocation3], 1
    %5138 = vsyncpa [#allocation6], 1
    %5139 = vsyncpa [#allocation9], 1
    %5140 = vsyncpa [#allocation12], 1
    %5141 = vsyncpa [#allocation4], 1

</llo_original>
